<compile_context>
chip_gen: v6e
topology: v6e:2x2x1
jax: 0.10.0
libtpu: 0.0.40
codegen_flags: <defaults>
</compile_context>

<pallas_src>
import math
from functools import partial

import jax
import jax.numpy as jnp
from jax.experimental import pallas as pl
from jax.experimental.pallas import tpu as pltpu

MXU_DTYPE = jnp.bfloat16           # matmul-input dtype (f32 accumulate)
_LN_EPS = 1e-5
_BN_EPS = 1e-5


def _vmem_limit_bytes():
    """Generation-aware scoped-VMEM limit (v7x has 64 MiB physical, v5e/v6e 128 MiB)."""
    try:
        info = pltpu.get_tpu_info()
        cap = getattr(info, "vmem_capacity_bytes", None) or getattr(info, "vmem_bytes", None)
        if cap:
            return int(min(cap * 3 // 4, 100 * 1024 * 1024))
    except Exception:
        pass
    return 48 * 1024 * 1024


_VMEM_LIMIT = _vmem_limit_bytes()


def _mosaic_params(*semantics):
    return pltpu.CompilerParams(dimension_semantics=tuple(semantics),
                                vmem_limit_bytes=_VMEM_LIMIT)


def _pick_tile(dim, target, align):
    """Largest multiple of `align` dividing `dim` and <= target; else full extent."""
    if dim <= target:
        return dim
    t = (target // align) * align
    while t >= align:
        if dim % t == 0:
            return t
        t -= align
    return dim


# ----------------------------------------------------------------------------
# Fused, tiled MXU matmul with prologue / epilogue fusion
# ----------------------------------------------------------------------------

def fused_matmul(a, w, bias=None, *, ln=None, epilogue=None,
                 residual=None, res_scale=1.0, out_ln=None,
                 tm_target=256, tn_target=256, tk_target=512):
    """out = epilogue( LN?(a) @ w + bias );  out = residual + res_scale*out;  out = LN_out?(out)

    a: (M, K) f32, w: (K, N) (bf16 weights pre-cast at param build), bias: (N,) or None.
    ln / out_ln : (gamma, beta) tuples.  epilogue: None|'swish'|'relu'|'glu' (glu halves N).
    """
    M, K = a.shape
    K2, N = w.shape
    assert K == K2
    glu = (epilogue == 'glu')
    N_out = N // 2 if glu else N

    # ---- M tiling; pad M when no aligned divisor <= target exists (bounded tiles) ----
    tm = _pick_tile(M, tm_target, 8)
    Mp = M
    if tm > tm_target:
        tm = tm_target
        Mp = ((M + tm - 1) // tm) * tm
        a = jnp.pad(a, ((0, Mp - M), (0, 0)))
        if residual is not None:
            residual = jnp.pad(residual, ((0, Mp - M), (0, 0)))

    # When an LN prologue / GLU / out-LN is fused, keep the full N per row block so the
    # normalized a-tile is loaded & normalized exactly once (no per-N-tile recompute).
    full_n = glu or (ln is not None) or (out_ln is not None)
    tn = N if full_n else _pick_tile(N, tn_target, 128)
    tk = K if ln is not None else _pick_tile(K, tk_target, 128)
    gm, gn, gk = Mp // tm, N // tn, K // tk
    tn_out = tn // 2 if glu else tn
    last_k = gk - 1

    has_bias = bias is not None
    has_ln = ln is not None
    has_res = residual is not None
    has_oln = out_ln is not None

    inputs = [a, w]
    in_specs = [pl.BlockSpec((tm, tk), lambda i, j, k: (i, k)),
                pl.BlockSpec((tk, tn), lambda i, j, k: (k, j))]
    if has_bias:
        inputs.append(bias.reshape(1, N).astype(jnp.float32))
        in_specs.append(pl.BlockSpec((1, tn), lambda i, j, k: (0, j)))
    if has_ln:
        g_, b_ = ln
        inputs += [g_.reshape(1, K).astype(jnp.float32), b_.reshape(1, K).astype(jnp.float32)]
        in_specs += [pl.BlockSpec((1, K), lambda i, j, k: (0, 0)),
                     pl.BlockSpec((1, K), lambda i, j, k: (0, 0))]
    if has_res:
        inputs.append(residual)
        in_specs.append(pl.BlockSpec((tm, tn_out), lambda i, j, k: (i, j)))
    if has_oln:
        og_, ob_ = out_ln
        inputs += [og_.reshape(1, N_out).astype(jnp.float32),
                   ob_.reshape(1, N_out).astype(jnp.float32)]
        in_specs += [pl.BlockSpec((1, N_out), lambda i, j, k: (0, 0)),
                     pl.BlockSpec((1, N_out), lambda i, j, k: (0, 0))]

    def kernel(*refs):
        a_ref, w_ref = refs[0], refs[1]
        idx = 2
        bias_ref = ln_g = ln_b = res_ref = oln_g = oln_b = None
        if has_bias:
            bias_ref = refs[idx]; idx += 1
        if has_ln:
            ln_g, ln_b = refs[idx], refs[idx + 1]; idx += 2
        if has_res:
            res_ref = refs[idx]; idx += 1
        if has_oln:
            oln_g, oln_b = refs[idx], refs[idx + 1]; idx += 2
        o_ref = refs[idx]
        acc_ref = refs[idx + 1]

        kk = pl.program_id(2)

        @pl.when(kk == 0)
        def _init():
            acc_ref[...] = jnp.zeros_like(acc_ref)

        x = a_ref[...]
        if has_ln:  # LayerNorm prologue in f32 (computed once per row block: tn == N)
            mu = jnp.mean(x, axis=-1, keepdims=True)
            var = jnp.mean(jnp.square(x - mu), axis=-1, keepdims=True)
            x = (x - mu) * jax.lax.rsqrt(var + _LN_EPS) * ln_g[...] + ln_b[...]
        acc_ref[...] += jnp.dot(x.astype(w_ref.dtype), w_ref[...],
                                preferred_element_type=jnp.float32)

        @pl.when(kk == last_k)
        def _fin():
            out = acc_ref[...]
            if has_bias:
                out = out + bias_ref[...]
            if epilogue == 'swish':
                out = out * jax.nn.sigmoid(out)
            elif epilogue == 'relu':
                out = jnp.maximum(out, 0.0)
            elif epilogue == 'glu':
                half = N // 2  # = encoder_dim -> 128-lane aligned for real configs
                out = out[:, :half] * jax.nn.sigmoid(out[:, half:])
            if has_res:
                out = res_ref[...] + res_scale * out
            if has_oln:
                mu = jnp.mean(out, axis=-1, keepdims=True)
                var = jnp.mean(jnp.square(out - mu), axis=-1, keepdims=True)
                out = (out - mu) * jax.lax.rsqrt(var + _LN_EPS) * oln_g[...] + oln_b[...]
            o_ref[...] = out.astype(o_ref.dtype)

    out = pl.pallas_call(
        kernel,
        grid=(gm, gn, gk),
        in_specs=in_specs,
        out_specs=pl.BlockSpec((tm, tn_out), lambda i, j, k: (i, j)),
        out_shape=jax.ShapeDtypeStruct((Mp, N_out), jnp.float32),
        scratch_shapes=[pltpu.VMEM((tm, tn), jnp.float32)],
        compiler_params=_mosaic_params("parallel", "parallel", "arbitrary"),
    )(*inputs)
    return out[:M] if Mp != M else out


# ----------------------------------------------------------------------------
# Relative-position scores + fused attention, grid = (batch, head)
# ----------------------------------------------------------------------------

def _pos_score_kernel(q_ref, pos_ref, vb_ref, o_ref):
    # (q + v_bias) @ pos^T for one (batch, head): v_bias add + head split fused in-kernel.
    qv = (q_ref[0, 0, 0] + vb_ref[0]).astype(MXU_DTYPE)            # (T, dh)
    pos = pos_ref[0].astype(MXU_DTYPE)                              # (T, dh)
    o_ref[0, 0] = jax.lax.dot_general(qv, pos, (((1,), (1,)), ((), ())),
                                      preferred_element_type=jnp.float32)


def rel_pos_scores(qkv5, pos, v_bias):
    """qkv5: (3,B,H,T,dh); pos: (H,T,dh) (reused across batch); v_bias: (H,1,dh)."""
    _, B, H, T, dh = qkv5.shape
    return pl.pallas_call(
        _pos_score_kernel,
        grid=(B, H),
        in_specs=[pl.BlockSpec((1, 1, 1, T, dh), lambda b, h: (0, b, h, 0, 0)),
                  pl.BlockSpec((1, T, dh), lambda b, h: (h, 0, 0)),
                  pl.BlockSpec((1, 1, dh), lambda b, h: (h, 0, 0))],
        out_specs=pl.BlockSpec((1, 1, T, T), lambda b, h: (b, h, 0, 0)),
        out_shape=jax.ShapeDtypeStruct((B, H, T, T), jnp.float32),
        compiler_params=_mosaic_params("parallel", "parallel"),
    )(qkv5, pos, v_bias)


def _attn_kernel(q_ref, k_ref, v_ref, ps_ref, u_ref, o_ref, *, scale):
    # One (batch, head): content score + shifted pos score + softmax + context in VMEM.
    q = q_ref[0, 0, 0]                                              # (T, dh) f32
    k = k_ref[0, 0, 0]
    v = v_ref[0, 0, 0]
    qu = (q + u_ref[0]).astype(MXU_DTYPE)                           # u_bias add fused
    content = jax.lax.dot_general(qu, k.astype(MXU_DTYPE),
                                  (((1,), (1,)), ((), ())),
                                  preferred_element_type=jnp.float32)   # (T, T)
    s = (content + ps_ref[0, 0]) * scale
    m = jnp.max(s, axis=-1, keepdims=True)
    e = jnp.exp(s - m)
    p = e * pl.reciprocal(jnp.sum(e, axis=-1, keepdims=True), approx=True)
    o_ref[0, 0] = jnp.dot(p.astype(MXU_DTYPE), v.astype(MXU_DTYPE),
                          preferred_element_type=jnp.float32)


def fused_attention(qkv5, pos_score, u_bias, scale):
    """qkv5: (3,B,H,T,dh); pos_score: (B,H,T,T) (rel-shifted); u_bias: (H,1,dh) -> (B,H,T,dh)."""
    _, B, H, T, dh = qkv5.shape
    return pl.pallas_call(
        partial(_attn_kernel, scale=scale),
        grid=(B, H),
        in_specs=[pl.BlockSpec((1, 1, 1, T, dh), lambda b, h: (0, b, h, 0, 0)),
                  pl.BlockSpec((1, 1, 1, T, dh), lambda b, h: (1, b, h, 0, 0)),
                  pl.BlockSpec((1, 1, 1, T, dh), lambda b, h: (2, b, h, 0, 0)),
                  pl.BlockSpec((1, 1, T, T), lambda b, h: (b, h, 0, 0)),
                  pl.BlockSpec((1, 1, dh), lambda b, h: (h, 0, 0))],
        out_specs=pl.BlockSpec((1, 1, T, dh), lambda b, h: (b, h, 0, 0)),
        out_shape=jax.ShapeDtypeStruct((B, H, T, dh), jnp.float32),
        compiler_params=_mosaic_params("parallel", "parallel"),
    )(qkv5, qkv5, qkv5, pos_score, u_bias)


# ----------------------------------------------------------------------------
# Depthwise conv (+ fused BatchNorm-eval + Swish)
# ----------------------------------------------------------------------------

def _dwconv_kernel(xp_ref, w_ref, scale_ref, shift_ref, o_ref, *, ksize, t_out):
    xp = xp_ref[0]                        # (Tpad, D)
    w = w_ref[...]                        # (ksize, D) -- read once, hoisted out of the tap loop
    acc = xp[0:t_out, :] * w[0:1, :]
    for k in range(1, ksize):             # static unrolled taps
        acc = acc + xp[k:k + t_out, :] * w[k:k + 1, :]
    # TODO(synk): taps use statically-offset sublane slices; a pltpu.roll barrel of the
    # padded block would cut the VMEM copies but is riskier at small / unaligned shapes.
    y = acc * scale_ref[...] + shift_ref[...]          # BatchNorm1d (eval) as per-channel affine
    o_ref[0] = y * jax.nn.sigmoid(y)                   # Swish epilogue


def depthwise_conv_bn_swish(x, w, bn_scale, bn_shift, ksize):
    """x: (B,T,D); depthwise 'same' conv (no bias) + BN(eval) + swish, fused in one kernel."""
    B, T, D = x.shape
    pad = (ksize - 1) // 2
    t_padded = ((T + 2 * pad + 7) // 8) * 8            # sublane-align the padded time axis
    xp = jnp.pad(x, ((0, 0), (pad, t_padded - T - pad), (0, 0)))
    return pl.pallas_call(
        partial(_dwconv_kernel, ksize=ksize, t_out=T),
        grid=(B,),
        in_specs=[pl.BlockSpec((1, t_padded, D), lambda i: (i, 0, 0)),
                  pl.BlockSpec((ksize, D), lambda i: (0, 0)),
                  pl.BlockSpec((1, D), lambda i: (0, 0)),
                  pl.BlockSpec((1, D), lambda i: (0, 0))],
        out_specs=pl.BlockSpec((1, T, D), lambda i: (i, 0, 0)),
        out_shape=jax.ShapeDtypeStruct((B, T, D), jnp.float32),
        compiler_params=_mosaic_params("parallel"),
    )(xp, w, bn_scale.reshape(1, D), bn_shift.reshape(1, D))


# ----------------------------------------------------------------------------
# Conv2d subsampling via NHWC im2col + Pallas matmul (fused ReLU, bf16 weights)
# ----------------------------------------------------------------------------

def conv2d_subsample(x_nhwc, w, b, stride):
    """VALID conv. x:(B,H,W,Cin) NHWC, w:(Cout,Cin,kh,kw) torch layout -> (B,Ho,Wo,Cout)."""
    B, H, W, C = x_nhwc.shape
    Cout, _, kh, kw = w.shape
    s = stride
    Ho = (H - kh) // s + 1
    Wo = (W - kw) // s + 1
    cols = []
    for i in range(kh):
        for j in range(kw):
            cols.append(x_nhwc[:, i:i + s * Ho:s, j:j + s * Wo:s, :])   # (B,Ho,Wo,C)
    patches = jnp.concatenate(cols, axis=-1).reshape(B * Ho * Wo, kh * kw * C)
    wm = w.transpose(2, 3, 1, 0).reshape(kh * kw * C, Cout)            # matches patch order
    y = fused_matmul(patches, wm, b, epilogue='relu')
    return y.reshape(B, Ho, Wo, Cout)


# ----------------------------------------------------------------------------
# Plain-JAX glue
# ----------------------------------------------------------------------------

def sinusoidal_pe(length, d_model):
    pos = jnp.arange(length, dtype=jnp.float32)[:, None]
    div = jnp.exp(jnp.arange(0, d_model, 2, dtype=jnp.float32)
                  * (-math.log(10000.0) / d_model))
    pe = jnp.zeros((length, d_model), jnp.float32)
    pe = pe.at[:, 0::2].set(jnp.sin(pos * div))
    pe = pe.at[:, 1::2].set(jnp.cos(pos * div))
    return pe


def relative_shift(pos_score):
    # TODO(synk): kept in XLA (exact pad/reshape trick of the reference); it mixes score rows,
    # so folding it into the tiled attention kernel needs an in-kernel varying lane shift.
    b, h, t1, t2 = pos_score.shape
    zeros = jnp.zeros((b, h, t1, 1), pos_score.dtype)
    padded = jnp.concatenate([zeros, pos_score], axis=-1)
    padded = padded.reshape(b, h, t2 + 1, t1)
    return padded[:, :, 1:].reshape(b, h, t1, t2)


# ----------------------------------------------------------------------------
# Conformer modules
# ----------------------------------------------------------------------------

def mhsa_module(x, p, pe, B, T, num_heads):
    M, D = x.shape
    dh = D // num_heads
    # LayerNorm prologue + single concatenated Q|K|V projection (lane-dense output)
    qkv = fused_matmul(x, p['wqkv'], p['bqkv'], ln=(p['ln_g'], p['ln_b']))       # (M, 3D)
    # Single layout pass: (M,3D) -> (3,B,H,T,dh); heads are then selected purely via
    # BlockSpec index maps inside the kernels (no per-head slices / bias materialization).
    qkv5 = qkv.reshape(B, T, 3, num_heads, dh).transpose(2, 0, 3, 1, 4)

    pos = fused_matmul(pe, p['wpos'], None)                                       # (T, D)
    pos = pos.reshape(T, num_heads, dh).transpose(1, 0, 2)                        # (H, T, dh)

    pos_score = rel_pos_scores(qkv5, pos, p['v_bias'])                            # (B,H,T,T)
    pos_score = relative_shift(pos_score)

    ctx = fused_attention(qkv5, pos_score, p['u_bias'], 1.0 / math.sqrt(D))       # (B,H,T,dh)
    ctx = ctx.transpose(0, 2, 1, 3).reshape(M, D)
    return fused_matmul(ctx, p['wo'], p['bo'], residual=x)


def conv_module(x, p, B, T, ksize):
    M, D = x.shape
    # LN prologue + pointwise conv1 + GLU epilogue in one matmul kernel
    y = fused_matmul(x, p['pw1_w'], p['pw1_b'], ln=(p['ln_g'], p['ln_b']), epilogue='glu')
    bn_scale = p['bn_g'] * jax.lax.rsqrt(p['bn_var'] + _BN_EPS)
    bn_shift = p['bn_b'] - p['bn_mean'] * bn_scale
    y = depthwise_conv_bn_swish(y.reshape(B, T, D), p['dw_w'], bn_scale, bn_shift, ksize)
    # pointwise conv2 + residual add fused
    return fused_matmul(y.reshape(M, D), p['pw2_w'], p['pw2_b'], residual=x)


def conformer_block(x, lp, pe, B, T, num_heads, ksize):
    ff1 = lp['ff1']
    h = fused_matmul(x, ff1['w1'], ff1['b1'], ln=(ff1['ln_g'], ff1['ln_b']), epilogue='swish')
    x = fused_matmul(h, ff1['w2'], ff1['b2'], residual=x, res_scale=0.5)
    x = mhsa_module(x, lp['mhsa'], pe, B, T, num_heads)
    x = conv_module(x, lp['conv'], B, T, ksize)
    ff2 = lp['ff2']
    h = fused_matmul(x, ff2['w1'], ff2['b1'], ln=(ff2['ln_g'], ff2['ln_b']), epilogue='swish')
    # last matmul fuses: bias, 0.5*residual add, and the block-final LayerNorm
    x = fused_matmul(h, ff2['w2'], ff2['b2'], residual=x, res_scale=0.5,
                     out_ln=(lp['ln_g'], lp['ln_b']))
    return x


def conformer_encoder(x, lengths, p, cfg):
    # Conv2dSubsampling: 2x (conv k=3 s=2 + fused relu) via im2col matmuls
    B, T, Din = x.shape
    h = x[:, :, :, None]                                     # NHWC, Cin=1
    h = conv2d_subsample(h, p['sub_w1'], p['sub_b1'], 2)
    h = conv2d_subsample(h, p['sub_w2'], p['sub_b2'], 2)
    _, Ts, Fs, C = h.shape
    h = h.transpose(0, 1, 3, 2).reshape(B * Ts, C * Fs)      # channel-major flatten (matches torch)
    lengths = (lengths >> 2) - 1
    h = fused_matmul(h, p['proj_w'], p['proj_b'])            # input projection

    pe = sinusoidal_pe(Ts, h.shape[-1])
    for lp in p['layers']:
        h = conformer_block(h, lp, pe, B, Ts, cfg['num_heads'], cfg['conv_kernel_size'])
    return h.reshape(B, Ts, -1), lengths


def asr_conformer_forward(params, cfg, fused_feats, s_audio_length):
    x = fused_feats.astype(jnp.float32)
    if params['pre_conv'] is not None:
        # 1x1 Conv2d (N=1 output channel) as a VPU-style channel reduction + PReLU (not MXU)
        pc = params['pre_conv']
        y = jnp.einsum('bcft,c->bft', x, pc['w'].reshape(-1)) + pc['b'][0]
        x = jnp.where(y >= 0, y, pc['prelu_a'] * y)
    else:
        x = jnp.squeeze(x, axis=1)
    x = x.transpose(0, 2, 1)                                 # (B, T, input_dim)
    lengths = (s_audio_length // cfg['res_reduce']).astype(jnp.int32)
    enc, lengths = conformer_encoder(x, lengths, params['encoder'], cfg)
    B, Ts, D = enc.shape
    # classifier head: lane-padded weight (N -> multiple of 128), slice logits afterwards
    logits = fused_matmul(enc.reshape(B * Ts, D), params['fc_w'], params['fc_b'])
    logits = logits[:, :cfg['n_tokens']].reshape(B, Ts, cfg['n_tokens'])
    return {'tokens_logits': logits, 's_audio_length': lengths}


# ----------------------------------------------------------------------------
# Deterministic synthetic parameters (matmul weights pre-cast to bf16 once)
# ----------------------------------------------------------------------------

class ParamGen:
    def __init__(self, seed=0):
        self.key = jax.random.PRNGKey(seed)

    def normal(self, shape, scale=0.05):
        self.key, sub = jax.random.split(self.key)
        return scale * jax.random.normal(sub, shape, dtype=jnp.float32)


def make_params(cfg, seed=0):
    pg = ParamGen(seed)
    D = cfg['encoder_dim']
    H = cfg['num_heads']
    dh = D // H
    ff = cfg['ff_expansion']
    K = cfg['conv_kernel_size']
    Din = cfg['input_dim']
    sub_freq = ((Din - 1) // 2 - 1) // 2
    zeros = lambda n: jnp.zeros((n,), jnp.float32)
    ones = lambda n: jnp.ones((n,), jnp.float32)
    bf16 = lambda x: x.astype(MXU_DTYPE)        # weights cast once here, never per-call

    def ffn_params():
        return dict(ln_g=ones(D), ln_b=zeros(D),
                    w1=bf16(pg.normal((D, D * ff))), b1=zeros(D * ff),
                    w2=bf16(pg.normal((D * ff, D))), b2=zeros(D))

    def mhsa_params():
        return dict(ln_g=ones(D), ln_b=zeros(D),
                    wqkv=bf16(pg.normal((D, 3 * D))), bqkv=zeros(3 * D),
                    wpos=bf16(pg.normal((D, D))),
                    u_bias=pg.normal((H, 1, dh)), v_bias=pg.normal((H, 1, dh)),
                    wo=bf16(pg.normal((D, D))), bo=zeros(D))

    def conv_params():
        assert cfg['conv_expansion'] == 2
        return dict(ln_g=ones(D), ln_b=zeros(D),
                    pw1_w=bf16(pg.normal((D, 2 * D))), pw1_b=zeros(2 * D),
                    dw_w=pg.normal((K, D)),
                    bn_g=ones(D), bn_b=zeros(D), bn_mean=zeros(D), bn_var=ones(D),
                    pw2_w=bf16(pg.normal((D, D))), pw2_b=zeros(D))

    layers = [dict(ff1=ffn_params(), mhsa=mhsa_params(), conv=conv_params(),
                   ff2=ffn_params(), ln_g=ones(D), ln_b=zeros(D))
              for _ in range(cfg['num_encoder_layers'])]

    encoder = dict(sub_w1=bf16(pg.normal((D, 1, 3, 3))), sub_b1=zeros(D),
                   sub_w2=bf16(pg.normal((D, D, 3, 3))), sub_b2=zeros(D),
                   proj_w=bf16(pg.normal((D * sub_freq, D))), proj_b=zeros(D),
                   layers=layers)

    pre = None
    if cfg['pre_conv_channels']:
        pre = dict(w=pg.normal((1, cfg['pre_conv_channels'], 1, 1)),
                   b=zeros(1), prelu_a=jnp.float32(0.25))

    # classifier weight lane-padded to a multiple of 128 for unmasked stores
    n_tok = cfg['n_tokens']
    n_pad = ((n_tok + 127) // 128) * 128
    fc_w = jnp.zeros((D, n_pad), jnp.float32).at[:, :n_tok].set(pg.normal((D, n_tok)))
    fc_w = bf16(fc_w)
    fc_b = jnp.zeros((n_pad,), jnp.float32)

    return dict(encoder=encoder, fc_w=fc_w, fc_b=fc_b, pre_conv=pre)


# ----------------------------------------------------------------------------
# Main
# ----------------------------------------------------------------------------

if __name__ == "__main__":
    cfg = dict(
        res_reduce=2,
        n_tokens=11,
        input_dim=16,
        encoder_dim=32,
        num_encoder_layers=2,
        num_heads=4,
        ff_expansion=4,
        conv_expansion=2,
        conv_kernel_size=7,
        pre_conv_channels=2,
    )

    B, T = 2, 32
    key = jax.random.PRNGKey(0)
    kx, _ = jax.random.split(key)
    # layout: NCHW = (batch, pre_conv_channels, freq=input_dim, time)
    fused_feats = jax.random.normal(
        kx, (B, cfg['pre_conv_channels'], cfg['input_dim'], T), dtype=jnp.float32)
    s_audio_length = jnp.array([32, 24], dtype=jnp.int32)

    params = make_params(cfg, seed=0)

    fwd = jax.jit(lambda p, x, l: asr_conformer_forward(p, cfg, x, l))
    out = fwd(params, fused_feats, s_audio_length)
    jax.block_until_ready(out['tokens_logits'])

    # sanity checks on shapes implied by the module
    Ts = (((T - 3) // 2 + 1) - 3) // 2 + 1          # time after 2x conv subsampling
    assert out['tokens_logits'].shape == (B, Ts, cfg['n_tokens'])
    assert out['s_audio_length'].shape == (B,)
    assert bool(jnp.all(jnp.isfinite(out['tokens_logits'])))

    print("KERNEL_OK")
</pallas_src>

<mosaic_0001>
module attributes {stable_mosaic.version = 11 : i64} {
  func.func @kernel(%arg0: i32, %arg1: i32, %arg2: i32, %arg3: memref<210x9xf32, #tpu.memory_space<vmem>>, %arg4: memref<9x32xbf16, #tpu.memory_space<vmem>>, %arg5: memref<1x32xf32, #tpu.memory_space<vmem>>, %arg6: memref<210x32xf32, #tpu.memory_space<vmem>>, %arg7: memref<210x32xf32, #tpu.memory_space<vmem>>) attributes {dimension_semantics = [#tpu.dimension_semantics<parallel>, #tpu.dimension_semantics<parallel>, #tpu.dimension_semantics<arbitrary>], iteration_bounds = array<i64: 1, 1, 1>, scalar_prefetch = 0 : i64, scratch_operands = 1 : i64, tpu.core_type = #tpu.core_type<tc>, window_params = [{transform_indices = @transform_0, window_bounds = array<i64: 210, 9>}, {transform_indices = @transform_1, window_bounds = array<i64: 9, 32>}, {transform_indices = @transform_2, window_bounds = array<i64: 1, 32>}, {transform_indices = @transform_3, window_bounds = array<i64: 210, 32>}]} {
    %c0_i32 = arith.constant 0 : i32
    %0 = arith.cmpi eq, %arg2, %c0_i32 : i32
    %1 = arith.extui %0 : i1 to i32
    %c0_i32_0 = arith.constant 0 : i32
    %2 = arith.cmpi ne, %1, %c0_i32_0 : i32
    scf.if %2 {
      %cst_10 = arith.constant 0.000000e+00 : f32
      %13 = vector.broadcast %cst_10 : f32 to vector<210x32xf32>
      %c0_11 = arith.constant 0 : index
      %c0_12 = arith.constant 0 : index
      %14 = vector.load %arg7[%c0_11, %c0_12] : memref<210x32xf32, #tpu.memory_space<vmem>>, vector<210x32xf32>
      tpu.vector_store %arg7[%c0_11, %c0_12], %13 {strides = array<i32>} : memref<210x32xf32, #tpu.memory_space<vmem>>, vector<210x32xf32>,
    } else {
    }
    %c0 = arith.constant 0 : index
    %c0_1 = arith.constant 0 : index
    %3 = vector.load %arg3[%c0, %c0_1] : memref<210x9xf32, #tpu.memory_space<vmem>>, vector<210x9xf32>
    %c0_2 = arith.constant 0 : index
    %c0_3 = arith.constant 0 : index
    %4 = vector.load %arg7[%c0_2, %c0_3] : memref<210x32xf32, #tpu.memory_space<vmem>>, vector<210x32xf32>
    %5 = arith.truncf %3 : vector<210x9xf32> to vector<210x9xbf16>
    %c0_4 = arith.constant 0 : index
    %c0_5 = arith.constant 0 : index
    %6 = vector.load %arg4[%c0_4, %c0_5] : memref<9x32xbf16, #tpu.memory_space<vmem>>, vector<9x32xbf16>
    %cst = arith.constant dense<0.000000e+00> : vector<210x32xf32>
    %7 = tpu.matmul %5, %6, %cst {dimension_numbers = #tpu.dot_dimension_numbers<[1], [0], [0], [1], [0, 0, 1, 1], [], []>} : vector<210x9xbf16>, vector<9x32xbf16>, vector<210x32xf32> -> vector<210x32xf32>
    %8 = arith.addf %4, %7 : vector<210x32xf32>
    %c0_6 = arith.constant 0 : index
    %c0_7 = arith.constant 0 : index
    %9 = vector.load %arg7[%c0_6, %c0_7] : memref<210x32xf32, #tpu.memory_space<vmem>>, vector<210x32xf32>
    tpu.vector_store %arg7[%c0_6, %c0_7], %8 {strides = array<i32>} : memref<210x32xf32, #tpu.memory_space<vmem>>, vector<210x32xf32>,
    %c0_i32_8 = arith.constant 0 : i32
    %10 = arith.cmpi eq, %arg2, %c0_i32_8 : i32
    %11 = arith.extui %10 : i1 to i32
    %c0_i32_9 = arith.constant 0 : i32
    %12 = arith.cmpi ne, %11, %c0_i32_9 : i32
    scf.if %12 {
      %c0_10 = arith.constant 0 : index
      %c0_11 = arith.constant 0 : index
      %13 = vector.load %arg7[%c0_10, %c0_11] : memref<210x32xf32, #tpu.memory_space<vmem>>, vector<210x32xf32>
      %c0_12 = arith.constant 0 : index
      %c0_13 = arith.constant 0 : index
      %14 = vector.load %arg5[%c0_12, %c0_13] : memref<1x32xf32, #tpu.memory_space<vmem>>, vector<1x32xf32>
      %15 = vector.broadcast %14 : vector<1x32xf32> to vector<210x32xf32>
      %16 = arith.addf %13, %15 : vector<210x32xf32>
      %cst_14 = arith.constant 0.000000e+00 : f32
      %17 = vector.broadcast %cst_14 : f32 to vector<210x32xf32>
      %18 = arith.maximumf %16, %17 : vector<210x32xf32>
      %c0_15 = arith.constant 0 : index
      %c0_16 = arith.constant 0 : index
      %19 = vector.load %arg6[%c0_15, %c0_16] : memref<210x32xf32, #tpu.memory_space<vmem>>, vector<210x32xf32>
      tpu.vector_store %arg6[%c0_15, %c0_16], %18 {strides = array<i32>} : memref<210x32xf32, #tpu.memory_space<vmem>>, vector<210x32xf32>,
    } else {
    }
    return
  }
  func.func @transform_0(%arg0: i32, %arg1: i32, %arg2: i32) -> (i32, i32) {
    %c0_i32 = arith.constant 0 : i32
    return %arg0, %arg2 : i32, i32
  }
  func.func @transform_1(%arg0: i32, %arg1: i32, %arg2: i32) -> (i32, i32) {
    %c0_i32 = arith.constant 0 : i32
    return %arg2, %arg1 : i32, i32
  }
  func.func @transform_2(%arg0: i32, %arg1: i32, %arg2: i32) -> (i32, i32) {
    %c0_i32 = arith.constant 0 : i32
    %c0_i32_0 = arith.constant 0 : i32
    return %c0_i32, %arg1 : i32, i32
  }
  func.func @transform_3(%arg0: i32, %arg1: i32, %arg2: i32) -> (i32, i32) {
    %c0_i32 = arith.constant 0 : i32
    return %arg0, %arg1 : i32, i32
  }
}

module attributes {stable_mosaic.version = 11 : i64} {
  func.func @kernel(%arg0: i32, %arg1: i32, %arg2: i32, %arg3: memref<42x288xf32, #tpu.memory_space<vmem>>, %arg4: memref<288x32xbf16, #tpu.memory_space<vmem>>, %arg5: memref<1x32xf32, #tpu.memory_space<vmem>>, %arg6: memref<42x32xf32, #tpu.memory_space<vmem>>, %arg7: memref<42x32xf32, #tpu.memory_space<vmem>>) attributes {dimension_semantics = [#tpu.dimension_semantics<parallel>, #tpu.dimension_semantics<parallel>, #tpu.dimension_semantics<arbitrary>], iteration_bounds = array<i64: 1, 1, 1>, scalar_prefetch = 0 : i64, scratch_operands = 1 : i64, tpu.core_type = #tpu.core_type<tc>, window_params = [{transform_indices = @transform_0, window_bounds = array<i64: 42, 288>}, {transform_indices = @transform_1, window_bounds = array<i64: 288, 32>}, {transform_indices = @transform_2, window_bounds = array<i64: 1, 32>}, {transform_indices = @transform_3, window_bounds = array<i64: 42, 32>}]} {
    %c0_i32 = arith.constant 0 : i32
    %0 = arith.cmpi eq, %arg2, %c0_i32 : i32
    %1 = arith.extui %0 : i1 to i32
    %c0_i32_0 = arith.constant 0 : i32
    %2 = arith.cmpi ne, %1, %c0_i32_0 : i32
    scf.if %2 {
      %cst_10 = arith.constant 0.000000e+00 : f32
      %13 = vector.broadcast %cst_10 : f32 to vector<42x32xf32>
      %c0_11 = arith.constant 0 : index
      %c0_12 = arith.constant 0 : index
      %14 = vector.load %arg7[%c0_11, %c0_12] : memref<42x32xf32, #tpu.memory_space<vmem>>, vector<42x32xf32>
      tpu.vector_store %arg7[%c0_11, %c0_12], %13 {strides = array<i32>} : memref<42x32xf32, #tpu.memory_space<vmem>>, vector<42x32xf32>,
    } else {
    }
    %c0 = arith.constant 0 : index
    %c0_1 = arith.constant 0 : index
    %3 = vector.load %arg3[%c0, %c0_1] : memref<42x288xf32, #tpu.memory_space<vmem>>, vector<42x288xf32>
    %c0_2 = arith.constant 0 : index
    %c0_3 = arith.constant 0 : index
    %4 = vector.load %arg7[%c0_2, %c0_3] : memref<42x32xf32, #tpu.memory_space<vmem>>, vector<42x32xf32>
    %5 = arith.truncf %3 : vector<42x288xf32> to vector<42x288xbf16>
    %c0_4 = arith.constant 0 : index
    %c0_5 = arith.constant 0 : index
    %6 = vector.load %arg4[%c0_4, %c0_5] : memref<288x32xbf16, #tpu.memory_space<vmem>>, vector<288x32xbf16>
    %cst = arith.constant dense<0.000000e+00> : vector<42x32xf32>
    %7 = tpu.matmul %5, %6, %cst {dimension_numbers = #tpu.dot_dimension_numbers<[1], [0], [0], [1], [0, 0, 1, 1], [], []>} : vector<42x288xbf16>, vector<288x32xbf16>, vector<42x32xf32> -> vector<42x32xf32>
    %8 = arith.addf %4, %7 : vector<42x32xf32>
    %c0_6 = arith.constant 0 : index
    %c0_7 = arith.constant 0 : index
    %9 = vector.load %arg7[%c0_6, %c0_7] : memref<42x32xf32, #tpu.memory_space<vmem>>, vector<42x32xf32>
    tpu.vector_store %arg7[%c0_6, %c0_7], %8 {strides = array<i32>} : memref<42x32xf32, #tpu.memory_space<vmem>>, vector<42x32xf32>,
    %c0_i32_8 = arith.constant 0 : i32
    %10 = arith.cmpi eq, %arg2, %c0_i32_8 : i32
    %11 = arith.extui %10 : i1 to i32
    %c0_i32_9 = arith.constant 0 : i32
    %12 = arith.cmpi ne, %11, %c0_i32_9 : i32
    scf.if %12 {
      %c0_10 = arith.constant 0 : index
      %c0_11 = arith.constant 0 : index
      %13 = vector.load %arg7[%c0_10, %c0_11] : memref<42x32xf32, #tpu.memory_space<vmem>>, vector<42x32xf32>
      %c0_12 = arith.constant 0 : index
      %c0_13 = arith.constant 0 : index
      %14 = vector.load %arg5[%c0_12, %c0_13] : memref<1x32xf32, #tpu.memory_space<vmem>>, vector<1x32xf32>
      %15 = vector.broadcast %14 : vector<1x32xf32> to vector<42x32xf32>
      %16 = arith.addf %13, %15 : vector<42x32xf32>
      %cst_14 = arith.constant 0.000000e+00 : f32
      %17 = vector.broadcast %cst_14 : f32 to vector<42x32xf32>
      %18 = arith.maximumf %16, %17 : vector<42x32xf32>
      %c0_15 = arith.constant 0 : index
      %c0_16 = arith.constant 0 : index
      %19 = vector.load %arg6[%c0_15, %c0_16] : memref<42x32xf32, #tpu.memory_space<vmem>>, vector<42x32xf32>
      tpu.vector_store %arg6[%c0_15, %c0_16], %18 {strides = array<i32>} : memref<42x32xf32, #tpu.memory_space<vmem>>, vector<42x32xf32>,
    } else {
    }
    return
  }
  func.func @transform_0(%arg0: i32, %arg1: i32, %arg2: i32) -> (i32, i32) {
    %c0_i32 = arith.constant 0 : i32
    return %arg0, %arg2 : i32, i32
  }
  func.func @transform_1(%arg0: i32, %arg1: i32, %arg2: i32) -> (i32, i32) {
    %c0_i32 = arith.constant 0 : i32
    return %arg2, %arg1 : i32, i32
  }
  func.func @transform_2(%arg0: i32, %arg1: i32, %arg2: i32) -> (i32, i32) {
    %c0_i32 = arith.constant 0 : i32
    %c0_i32_0 = arith.constant 0 : i32
    return %c0_i32, %arg1 : i32, i32
  }
  func.func @transform_3(%arg0: i32, %arg1: i32, %arg2: i32) -> (i32, i32) {
    %c0_i32 = arith.constant 0 : i32
    return %arg0, %arg1 : i32, i32
  }
}

module attributes {stable_mosaic.version = 11 : i64} {
  func.func @kernel(%arg0: i32, %arg1: i32, %arg2: i32, %arg3: memref<14x32xf32, #tpu.memory_space<vmem>>, %arg4: memref<32x128xbf16, #tpu.memory_space<vmem>>, %arg5: memref<1x128xf32, #tpu.memory_space<vmem>>, %arg6: memref<1x32xf32, #tpu.memory_space<vmem>>, %arg7: memref<1x32xf32, #tpu.memory_space<vmem>>, %arg8: memref<14x128xf32, #tpu.memory_space<vmem>>, %arg9: memref<14x128xf32, #tpu.memory_space<vmem>>) attributes {dimension_semantics = [#tpu.dimension_semantics<parallel>, #tpu.dimension_semantics<parallel>, #tpu.dimension_semantics<arbitrary>], iteration_bounds = array<i64: 1, 1, 1>, scalar_prefetch = 0 : i64, scratch_operands = 1 : i64, tpu.core_type = #tpu.core_type<tc>, window_params = [{transform_indices = @transform_0, window_bounds = array<i64: 14, 32>}, {transform_indices = @transform_1, window_bounds = array<i64: 32, 128>}, {transform_indices = @transform_2, window_bounds = array<i64: 1, 128>}, {pipeline_mode = #tpu.pipeline_mode<synchronous>, transform_indices = @transform_3, window_bounds = array<i64: 1, 32>}, {pipeline_mode = #tpu.pipeline_mode<synchronous>, transform_indices = @transform_4, window_bounds = array<i64: 1, 32>}, {transform_indices = @transform_5, window_bounds = array<i64: 14, 128>}]} {
    %c0_i32 = arith.constant 0 : i32
    %0 = arith.cmpi eq, %arg2, %c0_i32 : i32
    %1 = arith.extui %0 : i1 to i32
    %c0_i32_0 = arith.constant 0 : i32
    %2 = arith.cmpi ne, %1, %c0_i32_0 : i32
    scf.if %2 {
      %cst_19 = arith.constant 0.000000e+00 : f32
      %37 = vector.broadcast %cst_19 : f32 to vector<14x128xf32>
      %c0_20 = arith.constant 0 : index
      %c0_21 = arith.constant 0 : index
      %38 = vector.load %arg9[%c0_20, %c0_21] : memref<14x128xf32, #tpu.memory_space<vmem>>, vector<14x128xf32>
      tpu.vector_store %arg9[%c0_20, %c0_21], %37 {strides = array<i32>} : memref<14x128xf32, #tpu.memory_space<vmem>>, vector<14x128xf32>,
    } else {
    }
    %c0 = arith.constant 0 : index
    %c0_1 = arith.constant 0 : index
    %3 = vector.load %arg3[%c0, %c0_1] : memref<14x32xf32, #tpu.memory_space<vmem>>, vector<14x32xf32>
    %cst = arith.constant dense<0.000000e+00> : vector<14xf32>
    %4 = vector.multi_reduction <add>, %3, %cst [1] : vector<14x32xf32> to vector<14xf32>
    %5 = vector.shape_cast %4 : vector<14xf32> to vector<14x1xf32>
    %cst_2 = arith.constant 3.200000e+01 : f32
    %6 = vector.broadcast %cst_2 : f32 to vector<14x1xf32>
    %7 = arith.divf %5, %6 : vector<14x1xf32>
    %8 = vector.broadcast %7 : vector<14x1xf32> to vector<14x32xf32>
    %9 = arith.subf %3, %8 : vector<14x32xf32>
    %10 = arith.mulf %9, %9 : vector<14x32xf32>
    %cst_3 = arith.constant dense<0.000000e+00> : vector<14xf32>
    %11 = vector.multi_reduction <add>, %10, %cst_3 [1] : vector<14x32xf32> to vector<14xf32>
    %12 = vector.shape_cast %11 : vector<14xf32> to vector<14x1xf32>
    %cst_4 = arith.constant 3.200000e+01 : f32
    %13 = vector.broadcast %cst_4 : f32 to vector<14x1xf32>
    %14 = arith.divf %12, %13 : vector<14x1xf32>
    %15 = vector.broadcast %7 : vector<14x1xf32> to vector<14x32xf32>
    %16 = arith.subf %3, %15 : vector<14x32xf32>
    %cst_5 = arith.constant 9.99999974E-6 : f32
    %17 = vector.broadcast %cst_5 : f32 to vector<14x1xf32>
    %18 = arith.addf %14, %17 : vector<14x1xf32>
    %19 = math.rsqrt %18 : vector<14x1xf32>
    %20 = vector.broadcast %19 : vector<14x1xf32> to vector<14x32xf32>
    %21 = arith.mulf %16, %20 : vector<14x32xf32>
    %c0_6 = arith.constant 0 : index
    %c0_7 = arith.constant 0 : index
    %22 = vector.load %arg6[%c0_6, %c0_7] : memref<1x32xf32, #tpu.memory_space<vmem>>, vector<1x32xf32>
    %23 = vector.broadcast %22 : vector<1x32xf32> to vector<14x32xf32>
    %24 = arith.mulf %21, %23 : vector<14x32xf32>
    %c0_8 = arith.constant 0 : index
    %c0_9 = arith.constant 0 : index
    %25 = vector.load %arg7[%c0_8, %c0_9] : memref<1x32xf32, #tpu.memory_space<vmem>>, vector<1x32xf32>
    %26 = vector.broadcast %25 : vector<1x32xf32> to vector<14x32xf32>
    %27 = arith.addf %24, %26 : vector<14x32xf32>
    %c0_10 = arith.constant 0 : index
    %c0_11 = arith.constant 0 : index
    %28 = vector.load %arg9[%c0_10, %c0_11] : memref<14x128xf32, #tpu.memory_space<vmem>>, vector<14x128xf32>
    %29 = arith.truncf %27 : vector<14x32xf32> to vector<14x32xbf16>
    %c0_12 = arith.constant 0 : index
    %c0_13 = arith.constant 0 : index
    %30 = vector.load %arg4[%c0_12, %c0_13] : memref<32x128xbf16, #tpu.memory_space<vmem>>, vector<32x128xbf16>
    %cst_14 = arith.constant dense<0.000000e+00> : vector<14x128xf32>
    %31 = tpu.matmul %29, %30, %cst_14 {dimension_numbers = #tpu.dot_dimension_numbers<[1], [0], [0], [1], [0, 0, 1, 1], [], []>} : vector<14x32xbf16>, vector<32x128xbf16>, vector<14x128xf32> -> vector<14x128xf32>
    %32 = arith.addf %28, %31 : vector<14x128xf32>
    %c0_15 = arith.constant 0 : index
    %c0_16 = arith.constant 0 : index
    %33 = vector.load %arg9[%c0_15, %c0_16] : memref<14x128xf32, #tpu.memory_space<vmem>>, vector<14x128xf32>
    tpu.vector_store %arg9[%c0_15, %c0_16], %32 {strides = array<i32>} : memref<14x128xf32, #tpu.memory_space<vmem>>, vector<14x128xf32>,
    %c0_i32_17 = arith.constant 0 : i32
    %34 = arith.cmpi eq, %arg2, %c0_i32_17 : i32
    %35 = arith.extui %34 : i1 to i32
    %c0_i32_18 = arith.constant 0 : i32
    %36 = arith.cmpi ne, %35, %c0_i32_18 : i32
    scf.if %36 {
      %c0_19 = arith.constant 0 : index
      %c0_20 = arith.constant 0 : index
      %37 = vector.load %arg9[%c0_19, %c0_20] : memref<14x128xf32, #tpu.memory_space<vmem>>, vector<14x128xf32>
      %c0_21 = arith.constant 0 : index
      %c0_22 = arith.constant 0 : index
      %38 = vector.load %arg5[%c0_21, %c0_22] : memref<1x128xf32, #tpu.memory_space<vmem>>, vector<1x128xf32>
      %39 = vector.broadcast %38 : vector<1x128xf32> to vector<14x128xf32>
      %40 = arith.addf %37, %39 : vector<14x128xf32>
      %41 = arith.negf %40 : vector<14x128xf32>
      %42 = math.exp %41 : vector<14x128xf32>
      %cst_23 = arith.constant 1.000000e+00 : f32
      %43 = vector.broadcast %cst_23 : f32 to vector<14x128xf32>
      %44 = arith.addf %43, %42 : vector<14x128xf32>
      %45 = arith.divf %43, %44 : vector<14x128xf32>
      %46 = arith.mulf %40, %45 : vector<14x128xf32>
      %c0_24 = arith.constant 0 : index
      %c0_25 = arith.constant 0 : index
      %47 = vector.load %arg8[%c0_24, %c0_25] : memref<14x128xf32, #tpu.memory_space<vmem>>, vector<14x128xf32>
      tpu.vector_store %arg8[%c0_24, %c0_25], %46 {strides = array<i32>} : memref<14x128xf32, #tpu.memory_space<vmem>>, vector<14x128xf32>,
    } else {
    }
    return
  }
  func.func @transform_0(%arg0: i32, %arg1: i32, %arg2: i32) -> (i32, i32) {
    %c0_i32 = arith.constant 0 : i32
    return %arg0, %arg2 : i32, i32
  }
  func.func @transform_1(%arg0: i32, %arg1: i32, %arg2: i32) -> (i32, i32) {
    %c0_i32 = arith.constant 0 : i32
    return %arg2, %arg1 : i32, i32
  }
  func.func @transform_2(%arg0: i32, %arg1: i32, %arg2: i32) -> (i32, i32) {
    %c0_i32 = arith.constant 0 : i32
    %c0_i32_0 = arith.constant 0 : i32
    return %c0_i32, %arg1 : i32, i32
  }
  func.func @transform_3(%arg0: i32, %arg1: i32, %arg2: i32) -> (i32, i32) {
    %c0_i32 = arith.constant 0 : i32
    %c0_i32_0 = arith.constant 0 : i32
    %c0_i32_1 = arith.constant 0 : i32
    return %c0_i32, %c0_i32_0 : i32, i32
  }
  func.func @transform_4(%arg0: i32, %arg1: i32, %arg2: i32) -> (i32, i32) {
    %c0_i32 = arith.constant 0 : i32
    %c0_i32_0 = arith.constant 0 : i32
    %c0_i32_1 = arith.constant 0 : i32
    return %c0_i32, %c0_i32_0 : i32, i32
  }
  func.func @transform_5(%arg0: i32, %arg1: i32, %arg2: i32) -> (i32, i32) {
    %c0_i32 = arith.constant 0 : i32
    return %arg0, %arg1 : i32, i32
  }
}

module attributes {stable_mosaic.version = 11 : i64} {
  func.func @kernel(%arg0: i32, %arg1: i32, %arg2: i32, %arg3: memref<14x96xf32, #tpu.memory_space<vmem>>, %arg4: memref<96x32xbf16, #tpu.memory_space<vmem>>, %arg5: memref<1x32xf32, #tpu.memory_space<vmem>>, %arg6: memref<14x32xf32, #tpu.memory_space<vmem>>, %arg7: memref<14x32xf32, #tpu.memory_space<vmem>>) attributes {dimension_semantics = [#tpu.dimension_semantics<parallel>, #tpu.dimension_semantics<parallel>, #tpu.dimension_semantics<arbitrary>], iteration_bounds = array<i64: 1, 1, 1>, scalar_prefetch = 0 : i64, scratch_operands = 1 : i64, tpu.core_type = #tpu.core_type<tc>, window_params = [{transform_indices = @transform_0, window_bounds = array<i64: 14, 96>}, {transform_indices = @transform_1, window_bounds = array<i64: 96, 32>}, {transform_indices = @transform_2, window_bounds = array<i64: 1, 32>}, {transform_indices = @transform_3, window_bounds = array<i64: 14, 32>}]} {
    %c0_i32 = arith.constant 0 : i32
    %0 = arith.cmpi eq, %arg2, %c0_i32 : i32
    %1 = arith.extui %0 : i1 to i32
    %c0_i32_0 = arith.constant 0 : i32
    %2 = arith.cmpi ne, %1, %c0_i32_0 : i32
    scf.if %2 {
      %cst_10 = arith.constant 0.000000e+00 : f32
      %13 = vector.broadcast %cst_10 : f32 to vector<14x32xf32>
      %c0_11 = arith.constant 0 : index
      %c0_12 = arith.constant 0 : index
      %14 = vector.load %arg7[%c0_11, %c0_12] : memref<14x32xf32, #tpu.memory_space<vmem>>, vector<14x32xf32>
      tpu.vector_store %arg7[%c0_11, %c0_12], %13 {strides = array<i32>} : memref<14x32xf32, #tpu.memory_space<vmem>>, vector<14x32xf32>,
    } else {
    }
    %c0 = arith.constant 0 : index
    %c0_1 = arith.constant 0 : index
    %3 = vector.load %arg3[%c0, %c0_1] : memref<14x96xf32, #tpu.memory_space<vmem>>, vector<14x96xf32>
    %c0_2 = arith.constant 0 : index
    %c0_3 = arith.constant 0 : index
    %4 = vector.load %arg7[%c0_2, %c0_3] : memref<14x32xf32, #tpu.memory_space<vmem>>, vector<14x32xf32>
    %5 = arith.truncf %3 : vector<14x96xf32> to vector<14x96xbf16>
    %c0_4 = arith.constant 0 : index
    %c0_5 = arith.constant 0 : index
    %6 = vector.load %arg4[%c0_4, %c0_5] : memref<96x32xbf16, #tpu.memory_space<vmem>>, vector<96x32xbf16>
    %cst = arith.constant dense<0.000000e+00> : vector<14x32xf32>
    %7 = tpu.matmul %5, %6, %cst {dimension_numbers = #tpu.dot_dimension_numbers<[1], [0], [0], [1], [0, 0, 1, 1], [], []>} : vector<14x96xbf16>, vector<96x32xbf16>, vector<14x32xf32> -> vector<14x32xf32>
    %8 = arith.addf %4, %7 : vector<14x32xf32>
    %c0_6 = arith.constant 0 : index
    %c0_7 = arith.constant 0 : index
    %9 = vector.load %arg7[%c0_6, %c0_7] : memref<14x32xf32, #tpu.memory_space<vmem>>, vector<14x32xf32>
    tpu.vector_store %arg7[%c0_6, %c0_7], %8 {strides = array<i32>} : memref<14x32xf32, #tpu.memory_space<vmem>>, vector<14x32xf32>,
    %c0_i32_8 = arith.constant 0 : i32
    %10 = arith.cmpi eq, %arg2, %c0_i32_8 : i32
    %11 = arith.extui %10 : i1 to i32
    %c0_i32_9 = arith.constant 0 : i32
    %12 = arith.cmpi ne, %11, %c0_i32_9 : i32
    scf.if %12 {
      %c0_10 = arith.constant 0 : index
      %c0_11 = arith.constant 0 : index
      %13 = vector.load %arg7[%c0_10, %c0_11] : memref<14x32xf32, #tpu.memory_space<vmem>>, vector<14x32xf32>
      %c0_12 = arith.constant 0 : index
      %c0_13 = arith.constant 0 : index
      %14 = vector.load %arg5[%c0_12, %c0_13] : memref<1x32xf32, #tpu.memory_space<vmem>>, vector<1x32xf32>
      %15 = vector.broadcast %14 : vector<1x32xf32> to vector<14x32xf32>
      %16 = arith.addf %13, %15 : vector<14x32xf32>
      %c0_14 = arith.constant 0 : index
      %c0_15 = arith.constant 0 : index
      %17 = vector.load %arg6[%c0_14, %c0_15] : memref<14x32xf32, #tpu.memory_space<vmem>>, vector<14x32xf32>
      tpu.vector_store %arg6[%c0_14, %c0_15], %16 {strides = array<i32>} : memref<14x32xf32, #tpu.memory_space<vmem>>, vector<14x32xf32>,
    } else {
    }
    return
  }
  func.func @transform_0(%arg0: i32, %arg1: i32, %arg2: i32) -> (i32, i32) {
    %c0_i32 = arith.constant 0 : i32
    return %arg0, %arg2 : i32, i32
  }
  func.func @transform_1(%arg0: i32, %arg1: i32, %arg2: i32) -> (i32, i32) {
    %c0_i32 = arith.constant 0 : i32
    return %arg2, %arg1 : i32, i32
  }
  func.func @transform_2(%arg0: i32, %arg1: i32, %arg2: i32) -> (i32, i32) {
    %c0_i32 = arith.constant 0 : i32
    %c0_i32_0 = arith.constant 0 : i32
    return %c0_i32, %arg1 : i32, i32
  }
  func.func @transform_3(%arg0: i32, %arg1: i32, %arg2: i32) -> (i32, i32) {
    %c0_i32 = arith.constant 0 : i32
    return %arg0, %arg1 : i32, i32
  }
}

module attributes {stable_mosaic.version = 11 : i64} {
  func.func @kernel(%arg0: i32, %arg1: i32, %arg2: i32, %arg3: memref<14x128xf32, #tpu.memory_space<vmem>>, %arg4: memref<128x32xbf16, #tpu.memory_space<vmem>>, %arg5: memref<1x32xf32, #tpu.memory_space<vmem>>, %arg6: memref<14x32xf32, #tpu.memory_space<vmem>>, %arg7: memref<14x32xf32, #tpu.memory_space<vmem>>, %arg8: memref<14x32xf32, #tpu.memory_space<vmem>>) attributes {dimension_semantics = [#tpu.dimension_semantics<parallel>, #tpu.dimension_semantics<parallel>, #tpu.dimension_semantics<arbitrary>], iteration_bounds = array<i64: 1, 1, 1>, scalar_prefetch = 0 : i64, scratch_operands = 1 : i64, tpu.core_type = #tpu.core_type<tc>, window_params = [{transform_indices = @transform_0, window_bounds = array<i64: 14, 128>}, {transform_indices = @transform_1, window_bounds = array<i64: 128, 32>}, {transform_indices = @transform_2, window_bounds = array<i64: 1, 32>}, {transform_indices = @transform_3, window_bounds = array<i64: 14, 32>}, {transform_indices = @transform_4, window_bounds = array<i64: 14, 32>}]} {
    %c0_i32 = arith.constant 0 : i32
    %0 = arith.cmpi eq, %arg2, %c0_i32 : i32
    %1 = arith.extui %0 : i1 to i32
    %c0_i32_0 = arith.constant 0 : i32
    %2 = arith.cmpi ne, %1, %c0_i32_0 : i32
    scf.if %2 {
      %cst_10 = arith.constant 0.000000e+00 : f32
      %13 = vector.broadcast %cst_10 : f32 to vector<14x32xf32>
      %c0_11 = arith.constant 0 : index
      %c0_12 = arith.constant 0 : index
      %14 = vector.load %arg8[%c0_11, %c0_12] : memref<14x32xf32, #tpu.memory_space<vmem>>, vector<14x32xf32>
      tpu.vector_store %arg8[%c0_11, %c0_12], %13 {strides = array<i32>} : memref<14x32xf32, #tpu.memory_space<vmem>>, vector<14x32xf32>,
    } else {
    }
    %c0 = arith.constant 0 : index
    %c0_1 = arith.constant 0 : index
    %3 = vector.load %arg3[%c0, %c0_1] : memref<14x128xf32, #tpu.memory_space<vmem>>, vector<14x128xf32>
    %c0_2 = arith.constant 0 : index
    %c0_3 = arith.constant 0 : index
    %4 = vector.load %arg8[%c0_2, %c0_3] : memref<14x32xf32, #tpu.memory_space<vmem>>, vector<14x32xf32>
    %5 = arith.truncf %3 : vector<14x128xf32> to vector<14x128xbf16>
    %c0_4 = arith.constant 0 : index
    %c0_5 = arith.constant 0 : index
    %6 = vector.load %arg4[%c0_4, %c0_5] : memref<128x32xbf16, #tpu.memory_space<vmem>>, vector<128x32xbf16>
    %cst = arith.constant dense<0.000000e+00> : vector<14x32xf32>
    %7 = tpu.matmul %5, %6, %cst {dimension_numbers = #tpu.dot_dimension_numbers<[1], [0], [0], [1], [0, 0, 1, 1], [], []>} : vector<14x128xbf16>, vector<128x32xbf16>, vector<14x32xf32> -> vector<14x32xf32>
    %8 = arith.addf %4, %7 : vector<14x32xf32>
    %c0_6 = arith.constant 0 : index
    %c0_7 = arith.constant 0 : index
    %9 = vector.load %arg8[%c0_6, %c0_7] : memref<14x32xf32, #tpu.memory_space<vmem>>, vector<14x32xf32>
    tpu.vector_store %arg8[%c0_6, %c0_7], %8 {strides = array<i32>} : memref<14x32xf32, #tpu.memory_space<vmem>>, vector<14x32xf32>,
    %c0_i32_8 = arith.constant 0 : i32
    %10 = arith.cmpi eq, %arg2, %c0_i32_8 : i32
    %11 = arith.extui %10 : i1 to i32
    %c0_i32_9 = arith.constant 0 : i32
    %12 = arith.cmpi ne, %11, %c0_i32_9 : i32
    scf.if %12 {
      %c0_10 = arith.constant 0 : index
      %c0_11 = arith.constant 0 : index
      %13 = vector.load %arg8[%c0_10, %c0_11] : memref<14x32xf32, #tpu.memory_space<vmem>>, vector<14x32xf32>
      %c0_12 = arith.constant 0 : index
      %c0_13 = arith.constant 0 : index
      %14 = vector.load %arg5[%c0_12, %c0_13] : memref<1x32xf32, #tpu.memory_space<vmem>>, vector<1x32xf32>
      %15 = vector.broadcast %14 : vector<1x32xf32> to vector<14x32xf32>
      %16 = arith.addf %13, %15 : vector<14x32xf32>
      %c0_14 = arith.constant 0 : index
      %c0_15 = arith.constant 0 : index
      %17 = vector.load %arg6[%c0_14, %c0_15] : memref<14x32xf32, #tpu.memory_space<vmem>>, vector<14x32xf32>
      %cst_16 = arith.constant 5.000000e-01 : f32
      %18 = vector.broadcast %cst_16 : f32 to vector<14x32xf32>
      %19 = arith.mulf %18, %16 : vector<14x32xf32>
      %20 = arith.addf %17, %19 : vector<14x32xf32>
      %c0_17 = arith.constant 0 : index
      %c0_18 = arith.constant 0 : index
      %21 = vector.load %arg7[%c0_17, %c0_18] : memref<14x32xf32, #tpu.memory_space<vmem>>, vector<14x32xf32>
      tpu.vector_store %arg7[%c0_17, %c0_18], %20 {strides = array<i32>} : memref<14x32xf32, #tpu.memory_space<vmem>>, vector<14x32xf32>,
    } else {
    }
    return
  }
  func.func @transform_0(%arg0: i32, %arg1: i32, %arg2: i32) -> (i32, i32) {
    %c0_i32 = arith.constant 0 : i32
    return %arg0, %arg2 : i32, i32
  }
  func.func @transform_1(%arg0: i32, %arg1: i32, %arg2: i32) -> (i32, i32) {
    %c0_i32 = arith.constant 0 : i32
    return %arg2, %arg1 : i32, i32
  }
  func.func @transform_2(%arg0: i32, %arg1: i32, %arg2: i32) -> (i32, i32) {
    %c0_i32 = arith.constant 0 : i32
    %c0_i32_0 = arith.constant 0 : i32
    return %c0_i32, %arg1 : i32, i32
  }
  func.func @transform_3(%arg0: i32, %arg1: i32, %arg2: i32) -> (i32, i32) {
    %c0_i32 = arith.constant 0 : i32
    return %arg0, %arg1 : i32, i32
  }
  func.func @transform_4(%arg0: i32, %arg1: i32, %arg2: i32) -> (i32, i32) {
    %c0_i32 = arith.constant 0 : i32
    return %arg0, %arg1 : i32, i32
  }
}

module attributes {stable_mosaic.version = 11 : i64} {
  func.func @kernel(%arg0: i32, %arg1: i32, %arg2: i32, %arg3: memref<14x32xf32, #tpu.memory_space<vmem>>, %arg4: memref<32x96xbf16, #tpu.memory_space<vmem>>, %arg5: memref<1x96xf32, #tpu.memory_space<vmem>>, %arg6: memref<1x32xf32, #tpu.memory_space<vmem>>, %arg7: memref<1x32xf32, #tpu.memory_space<vmem>>, %arg8: memref<14x96xf32, #tpu.memory_space<vmem>>, %arg9: memref<14x96xf32, #tpu.memory_space<vmem>>) attributes {dimension_semantics = [#tpu.dimension_semantics<parallel>, #tpu.dimension_semantics<parallel>, #tpu.dimension_semantics<arbitrary>], iteration_bounds = array<i64: 1, 1, 1>, scalar_prefetch = 0 : i64, scratch_operands = 1 : i64, tpu.core_type = #tpu.core_type<tc>, window_params = [{transform_indices = @transform_0, window_bounds = array<i64: 14, 32>}, {transform_indices = @transform_1, window_bounds = array<i64: 32, 96>}, {transform_indices = @transform_2, window_bounds = array<i64: 1, 96>}, {pipeline_mode = #tpu.pipeline_mode<synchronous>, transform_indices = @transform_3, window_bounds = array<i64: 1, 32>}, {pipeline_mode = #tpu.pipeline_mode<synchronous>, transform_indices = @transform_4, window_bounds = array<i64: 1, 32>}, {transform_indices = @transform_5, window_bounds = array<i64: 14, 96>}]} {
    %c0_i32 = arith.constant 0 : i32
    %0 = arith.cmpi eq, %arg2, %c0_i32 : i32
    %1 = arith.extui %0 : i1 to i32
    %c0_i32_0 = arith.constant 0 : i32
    %2 = arith.cmpi ne, %1, %c0_i32_0 : i32
    scf.if %2 {
      %cst_19 = arith.constant 0.000000e+00 : f32
      %37 = vector.broadcast %cst_19 : f32 to vector<14x96xf32>
      %c0_20 = arith.constant 0 : index
      %c0_21 = arith.constant 0 : index
      %38 = vector.load %arg9[%c0_20, %c0_21] : memref<14x96xf32, #tpu.memory_space<vmem>>, vector<14x96xf32>
      tpu.vector_store %arg9[%c0_20, %c0_21], %37 {strides = array<i32>} : memref<14x96xf32, #tpu.memory_space<vmem>>, vector<14x96xf32>,
    } else {
    }
    %c0 = arith.constant 0 : index
    %c0_1 = arith.constant 0 : index
    %3 = vector.load %arg3[%c0, %c0_1] : memref<14x32xf32, #tpu.memory_space<vmem>>, vector<14x32xf32>
    %cst = arith.constant dense<0.000000e+00> : vector<14xf32>
    %4 = vector.multi_reduction <add>, %3, %cst [1] : vector<14x32xf32> to vector<14xf32>
    %5 = vector.shape_cast %4 : vector<14xf32> to vector<14x1xf32>
    %cst_2 = arith.constant 3.200000e+01 : f32
    %6 = vector.broadcast %cst_2 : f32 to vector<14x1xf32>
    %7 = arith.divf %5, %6 : vector<14x1xf32>
    %8 = vector.broadcast %7 : vector<14x1xf32> to vector<14x32xf32>
    %9 = arith.subf %3, %8 : vector<14x32xf32>
    %10 = arith.mulf %9, %9 : vector<14x32xf32>
    %cst_3 = arith.constant dense<0.000000e+00> : vector<14xf32>
    %11 = vector.multi_reduction <add>, %10, %cst_3 [1] : vector<14x32xf32> to vector<14xf32>
    %12 = vector.shape_cast %11 : vector<14xf32> to vector<14x1xf32>
    %cst_4 = arith.constant 3.200000e+01 : f32
    %13 = vector.broadcast %cst_4 : f32 to vector<14x1xf32>
    %14 = arith.divf %12, %13 : vector<14x1xf32>
    %15 = vector.broadcast %7 : vector<14x1xf32> to vector<14x32xf32>
    %16 = arith.subf %3, %15 : vector<14x32xf32>
    %cst_5 = arith.constant 9.99999974E-6 : f32
    %17 = vector.broadcast %cst_5 : f32 to vector<14x1xf32>
    %18 = arith.addf %14, %17 : vector<14x1xf32>
    %19 = math.rsqrt %18 : vector<14x1xf32>
    %20 = vector.broadcast %19 : vector<14x1xf32> to vector<14x32xf32>
    %21 = arith.mulf %16, %20 : vector<14x32xf32>
    %c0_6 = arith.constant 0 : index
    %c0_7 = arith.constant 0 : index
    %22 = vector.load %arg6[%c0_6, %c0_7] : memref<1x32xf32, #tpu.memory_space<vmem>>, vector<1x32xf32>
    %23 = vector.broadcast %22 : vector<1x32xf32> to vector<14x32xf32>
    %24 = arith.mulf %21, %23 : vector<14x32xf32>
    %c0_8 = arith.constant 0 : index
    %c0_9 = arith.constant 0 : index
    %25 = vector.load %arg7[%c0_8, %c0_9] : memref<1x32xf32, #tpu.memory_space<vmem>>, vector<1x32xf32>
    %26 = vector.broadcast %25 : vector<1x32xf32> to vector<14x32xf32>
    %27 = arith.addf %24, %26 : vector<14x32xf32>
    %c0_10 = arith.constant 0 : index
    %c0_11 = arith.constant 0 : index
    %28 = vector.load %arg9[%c0_10, %c0_11] : memref<14x96xf32, #tpu.memory_space<vmem>>, vector<14x96xf32>
    %29 = arith.truncf %27 : vector<14x32xf32> to vector<14x32xbf16>
    %c0_12 = arith.constant 0 : index
    %c0_13 = arith.constant 0 : index
    %30 = vector.load %arg4[%c0_12, %c0_13] : memref<32x96xbf16, #tpu.memory_space<vmem>>, vector<32x96xbf16>
    %cst_14 = arith.constant dense<0.000000e+00> : vector<14x96xf32>
    %31 = tpu.matmul %29, %30, %cst_14 {dimension_numbers = #tpu.dot_dimension_numbers<[1], [0], [0], [1], [0, 0, 1, 1], [], []>} : vector<14x32xbf16>, vector<32x96xbf16>, vector<14x96xf32> -> vector<14x96xf32>
    %32 = arith.addf %28, %31 : vector<14x96xf32>
    %c0_15 = arith.constant 0 : index
    %c0_16 = arith.constant 0 : index
    %33 = vector.load %arg9[%c0_15, %c0_16] : memref<14x96xf32, #tpu.memory_space<vmem>>, vector<14x96xf32>
    tpu.vector_store %arg9[%c0_15, %c0_16], %32 {strides = array<i32>} : memref<14x96xf32, #tpu.memory_space<vmem>>, vector<14x96xf32>,
    %c0_i32_17 = arith.constant 0 : i32
    %34 = arith.cmpi eq, %arg2, %c0_i32_17 : i32
    %35 = arith.extui %34 : i1 to i32
    %c0_i32_18 = arith.constant 0 : i32
    %36 = arith.cmpi ne, %35, %c0_i32_18 : i32
    scf.if %36 {
      %c0_19 = arith.constant 0 : index
      %c0_20 = arith.constant 0 : index
      %37 = vector.load %arg9[%c0_19, %c0_20] : memref<14x96xf32, #tpu.memory_space<vmem>>, vector<14x96xf32>
      %c0_21 = arith.constant 0 : index
      %c0_22 = arith.constant 0 : index
      %38 = vector.load %arg5[%c0_21, %c0_22] : memref<1x96xf32, #tpu.memory_space<vmem>>, vector<1x96xf32>
      %39 = vector.broadcast %38 : vector<1x96xf32> to vector<14x96xf32>
      %40 = arith.addf %37, %39 : vector<14x96xf32>
      %c0_23 = arith.constant 0 : index
      %c0_24 = arith.constant 0 : index
      %41 = vector.load %arg8[%c0_23, %c0_24] : memref<14x96xf32, #tpu.memory_space<vmem>>, vector<14x96xf32>
      tpu.vector_store %arg8[%c0_23, %c0_24], %40 {strides = array<i32>} : memref<14x96xf32, #tpu.memory_space<vmem>>, vector<14x96xf32>,
    } else {
    }
    return
  }
  func.func @transform_0(%arg0: i32, %arg1: i32, %arg2: i32) -> (i32, i32) {
    %c0_i32 = arith.constant 0 : i32
    return %arg0, %arg2 : i32, i32
  }
  func.func @transform_1(%arg0: i32, %arg1: i32, %arg2: i32) -> (i32, i32) {
    %c0_i32 = arith.constant 0 : i32
    return %arg2, %arg1 : i32, i32
  }
  func.func @transform_2(%arg0: i32, %arg1: i32, %arg2: i32) -> (i32, i32) {
    %c0_i32 = arith.constant 0 : i32
    %c0_i32_0 = arith.constant 0 : i32
    return %c0_i32, %arg1 : i32, i32
  }
  func.func @transform_3(%arg0: i32, %arg1: i32, %arg2: i32) -> (i32, i32) {
    %c0_i32 = arith.constant 0 : i32
    %c0_i32_0 = arith.constant 0 : i32
    %c0_i32_1 = arith.constant 0 : i32
    return %c0_i32, %c0_i32_0 : i32, i32
  }
  func.func @transform_4(%arg0: i32, %arg1: i32, %arg2: i32) -> (i32, i32) {
    %c0_i32 = arith.constant 0 : i32
    %c0_i32_0 = arith.constant 0 : i32
    %c0_i32_1 = arith.constant 0 : i32
    return %c0_i32, %c0_i32_0 : i32, i32
  }
  func.func @transform_5(%arg0: i32, %arg1: i32, %arg2: i32) -> (i32, i32) {
    %c0_i32 = arith.constant 0 : i32
    return %arg0, %arg1 : i32, i32
  }
}

module attributes {stable_mosaic.version = 11 : i64} {
  func.func @kernel(%arg0: i32, %arg1: i32, %arg2: i32, %arg3: memref<7x32xf32, #tpu.memory_space<vmem>>, %arg4: memref<32x32xbf16, #tpu.memory_space<vmem>>, %arg5: memref<7x32xf32, #tpu.memory_space<vmem>>, %arg6: memref<7x32xf32, #tpu.memory_space<vmem>>) attributes {dimension_semantics = [#tpu.dimension_semantics<parallel>, #tpu.dimension_semantics<parallel>, #tpu.dimension_semantics<arbitrary>], iteration_bounds = array<i64: 1, 1, 1>, scalar_prefetch = 0 : i64, scratch_operands = 1 : i64, tpu.core_type = #tpu.core_type<tc>, window_params = [{transform_indices = @transform_0, window_bounds = array<i64: 7, 32>}, {transform_indices = @transform_1, window_bounds = array<i64: 32, 32>}, {transform_indices = @transform_2, window_bounds = array<i64: 7, 32>}]} {
    %c0_i32 = arith.constant 0 : i32
    %0 = arith.cmpi eq, %arg2, %c0_i32 : i32
    %1 = arith.extui %0 : i1 to i32
    %c0_i32_0 = arith.constant 0 : i32
    %2 = arith.cmpi ne, %1, %c0_i32_0 : i32
    scf.if %2 {
      %cst_10 = arith.constant 0.000000e+00 : f32
      %13 = vector.broadcast %cst_10 : f32 to vector<7x32xf32>
      %c0_11 = arith.constant 0 : index
      %c0_12 = arith.constant 0 : index
      %14 = vector.load %arg6[%c0_11, %c0_12] : memref<7x32xf32, #tpu.memory_space<vmem>>, vector<7x32xf32>
      tpu.vector_store %arg6[%c0_11, %c0_12], %13 {strides = array<i32>} : memref<7x32xf32, #tpu.memory_space<vmem>>, vector<7x32xf32>,
    } else {
    }
    %c0 = arith.constant 0 : index
    %c0_1 = arith.constant 0 : index
    %3 = vector.load %arg3[%c0, %c0_1] : memref<7x32xf32, #tpu.memory_space<vmem>>, vector<7x32xf32>
    %c0_2 = arith.constant 0 : index
    %c0_3 = arith.constant 0 : index
    %4 = vector.load %arg6[%c0_2, %c0_3] : memref<7x32xf32, #tpu.memory_space<vmem>>, vector<7x32xf32>
    %5 = arith.truncf %3 : vector<7x32xf32> to vector<7x32xbf16>
    %c0_4 = arith.constant 0 : index
    %c0_5 = arith.constant 0 : index
    %6 = vector.load %arg4[%c0_4, %c0_5] : memref<32x32xbf16, #tpu.memory_space<vmem>>, vector<32x32xbf16>
    %cst = arith.constant dense<0.000000e+00> : vector<7x32xf32>
    %7 = tpu.matmul %5, %6, %cst {dimension_numbers = #tpu.dot_dimension_numbers<[1], [0], [0], [1], [0, 0, 1, 1], [], []>} : vector<7x32xbf16>, vector<32x32xbf16>, vector<7x32xf32> -> vector<7x32xf32>
    %8 = arith.addf %4, %7 : vector<7x32xf32>
    %c0_6 = arith.constant 0 : index
    %c0_7 = arith.constant 0 : index
    %9 = vector.load %arg6[%c0_6, %c0_7] : memref<7x32xf32, #tpu.memory_space<vmem>>, vector<7x32xf32>
    tpu.vector_store %arg6[%c0_6, %c0_7], %8 {strides = array<i32>} : memref<7x32xf32, #tpu.memory_space<vmem>>, vector<7x32xf32>,
    %c0_i32_8 = arith.constant 0 : i32
    %10 = arith.cmpi eq, %arg2, %c0_i32_8 : i32
    %11 = arith.extui %10 : i1 to i32
    %c0_i32_9 = arith.constant 0 : i32
    %12 = arith.cmpi ne, %11, %c0_i32_9 : i32
    scf.if %12 {
      %c0_10 = arith.constant 0 : index
      %c0_11 = arith.constant 0 : index
      %13 = vector.load %arg6[%c0_10, %c0_11] : memref<7x32xf32, #tpu.memory_space<vmem>>, vector<7x32xf32>
      %c0_12 = arith.constant 0 : index
      %c0_13 = arith.constant 0 : index
      %14 = vector.load %arg5[%c0_12, %c0_13] : memref<7x32xf32, #tpu.memory_space<vmem>>, vector<7x32xf32>
      tpu.vector_store %arg5[%c0_12, %c0_13], %13 {strides = array<i32>} : memref<7x32xf32, #tpu.memory_space<vmem>>, vector<7x32xf32>,
    } else {
    }
    return
  }
  func.func @transform_0(%arg0: i32, %arg1: i32, %arg2: i32) -> (i32, i32) {
    %c0_i32 = arith.constant 0 : i32
    return %arg0, %arg2 : i32, i32
  }
  func.func @transform_1(%arg0: i32, %arg1: i32, %arg2: i32) -> (i32, i32) {
    %c0_i32 = arith.constant 0 : i32
    return %arg2, %arg1 : i32, i32
  }
  func.func @transform_2(%arg0: i32, %arg1: i32, %arg2: i32) -> (i32, i32) {
    %c0_i32 = arith.constant 0 : i32
    return %arg0, %arg1 : i32, i32
  }
}

module attributes {stable_mosaic.version = 11 : i64} {
  func.func @_pos_score_kernel(%arg0: i32, %arg1: i32, %arg2: memref<1x1x1x7x8xf32, #tpu.memory_space<vmem>>, %arg3: memref<1x7x8xf32, #tpu.memory_space<vmem>>, %arg4: memref<1x1x8xf32, #tpu.memory_space<vmem>>, %arg5: memref<1x1x7x7xf32, #tpu.memory_space<vmem>>) attributes {dimension_semantics = [#tpu.dimension_semantics<parallel>, #tpu.dimension_semantics<parallel>], iteration_bounds = array<i64: 2, 4>, scalar_prefetch = 0 : i64, scratch_operands = 0 : i64, tpu.core_type = #tpu.core_type<tc>, window_params = [{transform_indices = @transform_0, window_bounds = array<i64: 1, 1, 1, 7, 8>}, {transform_indices = @transform_1, window_bounds = array<i64: 1, 7, 8>}, {transform_indices = @transform_2, window_bounds = array<i64: 1, 1, 8>}, {transform_indices = @transform_3, window_bounds = array<i64: 1, 1, 7, 7>}]} {
    %c0 = arith.constant 0 : index
    %c0_0 = arith.constant 0 : index
    %c0_1 = arith.constant 0 : index
    %c0_2 = arith.constant 0 : index
    %c0_3 = arith.constant 0 : index
    %0 = vector.load %arg2[%c0, %c0_0, %c0_1, %c0_2, %c0_3] : memref<1x1x1x7x8xf32, #tpu.memory_space<vmem>>, vector<1x1x1x7x8xf32>
    %1 = vector.shape_cast %0 : vector<1x1x1x7x8xf32> to vector<7x8xf32>
    %c0_4 = arith.constant 0 : index
    %c0_5 = arith.constant 0 : index
    %c0_6 = arith.constant 0 : index
    %2 = vector.load %arg4[%c0_4, %c0_5, %c0_6] : memref<1x1x8xf32, #tpu.memory_space<vmem>>, vector<1x1x8xf32>
    %3 = vector.shape_cast %2 : vector<1x1x8xf32> to vector<1x8xf32>
    %4 = vector.broadcast %3 : vector<1x8xf32> to vector<7x8xf32>
    %5 = arith.addf %1, %4 : vector<7x8xf32>
    %6 = arith.truncf %5 : vector<7x8xf32> to vector<7x8xbf16>
    %c0_7 = arith.constant 0 : index
    %c0_8 = arith.constant 0 : index
    %c0_9 = arith.constant 0 : index
    %7 = vector.load %arg3[%c0_7, %c0_8, %c0_9] : memref<1x7x8xf32, #tpu.memory_space<vmem>>, vector<1x7x8xf32>
    %8 = vector.shape_cast %7 : vector<1x7x8xf32> to vector<7x8xf32>
    %9 = arith.truncf %8 : vector<7x8xf32> to vector<7x8xbf16>
    %cst = arith.constant dense<0.000000e+00> : vector<7x7xf32>
    %10 = tpu.matmul %6, %9, %cst {dimension_numbers = #tpu.dot_dimension_numbers<[1], [1], [0], [0], [0, 0, 1, 0], [], []>} : vector<7x8xbf16>, vector<7x8xbf16>, vector<7x7xf32> -> vector<7x7xf32>
    %c0_10 = arith.constant 0 : index
    %c0_11 = arith.constant 0 : index
    %c0_12 = arith.constant 0 : index
    %c0_13 = arith.constant 0 : index
    %11 = vector.load %arg5[%c0_10, %c0_11, %c0_12, %c0_13] : memref<1x1x7x7xf32, #tpu.memory_space<vmem>>, vector<1x1x7x7xf32>
    %12 = vector.shape_cast %11 : vector<1x1x7x7xf32> to vector<7x7xf32>
    %13 = vector.shape_cast %10 : vector<7x7xf32> to vector<1x1x7x7xf32>
    tpu.vector_store %arg5[%c0_10, %c0_11, %c0_12, %c0_13], %13 {strides = array<i32>} : memref<1x1x7x7xf32, #tpu.memory_space<vmem>>, vector<1x1x7x7xf32>,
    return
  }
  func.func @transform_0(%arg0: i32, %arg1: i32) -> (i32, i32, i32, i32, i32) {
    %c0_i32 = arith.constant 0 : i32
    %c0_i32_0 = arith.constant 0 : i32
    %c0_i32_1 = arith.constant 0 : i32
    %c0_i32_2 = arith.constant 0 : i32
    return %c0_i32, %arg0, %arg1, %c0_i32_0, %c0_i32_1 : i32, i32, i32, i32, i32
  }
  func.func @transform_1(%arg0: i32, %arg1: i32) -> (i32, i32, i32) {
    %c0_i32 = arith.constant 0 : i32
    %c0_i32_0 = arith.constant 0 : i32
    %c0_i32_1 = arith.constant 0 : i32
    return %arg1, %c0_i32, %c0_i32_0 : i32, i32, i32
  }
  func.func @transform_2(%arg0: i32, %arg1: i32) -> (i32, i32, i32) {
    %c0_i32 = arith.constant 0 : i32
    %c0_i32_0 = arith.constant 0 : i32
    %c0_i32_1 = arith.constant 0 : i32
    return %arg1, %c0_i32, %c0_i32_0 : i32, i32, i32
  }
  func.func @transform_3(%arg0: i32, %arg1: i32) -> (i32, i32, i32, i32) {
    %c0_i32 = arith.constant 0 : i32
    %c0_i32_0 = arith.constant 0 : i32
    %c0_i32_1 = arith.constant 0 : i32
    return %arg0, %arg1, %c0_i32, %c0_i32_0 : i32, i32, i32, i32
  }
}

module attributes {stable_mosaic.version = 11 : i64} {
  func.func @_attn_kernel(%arg0: i32, %arg1: i32, %arg2: memref<1x1x1x7x8xf32, #tpu.memory_space<vmem>>, %arg3: memref<1x1x1x7x8xf32, #tpu.memory_space<vmem>>, %arg4: memref<1x1x1x7x8xf32, #tpu.memory_space<vmem>>, %arg5: memref<1x1x7x7xf32, #tpu.memory_space<vmem>>, %arg6: memref<1x1x8xf32, #tpu.memory_space<vmem>>, %arg7: memref<1x1x7x8xf32, #tpu.memory_space<vmem>>) attributes {dimension_semantics = [#tpu.dimension_semantics<parallel>, #tpu.dimension_semantics<parallel>], iteration_bounds = array<i64: 2, 4>, scalar_prefetch = 0 : i64, scratch_operands = 0 : i64, tpu.core_type = #tpu.core_type<tc>, window_params = [{transform_indices = @transform_0, window_bounds = array<i64: 1, 1, 1, 7, 8>}, {transform_indices = @transform_1, window_bounds = array<i64: 1, 1, 1, 7, 8>}, {transform_indices = @transform_2, window_bounds = array<i64: 1, 1, 1, 7, 8>}, {transform_indices = @transform_3, window_bounds = array<i64: 1, 1, 7, 7>}, {transform_indices = @transform_4, window_bounds = array<i64: 1, 1, 8>}, {transform_indices = @transform_5, window_bounds = array<i64: 1, 1, 7, 8>}]} {
    %c0 = arith.constant 0 : index
    %c0_0 = arith.constant 0 : index
    %c0_1 = arith.constant 0 : index
    %c0_2 = arith.constant 0 : index
    %c0_3 = arith.constant 0 : index
    %0 = vector.load %arg2[%c0, %c0_0, %c0_1, %c0_2, %c0_3] : memref<1x1x1x7x8xf32, #tpu.memory_space<vmem>>, vector<1x1x1x7x8xf32>
    %1 = vector.shape_cast %0 : vector<1x1x1x7x8xf32> to vector<7x8xf32>
    %c0_4 = arith.constant 0 : index
    %c0_5 = arith.constant 0 : index
    %c0_6 = arith.constant 0 : index
    %c0_7 = arith.constant 0 : index
    %c0_8 = arith.constant 0 : index
    %2 = vector.load %arg3[%c0_4, %c0_5, %c0_6, %c0_7, %c0_8] : memref<1x1x1x7x8xf32, #tpu.memory_space<vmem>>, vector<1x1x1x7x8xf32>
    %3 = vector.shape_cast %2 : vector<1x1x1x7x8xf32> to vector<7x8xf32>
    %c0_9 = arith.constant 0 : index
    %c0_10 = arith.constant 0 : index
    %c0_11 = arith.constant 0 : index
    %c0_12 = arith.constant 0 : index
    %c0_13 = arith.constant 0 : index
    %4 = vector.load %arg4[%c0_9, %c0_10, %c0_11, %c0_12, %c0_13] : memref<1x1x1x7x8xf32, #tpu.memory_space<vmem>>, vector<1x1x1x7x8xf32>
    %5 = vector.shape_cast %4 : vector<1x1x1x7x8xf32> to vector<7x8xf32>
    %c0_14 = arith.constant 0 : index
    %c0_15 = arith.constant 0 : index
    %c0_16 = arith.constant 0 : index
    %6 = vector.load %arg6[%c0_14, %c0_15, %c0_16] : memref<1x1x8xf32, #tpu.memory_space<vmem>>, vector<1x1x8xf32>
    %7 = vector.shape_cast %6 : vector<1x1x8xf32> to vector<1x8xf32>
    %8 = vector.broadcast %7 : vector<1x8xf32> to vector<7x8xf32>
    %9 = arith.addf %1, %8 : vector<7x8xf32>
    %10 = arith.truncf %9 : vector<7x8xf32> to vector<7x8xbf16>
    %11 = arith.truncf %3 : vector<7x8xf32> to vector<7x8xbf16>
    %cst = arith.constant dense<0.000000e+00> : vector<7x7xf32>
    %12 = tpu.matmul %10, %11, %cst {dimension_numbers = #tpu.dot_dimension_numbers<[1], [1], [0], [0], [0, 0, 1, 0], [], []>} : vector<7x8xbf16>, vector<7x8xbf16>, vector<7x7xf32> -> vector<7x7xf32>
    %c0_17 = arith.constant 0 : index
    %c0_18 = arith.constant 0 : index
    %c0_19 = arith.constant 0 : index
    %c0_20 = arith.constant 0 : index
    %13 = vector.load %arg5[%c0_17, %c0_18, %c0_19, %c0_20] : memref<1x1x7x7xf32, #tpu.memory_space<vmem>>, vector<1x1x7x7xf32>
    %14 = vector.shape_cast %13 : vector<1x1x7x7xf32> to vector<7x7xf32>
    %15 = arith.addf %12, %14 : vector<7x7xf32>
    %cst_21 = arith.constant 0.176776692 : f32
    %16 = vector.broadcast %cst_21 : f32 to vector<7x7xf32>
    %17 = arith.mulf %15, %16 : vector<7x7xf32>
    %cst_22 = arith.constant dense<0xFF800000> : vector<7xf32>
    %18 = vector.multi_reduction <maximumf>, %17, %cst_22 [1] : vector<7x7xf32> to vector<7xf32>
    %19 = vector.shape_cast %18 : vector<7xf32> to vector<7x1xf32>
    %20 = vector.broadcast %19 : vector<7x1xf32> to vector<7x7xf32>
    %21 = arith.subf %17, %20 : vector<7x7xf32>
    %22 = math.exp %21 : vector<7x7xf32>
    %cst_23 = arith.constant dense<0.000000e+00> : vector<7xf32>
    %23 = vector.multi_reduction <add>, %22, %cst_23 [1] : vector<7x7xf32> to vector<7xf32>
    %24 = vector.shape_cast %23 : vector<7xf32> to vector<7x1xf32>
    %25 = tpu.reciprocal %24 {approx = true} : vector<7x1xf32> -> vector<7x1xf32>
    %26 = vector.broadcast %25 : vector<7x1xf32> to vector<7x7xf32>
    %27 = arith.mulf %22, %26 : vector<7x7xf32>
    %28 = arith.truncf %27 : vector<7x7xf32> to vector<7x7xbf16>
    %29 = arith.truncf %5 : vector<7x8xf32> to vector<7x8xbf16>
    %cst_24 = arith.constant dense<0.000000e+00> : vector<7x8xf32>
    %30 = tpu.matmul %28, %29, %cst_24 {dimension_numbers = #tpu.dot_dimension_numbers<[1], [0], [0], [1], [0, 0, 1, 1], [], []>} : vector<7x7xbf16>, vector<7x8xbf16>, vector<7x8xf32> -> vector<7x8xf32>
    %c0_25 = arith.constant 0 : index
    %c0_26 = arith.constant 0 : index
    %c0_27 = arith.constant 0 : index
    %c0_28 = arith.constant 0 : index
    %31 = vector.load %arg7[%c0_25, %c0_26, %c0_27, %c0_28] : memref<1x1x7x8xf32, #tpu.memory_space<vmem>>, vector<1x1x7x8xf32>
    %32 = vector.shape_cast %31 : vector<1x1x7x8xf32> to vector<7x8xf32>
    %33 = vector.shape_cast %30 : vector<7x8xf32> to vector<1x1x7x8xf32>
    tpu.vector_store %arg7[%c0_25, %c0_26, %c0_27, %c0_28], %33 {strides = array<i32>} : memref<1x1x7x8xf32, #tpu.memory_space<vmem>>, vector<1x1x7x8xf32>,
    return
  }
  func.func @transform_0(%arg0: i32, %arg1: i32) -> (i32, i32, i32, i32, i32) {
    %c0_i32 = arith.constant 0 : i32
    %c0_i32_0 = arith.constant 0 : i32
    %c0_i32_1 = arith.constant 0 : i32
    %c0_i32_2 = arith.constant 0 : i32
    return %c0_i32, %arg0, %arg1, %c0_i32_0, %c0_i32_1 : i32, i32, i32, i32, i32
  }
  func.func @transform_1(%arg0: i32, %arg1: i32) -> (i32, i32, i32, i32, i32) {
    %c1_i32 = arith.constant 1 : i32
    %c0_i32 = arith.constant 0 : i32
    %c0_i32_0 = arith.constant 0 : i32
    %c0_i32_1 = arith.constant 0 : i32
    return %c1_i32, %arg0, %arg1, %c0_i32, %c0_i32_0 : i32, i32, i32, i32, i32
  }
  func.func @transform_2(%arg0: i32, %arg1: i32) -> (i32, i32, i32, i32, i32) {
    %c2_i32 = arith.constant 2 : i32
    %c0_i32 = arith.constant 0 : i32
    %c0_i32_0 = arith.constant 0 : i32
    %c0_i32_1 = arith.constant 0 : i32
    return %c2_i32, %arg0, %arg1, %c0_i32, %c0_i32_0 : i32, i32, i32, i32, i32
  }
  func.func @transform_3(%arg0: i32, %arg1: i32) -> (i32, i32, i32, i32) {
    %c0_i32 = arith.constant 0 : i32
    %c0_i32_0 = arith.constant 0 : i32
    %c0_i32_1 = arith.constant 0 : i32
    return %arg0, %arg1, %c0_i32, %c0_i32_0 : i32, i32, i32, i32
  }
  func.func @transform_4(%arg0: i32, %arg1: i32) -> (i32, i32, i32) {
    %c0_i32 = arith.constant 0 : i32
    %c0_i32_0 = arith.constant 0 : i32
    %c0_i32_1 = arith.constant 0 : i32
    return %arg1, %c0_i32, %c0_i32_0 : i32, i32, i32
  }
  func.func @transform_5(%arg0: i32, %arg1: i32) -> (i32, i32, i32, i32) {
    %c0_i32 = arith.constant 0 : i32
    %c0_i32_0 = arith.constant 0 : i32
    %c0_i32_1 = arith.constant 0 : i32
    return %arg0, %arg1, %c0_i32, %c0_i32_0 : i32, i32, i32, i32
  }
}

module attributes {stable_mosaic.version = 11 : i64} {
  func.func @kernel(%arg0: i32, %arg1: i32, %arg2: i32, %arg3: memref<14x32xf32, #tpu.memory_space<vmem>>, %arg4: memref<32x64xbf16, #tpu.memory_space<vmem>>, %arg5: memref<1x64xf32, #tpu.memory_space<vmem>>, %arg6: memref<1x32xf32, #tpu.memory_space<vmem>>, %arg7: memref<1x32xf32, #tpu.memory_space<vmem>>, %arg8: memref<14x32xf32, #tpu.memory_space<vmem>>, %arg9: memref<14x64xf32, #tpu.memory_space<vmem>>) attributes {dimension_semantics = [#tpu.dimension_semantics<parallel>, #tpu.dimension_semantics<parallel>, #tpu.dimension_semantics<arbitrary>], iteration_bounds = array<i64: 1, 1, 1>, scalar_prefetch = 0 : i64, scratch_operands = 1 : i64, tpu.core_type = #tpu.core_type<tc>, window_params = [{transform_indices = @transform_0, window_bounds = array<i64: 14, 32>}, {transform_indices = @transform_1, window_bounds = array<i64: 32, 64>}, {transform_indices = @transform_2, window_bounds = array<i64: 1, 64>}, {pipeline_mode = #tpu.pipeline_mode<synchronous>, transform_indices = @transform_3, window_bounds = array<i64: 1, 32>}, {pipeline_mode = #tpu.pipeline_mode<synchronous>, transform_indices = @transform_4, window_bounds = array<i64: 1, 32>}, {transform_indices = @transform_5, window_bounds = array<i64: 14, 32>}]} {
    %c0_i32 = arith.constant 0 : i32
    %0 = arith.cmpi eq, %arg2, %c0_i32 : i32
    %1 = arith.extui %0 : i1 to i32
    %c0_i32_0 = arith.constant 0 : i32
    %2 = arith.cmpi ne, %1, %c0_i32_0 : i32
    scf.if %2 {
      %cst_19 = arith.constant 0.000000e+00 : f32
      %37 = vector.broadcast %cst_19 : f32 to vector<14x64xf32>
      %c0_20 = arith.constant 0 : index
      %c0_21 = arith.constant 0 : index
      %38 = vector.load %arg9[%c0_20, %c0_21] : memref<14x64xf32, #tpu.memory_space<vmem>>, vector<14x64xf32>
      tpu.vector_store %arg9[%c0_20, %c0_21], %37 {strides = array<i32>} : memref<14x64xf32, #tpu.memory_space<vmem>>, vector<14x64xf32>,
    } else {
    }
    %c0 = arith.constant 0 : index
    %c0_1 = arith.constant 0 : index
    %3 = vector.load %arg3[%c0, %c0_1] : memref<14x32xf32, #tpu.memory_space<vmem>>, vector<14x32xf32>
    %cst = arith.constant dense<0.000000e+00> : vector<14xf32>
    %4 = vector.multi_reduction <add>, %3, %cst [1] : vector<14x32xf32> to vector<14xf32>
    %5 = vector.shape_cast %4 : vector<14xf32> to vector<14x1xf32>
    %cst_2 = arith.constant 3.200000e+01 : f32
    %6 = vector.broadcast %cst_2 : f32 to vector<14x1xf32>
    %7 = arith.divf %5, %6 : vector<14x1xf32>
    %8 = vector.broadcast %7 : vector<14x1xf32> to vector<14x32xf32>
    %9 = arith.subf %3, %8 : vector<14x32xf32>
    %10 = arith.mulf %9, %9 : vector<14x32xf32>
    %cst_3 = arith.constant dense<0.000000e+00> : vector<14xf32>
    %11 = vector.multi_reduction <add>, %10, %cst_3 [1] : vector<14x32xf32> to vector<14xf32>
    %12 = vector.shape_cast %11 : vector<14xf32> to vector<14x1xf32>
    %cst_4 = arith.constant 3.200000e+01 : f32
    %13 = vector.broadcast %cst_4 : f32 to vector<14x1xf32>
    %14 = arith.divf %12, %13 : vector<14x1xf32>
    %15 = vector.broadcast %7 : vector<14x1xf32> to vector<14x32xf32>
    %16 = arith.subf %3, %15 : vector<14x32xf32>
    %cst_5 = arith.constant 9.99999974E-6 : f32
    %17 = vector.broadcast %cst_5 : f32 to vector<14x1xf32>
    %18 = arith.addf %14, %17 : vector<14x1xf32>
    %19 = math.rsqrt %18 : vector<14x1xf32>
    %20 = vector.broadcast %19 : vector<14x1xf32> to vector<14x32xf32>
    %21 = arith.mulf %16, %20 : vector<14x32xf32>
    %c0_6 = arith.constant 0 : index
    %c0_7 = arith.constant 0 : index
    %22 = vector.load %arg6[%c0_6, %c0_7] : memref<1x32xf32, #tpu.memory_space<vmem>>, vector<1x32xf32>
    %23 = vector.broadcast %22 : vector<1x32xf32> to vector<14x32xf32>
    %24 = arith.mulf %21, %23 : vector<14x32xf32>
    %c0_8 = arith.constant 0 : index
    %c0_9 = arith.constant 0 : index
    %25 = vector.load %arg7[%c0_8, %c0_9] : memref<1x32xf32, #tpu.memory_space<vmem>>, vector<1x32xf32>
    %26 = vector.broadcast %25 : vector<1x32xf32> to vector<14x32xf32>
    %27 = arith.addf %24, %26 : vector<14x32xf32>
    %c0_10 = arith.constant 0 : index
    %c0_11 = arith.constant 0 : index
    %28 = vector.load %arg9[%c0_10, %c0_11] : memref<14x64xf32, #tpu.memory_space<vmem>>, vector<14x64xf32>
    %29 = arith.truncf %27 : vector<14x32xf32> to vector<14x32xbf16>
    %c0_12 = arith.constant 0 : index
    %c0_13 = arith.constant 0 : index
    %30 = vector.load %arg4[%c0_12, %c0_13] : memref<32x64xbf16, #tpu.memory_space<vmem>>, vector<32x64xbf16>
    %cst_14 = arith.constant dense<0.000000e+00> : vector<14x64xf32>
    %31 = tpu.matmul %29, %30, %cst_14 {dimension_numbers = #tpu.dot_dimension_numbers<[1], [0], [0], [1], [0, 0, 1, 1], [], []>} : vector<14x32xbf16>, vector<32x64xbf16>, vector<14x64xf32> -> vector<14x64xf32>
    %32 = arith.addf %28, %31 : vector<14x64xf32>
    %c0_15 = arith.constant 0 : index
    %c0_16 = arith.constant 0 : index
    %33 = vector.load %arg9[%c0_15, %c0_16] : memref<14x64xf32, #tpu.memory_space<vmem>>, vector<14x64xf32>
    tpu.vector_store %arg9[%c0_15, %c0_16], %32 {strides = array<i32>} : memref<14x64xf32, #tpu.memory_space<vmem>>, vector<14x64xf32>,
    %c0_i32_17 = arith.constant 0 : i32
    %34 = arith.cmpi eq, %arg2, %c0_i32_17 : i32
    %35 = arith.extui %34 : i1 to i32
    %c0_i32_18 = arith.constant 0 : i32
    %36 = arith.cmpi ne, %35, %c0_i32_18 : i32
    scf.if %36 {
      %c0_19 = arith.constant 0 : index
      %c0_20 = arith.constant 0 : index
      %37 = vector.load %arg9[%c0_19, %c0_20] : memref<14x64xf32, #tpu.memory_space<vmem>>, vector<14x64xf32>
      %c0_21 = arith.constant 0 : index
      %c0_22 = arith.constant 0 : index
      %38 = vector.load %arg5[%c0_21, %c0_22] : memref<1x64xf32, #tpu.memory_space<vmem>>, vector<1x64xf32>
      %39 = vector.broadcast %38 : vector<1x64xf32> to vector<14x64xf32>
      %40 = arith.addf %37, %39 : vector<14x64xf32>
      %41 = vector.extract_strided_slice %40 {offsets = [0, 0], sizes = [14, 32], strides = [1, 1]} : vector<14x64xf32> to vector<14x32xf32>
      %42 = vector.extract_strided_slice %40 {offsets = [0, 32], sizes = [14, 32], strides = [1, 1]} : vector<14x64xf32> to vector<14x32xf32>
      %43 = arith.negf %42 : vector<14x32xf32>
      %44 = math.exp %43 : vector<14x32xf32>
      %cst_23 = arith.constant 1.000000e+00 : f32
      %45 = vector.broadcast %cst_23 : f32 to vector<14x32xf32>
      %46 = arith.addf %45, %44 : vector<14x32xf32>
      %47 = arith.divf %45, %46 : vector<14x32xf32>
      %48 = arith.mulf %41, %47 : vector<14x32xf32>
      %c0_24 = arith.constant 0 : index
      %c0_25 = arith.constant 0 : index
      %49 = vector.load %arg8[%c0_24, %c0_25] : memref<14x32xf32, #tpu.memory_space<vmem>>, vector<14x32xf32>
      tpu.vector_store %arg8[%c0_24, %c0_25], %48 {strides = array<i32>} : memref<14x32xf32, #tpu.memory_space<vmem>>, vector<14x32xf32>,
    } else {
    }
    return
  }
  func.func @transform_0(%arg0: i32, %arg1: i32, %arg2: i32) -> (i32, i32) {
    %c0_i32 = arith.constant 0 : i32
    return %arg0, %arg2 : i32, i32
  }
  func.func @transform_1(%arg0: i32, %arg1: i32, %arg2: i32) -> (i32, i32) {
    %c0_i32 = arith.constant 0 : i32
    return %arg2, %arg1 : i32, i32
  }
  func.func @transform_2(%arg0: i32, %arg1: i32, %arg2: i32) -> (i32, i32) {
    %c0_i32 = arith.constant 0 : i32
    %c0_i32_0 = arith.constant 0 : i32
    return %c0_i32, %arg1 : i32, i32
  }
  func.func @transform_3(%arg0: i32, %arg1: i32, %arg2: i32) -> (i32, i32) {
    %c0_i32 = arith.constant 0 : i32
    %c0_i32_0 = arith.constant 0 : i32
    %c0_i32_1 = arith.constant 0 : i32
    return %c0_i32, %c0_i32_0 : i32, i32
  }
  func.func @transform_4(%arg0: i32, %arg1: i32, %arg2: i32) -> (i32, i32) {
    %c0_i32 = arith.constant 0 : i32
    %c0_i32_0 = arith.constant 0 : i32
    %c0_i32_1 = arith.constant 0 : i32
    return %c0_i32, %c0_i32_0 : i32, i32
  }
  func.func @transform_5(%arg0: i32, %arg1: i32, %arg2: i32) -> (i32, i32) {
    %c0_i32 = arith.constant 0 : i32
    return %arg0, %arg1 : i32, i32
  }
}

module attributes {stable_mosaic.version = 11 : i64} {
  func.func @kernel(%arg0: i32, %arg1: i32, %arg2: i32, %arg3: memref<14x32xf32, #tpu.memory_space<vmem>>, %arg4: memref<32x32xbf16, #tpu.memory_space<vmem>>, %arg5: memref<1x32xf32, #tpu.memory_space<vmem>>, %arg6: memref<14x32xf32, #tpu.memory_space<vmem>>, %arg7: memref<14x32xf32, #tpu.memory_space<vmem>>, %arg8: memref<14x32xf32, #tpu.memory_space<vmem>>) attributes {dimension_semantics = [#tpu.dimension_semantics<parallel>, #tpu.dimension_semantics<parallel>, #tpu.dimension_semantics<arbitrary>], iteration_bounds = array<i64: 1, 1, 1>, scalar_prefetch = 0 : i64, scratch_operands = 1 : i64, tpu.core_type = #tpu.core_type<tc>, window_params = [{transform_indices = @transform_0, window_bounds = array<i64: 14, 32>}, {transform_indices = @transform_1, window_bounds = array<i64: 32, 32>}, {transform_indices = @transform_2, window_bounds = array<i64: 1, 32>}, {transform_indices = @transform_3, window_bounds = array<i64: 14, 32>}, {transform_indices = @transform_4, window_bounds = array<i64: 14, 32>}]} {
    %c0_i32 = arith.constant 0 : i32
    %0 = arith.cmpi eq, %arg2, %c0_i32 : i32
    %1 = arith.extui %0 : i1 to i32
    %c0_i32_0 = arith.constant 0 : i32
    %2 = arith.cmpi ne, %1, %c0_i32_0 : i32
    scf.if %2 {
      %cst_10 = arith.constant 0.000000e+00 : f32
      %13 = vector.broadcast %cst_10 : f32 to vector<14x32xf32>
      %c0_11 = arith.constant 0 : index
      %c0_12 = arith.constant 0 : index
      %14 = vector.load %arg8[%c0_11, %c0_12] : memref<14x32xf32, #tpu.memory_space<vmem>>, vector<14x32xf32>
      tpu.vector_store %arg8[%c0_11, %c0_12], %13 {strides = array<i32>} : memref<14x32xf32, #tpu.memory_space<vmem>>, vector<14x32xf32>,
    } else {
    }
    %c0 = arith.constant 0 : index
    %c0_1 = arith.constant 0 : index
    %3 = vector.load %arg3[%c0, %c0_1] : memref<14x32xf32, #tpu.memory_space<vmem>>, vector<14x32xf32>
    %c0_2 = arith.constant 0 : index
    %c0_3 = arith.constant 0 : index
    %4 = vector.load %arg8[%c0_2, %c0_3] : memref<14x32xf32, #tpu.memory_space<vmem>>, vector<14x32xf32>
    %5 = arith.truncf %3 : vector<14x32xf32> to vector<14x32xbf16>
    %c0_4 = arith.constant 0 : index
    %c0_5 = arith.constant 0 : index
    %6 = vector.load %arg4[%c0_4, %c0_5] : memref<32x32xbf16, #tpu.memory_space<vmem>>, vector<32x32xbf16>
    %cst = arith.constant dense<0.000000e+00> : vector<14x32xf32>
    %7 = tpu.matmul %5, %6, %cst {dimension_numbers = #tpu.dot_dimension_numbers<[1], [0], [0], [1], [0, 0, 1, 1], [], []>} : vector<14x32xbf16>, vector<32x32xbf16>, vector<14x32xf32> -> vector<14x32xf32>
    %8 = arith.addf %4, %7 : vector<14x32xf32>
    %c0_6 = arith.constant 0 : index
    %c0_7 = arith.constant 0 : index
    %9 = vector.load %arg8[%c0_6, %c0_7] : memref<14x32xf32, #tpu.memory_space<vmem>>, vector<14x32xf32>
    tpu.vector_store %arg8[%c0_6, %c0_7], %8 {strides = array<i32>} : memref<14x32xf32, #tpu.memory_space<vmem>>, vector<14x32xf32>,
    %c0_i32_8 = arith.constant 0 : i32
    %10 = arith.cmpi eq, %arg2, %c0_i32_8 : i32
    %11 = arith.extui %10 : i1 to i32
    %c0_i32_9 = arith.constant 0 : i32
    %12 = arith.cmpi ne, %11, %c0_i32_9 : i32
    scf.if %12 {
      %c0_10 = arith.constant 0 : index
      %c0_11 = arith.constant 0 : index
      %13 = vector.load %arg8[%c0_10, %c0_11] : memref<14x32xf32, #tpu.memory_space<vmem>>, vector<14x32xf32>
      %c0_12 = arith.constant 0 : index
      %c0_13 = arith.constant 0 : index
      %14 = vector.load %arg5[%c0_12, %c0_13] : memref<1x32xf32, #tpu.memory_space<vmem>>, vector<1x32xf32>
      %15 = vector.broadcast %14 : vector<1x32xf32> to vector<14x32xf32>
      %16 = arith.addf %13, %15 : vector<14x32xf32>
      %c0_14 = arith.constant 0 : index
      %c0_15 = arith.constant 0 : index
      %17 = vector.load %arg6[%c0_14, %c0_15] : memref<14x32xf32, #tpu.memory_space<vmem>>, vector<14x32xf32>
      %cst_16 = arith.constant 1.000000e+00 : f32
      %18 = vector.broadcast %cst_16 : f32 to vector<14x32xf32>
      %19 = arith.mulf %18, %16 : vector<14x32xf32>
      %20 = arith.addf %17, %19 : vector<14x32xf32>
      %c0_17 = arith.constant 0 : index
      %c0_18 = arith.constant 0 : index
      %21 = vector.load %arg7[%c0_17, %c0_18] : memref<14x32xf32, #tpu.memory_space<vmem>>, vector<14x32xf32>
      tpu.vector_store %arg7[%c0_17, %c0_18], %20 {strides = array<i32>} : memref<14x32xf32, #tpu.memory_space<vmem>>, vector<14x32xf32>,
    } else {
    }
    return
  }
  func.func @transform_0(%arg0: i32, %arg1: i32, %arg2: i32) -> (i32, i32) {
    %c0_i32 = arith.constant 0 : i32
    return %arg0, %arg2 : i32, i32
  }
  func.func @transform_1(%arg0: i32, %arg1: i32, %arg2: i32) -> (i32, i32) {
    %c0_i32 = arith.constant 0 : i32
    return %arg2, %arg1 : i32, i32
  }
  func.func @transform_2(%arg0: i32, %arg1: i32, %arg2: i32) -> (i32, i32) {
    %c0_i32 = arith.constant 0 : i32
    %c0_i32_0 = arith.constant 0 : i32
    return %c0_i32, %arg1 : i32, i32
  }
  func.func @transform_3(%arg0: i32, %arg1: i32, %arg2: i32) -> (i32, i32) {
    %c0_i32 = arith.constant 0 : i32
    return %arg0, %arg1 : i32, i32
  }
  func.func @transform_4(%arg0: i32, %arg1: i32, %arg2: i32) -> (i32, i32) {
    %c0_i32 = arith.constant 0 : i32
    return %arg0, %arg1 : i32, i32
  }
}

module attributes {stable_mosaic.version = 11 : i64} {
  func.func @_dwconv_kernel(%arg0: i32, %arg1: memref<1x16x32xf32, #tpu.memory_space<vmem>>, %arg2: memref<7x32xf32, #tpu.memory_space<vmem>>, %arg3: memref<1x32xf32, #tpu.memory_space<vmem>>, %arg4: memref<1x32xf32, #tpu.memory_space<vmem>>, %arg5: memref<1x7x32xf32, #tpu.memory_space<vmem>>) attributes {dimension_semantics = [#tpu.dimension_semantics<parallel>], iteration_bounds = array<i64: 2>, scalar_prefetch = 0 : i64, scratch_operands = 0 : i64, tpu.core_type = #tpu.core_type<tc>, window_params = [{transform_indices = @transform_0, window_bounds = array<i64: 1, 16, 32>}, {pipeline_mode = #tpu.pipeline_mode<synchronous>, transform_indices = @transform_1, window_bounds = array<i64: 7, 32>}, {pipeline_mode = #tpu.pipeline_mode<synchronous>, transform_indices = @transform_2, window_bounds = array<i64: 1, 32>}, {pipeline_mode = #tpu.pipeline_mode<synchronous>, transform_indices = @transform_3, window_bounds = array<i64: 1, 32>}, {transform_indices = @transform_4, window_bounds = array<i64: 1, 7, 32>}]} {
    %c0 = arith.constant 0 : index
    %c0_0 = arith.constant 0 : index
    %c0_1 = arith.constant 0 : index
    %0 = vector.load %arg1[%c0, %c0_0, %c0_1] : memref<1x16x32xf32, #tpu.memory_space<vmem>>, vector<1x16x32xf32>
    %1 = vector.shape_cast %0 : vector<1x16x32xf32> to vector<16x32xf32>
    %c0_2 = arith.constant 0 : index
    %c0_3 = arith.constant 0 : index
    %2 = vector.load %arg2[%c0_2, %c0_3] : memref<7x32xf32, #tpu.memory_space<vmem>>, vector<7x32xf32>
    %3 = vector.extract_strided_slice %1 {offsets = [0, 0], sizes = [7, 32], strides = [1, 1]} : vector<16x32xf32> to vector<7x32xf32>
    %4 = vector.extract_strided_slice %2 {offsets = [0, 0], sizes = [1, 32], strides = [1, 1]} : vector<7x32xf32> to vector<1x32xf32>
    %5 = vector.broadcast %4 : vector<1x32xf32> to vector<7x32xf32>
    %6 = arith.mulf %3, %5 : vector<7x32xf32>
    %7 = vector.extract_strided_slice %1 {offsets = [1, 0], sizes = [7, 32], strides = [1, 1]} : vector<16x32xf32> to vector<7x32xf32>
    %8 = vector.extract_strided_slice %2 {offsets = [1, 0], sizes = [1, 32], strides = [1, 1]} : vector<7x32xf32> to vector<1x32xf32>
    %9 = vector.broadcast %8 : vector<1x32xf32> to vector<7x32xf32>
    %10 = arith.mulf %7, %9 : vector<7x32xf32>
    %11 = arith.addf %6, %10 : vector<7x32xf32>
    %12 = vector.extract_strided_slice %1 {offsets = [2, 0], sizes = [7, 32], strides = [1, 1]} : vector<16x32xf32> to vector<7x32xf32>
    %13 = vector.extract_strided_slice %2 {offsets = [2, 0], sizes = [1, 32], strides = [1, 1]} : vector<7x32xf32> to vector<1x32xf32>
    %14 = vector.broadcast %13 : vector<1x32xf32> to vector<7x32xf32>
    %15 = arith.mulf %12, %14 : vector<7x32xf32>
    %16 = arith.addf %11, %15 : vector<7x32xf32>
    %17 = vector.extract_strided_slice %1 {offsets = [3, 0], sizes = [7, 32], strides = [1, 1]} : vector<16x32xf32> to vector<7x32xf32>
    %18 = vector.extract_strided_slice %2 {offsets = [3, 0], sizes = [1, 32], strides = [1, 1]} : vector<7x32xf32> to vector<1x32xf32>
    %19 = vector.broadcast %18 : vector<1x32xf32> to vector<7x32xf32>
    %20 = arith.mulf %17, %19 : vector<7x32xf32>
    %21 = arith.addf %16, %20 : vector<7x32xf32>
    %22 = vector.extract_strided_slice %1 {offsets = [4, 0], sizes = [7, 32], strides = [1, 1]} : vector<16x32xf32> to vector<7x32xf32>
    %23 = vector.extract_strided_slice %2 {offsets = [4, 0], sizes = [1, 32], strides = [1, 1]} : vector<7x32xf32> to vector<1x32xf32>
    %24 = vector.broadcast %23 : vector<1x32xf32> to vector<7x32xf32>
    %25 = arith.mulf %22, %24 : vector<7x32xf32>
    %26 = arith.addf %21, %25 : vector<7x32xf32>
    %27 = vector.extract_strided_slice %1 {offsets = [5, 0], sizes = [7, 32], strides = [1, 1]} : vector<16x32xf32> to vector<7x32xf32>
    %28 = vector.extract_strided_slice %2 {offsets = [5, 0], sizes = [1, 32], strides = [1, 1]} : vector<7x32xf32> to vector<1x32xf32>
    %29 = vector.broadcast %28 : vector<1x32xf32> to vector<7x32xf32>
    %30 = arith.mulf %27, %29 : vector<7x32xf32>
    %31 = arith.addf %26, %30 : vector<7x32xf32>
    %32 = vector.extract_strided_slice %1 {offsets = [6, 0], sizes = [7, 32], strides = [1, 1]} : vector<16x32xf32> to vector<7x32xf32>
    %33 = vector.extract_strided_slice %2 {offsets = [6, 0], sizes = [1, 32], strides = [1, 1]} : vector<7x32xf32> to vector<1x32xf32>
    %34 = vector.broadcast %33 : vector<1x32xf32> to vector<7x32xf32>
    %35 = arith.mulf %32, %34 : vector<7x32xf32>
    %36 = arith.addf %31, %35 : vector<7x32xf32>
    %c0_4 = arith.constant 0 : index
    %c0_5 = arith.constant 0 : index
    %37 = vector.load %arg3[%c0_4, %c0_5] : memref<1x32xf32, #tpu.memory_space<vmem>>, vector<1x32xf32>
    %38 = vector.broadcast %37 : vector<1x32xf32> to vector<7x32xf32>
    %39 = arith.mulf %36, %38 : vector<7x32xf32>
    %c0_6 = arith.constant 0 : index
    %c0_7 = arith.constant 0 : index
    %40 = vector.load %arg4[%c0_6, %c0_7] : memref<1x32xf32, #tpu.memory_space<vmem>>, vector<1x32xf32>
    %41 = vector.broadcast %40 : vector<1x32xf32> to vector<7x32xf32>
    %42 = arith.addf %39, %41 : vector<7x32xf32>
    %43 = arith.negf %42 : vector<7x32xf32>
    %44 = math.exp %43 : vector<7x32xf32>
    %cst = arith.constant 1.000000e+00 : f32
    %45 = vector.broadcast %cst : f32 to vector<7x32xf32>
    %46 = arith.addf %45, %44 : vector<7x32xf32>
    %47 = arith.divf %45, %46 : vector<7x32xf32>
    %48 = arith.mulf %42, %47 : vector<7x32xf32>
    %c0_8 = arith.constant 0 : index
    %c0_9 = arith.constant 0 : index
    %c0_10 = arith.constant 0 : index
    %49 = vector.load %arg5[%c0_8, %c0_9, %c0_10] : memref<1x7x32xf32, #tpu.memory_space<vmem>>, vector<1x7x32xf32>
    %50 = vector.shape_cast %49 : vector<1x7x32xf32> to vector<7x32xf32>
    %51 = vector.shape_cast %48 : vector<7x32xf32> to vector<1x7x32xf32>
    tpu.vector_store %arg5[%c0_8, %c0_9, %c0_10], %51 {strides = array<i32>} : memref<1x7x32xf32, #tpu.memory_space<vmem>>, vector<1x7x32xf32>,
    return
  }
  func.func @transform_0(%arg0: i32) -> (i32, i32, i32) {
    %c0_i32 = arith.constant 0 : i32
    %c0_i32_0 = arith.constant 0 : i32
    %c0_i32_1 = arith.constant 0 : i32
    return %arg0, %c0_i32, %c0_i32_0 : i32, i32, i32
  }
  func.func @transform_1(%arg0: i32) -> (i32, i32) {
    %c0_i32 = arith.constant 0 : i32
    %c0_i32_0 = arith.constant 0 : i32
    %c0_i32_1 = arith.constant 0 : i32
    return %c0_i32, %c0_i32_0 : i32, i32
  }
  func.func @transform_2(%arg0: i32) -> (i32, i32) {
    %c0_i32 = arith.constant 0 : i32
    %c0_i32_0 = arith.constant 0 : i32
    %c0_i32_1 = arith.constant 0 : i32
    return %c0_i32, %c0_i32_0 : i32, i32
  }
  func.func @transform_3(%arg0: i32) -> (i32, i32) {
    %c0_i32 = arith.constant 0 : i32
    %c0_i32_0 = arith.constant 0 : i32
    %c0_i32_1 = arith.constant 0 : i32
    return %c0_i32, %c0_i32_0 : i32, i32
  }
  func.func @transform_4(%arg0: i32) -> (i32, i32, i32) {
    %c0_i32 = arith.constant 0 : i32
    %c0_i32_0 = arith.constant 0 : i32
    %c0_i32_1 = arith.constant 0 : i32
    return %arg0, %c0_i32, %c0_i32_0 : i32, i32, i32
  }
}

module attributes {stable_mosaic.version = 11 : i64} {
  func.func @kernel(%arg0: i32, %arg1: i32, %arg2: i32, %arg3: memref<14x32xf32, #tpu.memory_space<vmem>>, %arg4: memref<32x128xbf16, #tpu.memory_space<vmem>>, %arg5: memref<1x128xf32, #tpu.memory_space<vmem>>, %arg6: memref<14x128xf32, #tpu.memory_space<vmem>>, %arg7: memref<14x128xf32, #tpu.memory_space<vmem>>) attributes {dimension_semantics = [#tpu.dimension_semantics<parallel>, #tpu.dimension_semantics<parallel>, #tpu.dimension_semantics<arbitrary>], iteration_bounds = array<i64: 1, 1, 1>, scalar_prefetch = 0 : i64, scratch_operands = 1 : i64, tpu.core_type = #tpu.core_type<tc>, window_params = [{transform_indices = @transform_0, window_bounds = array<i64: 14, 32>}, {transform_indices = @transform_1, window_bounds = array<i64: 32, 128>}, {transform_indices = @transform_2, window_bounds = array<i64: 1, 128>}, {transform_indices = @transform_3, window_bounds = array<i64: 14, 128>}]} {
    %c0_i32 = arith.constant 0 : i32
    %0 = arith.cmpi eq, %arg2, %c0_i32 : i32
    %1 = arith.extui %0 : i1 to i32
    %c0_i32_0 = arith.constant 0 : i32
    %2 = arith.cmpi ne, %1, %c0_i32_0 : i32
    scf.if %2 {
      %cst_10 = arith.constant 0.000000e+00 : f32
      %13 = vector.broadcast %cst_10 : f32 to vector<14x128xf32>
      %c0_11 = arith.constant 0 : index
      %c0_12 = arith.constant 0 : index
      %14 = vector.load %arg7[%c0_11, %c0_12] : memref<14x128xf32, #tpu.memory_space<vmem>>, vector<14x128xf32>
      tpu.vector_store %arg7[%c0_11, %c0_12], %13 {strides = array<i32>} : memref<14x128xf32, #tpu.memory_space<vmem>>, vector<14x128xf32>,
    } else {
    }
    %c0 = arith.constant 0 : index
    %c0_1 = arith.constant 0 : index
    %3 = vector.load %arg3[%c0, %c0_1] : memref<14x32xf32, #tpu.memory_space<vmem>>, vector<14x32xf32>
    %c0_2 = arith.constant 0 : index
    %c0_3 = arith.constant 0 : index
    %4 = vector.load %arg7[%c0_2, %c0_3] : memref<14x128xf32, #tpu.memory_space<vmem>>, vector<14x128xf32>
    %5 = arith.truncf %3 : vector<14x32xf32> to vector<14x32xbf16>
    %c0_4 = arith.constant 0 : index
    %c0_5 = arith.constant 0 : index
    %6 = vector.load %arg4[%c0_4, %c0_5] : memref<32x128xbf16, #tpu.memory_space<vmem>>, vector<32x128xbf16>
    %cst = arith.constant dense<0.000000e+00> : vector<14x128xf32>
    %7 = tpu.matmul %5, %6, %cst {dimension_numbers = #tpu.dot_dimension_numbers<[1], [0], [0], [1], [0, 0, 1, 1], [], []>} : vector<14x32xbf16>, vector<32x128xbf16>, vector<14x128xf32> -> vector<14x128xf32>
    %8 = arith.addf %4, %7 : vector<14x128xf32>
    %c0_6 = arith.constant 0 : index
    %c0_7 = arith.constant 0 : index
    %9 = vector.load %arg7[%c0_6, %c0_7] : memref<14x128xf32, #tpu.memory_space<vmem>>, vector<14x128xf32>
    tpu.vector_store %arg7[%c0_6, %c0_7], %8 {strides = array<i32>} : memref<14x128xf32, #tpu.memory_space<vmem>>, vector<14x128xf32>,
    %c0_i32_8 = arith.constant 0 : i32
    %10 = arith.cmpi eq, %arg2, %c0_i32_8 : i32
    %11 = arith.extui %10 : i1 to i32
    %c0_i32_9 = arith.constant 0 : i32
    %12 = arith.cmpi ne, %11, %c0_i32_9 : i32
    scf.if %12 {
      %c0_10 = arith.constant 0 : index
      %c0_11 = arith.constant 0 : index
      %13 = vector.load %arg7[%c0_10, %c0_11] : memref<14x128xf32, #tpu.memory_space<vmem>>, vector<14x128xf32>
      %c0_12 = arith.constant 0 : index
      %c0_13 = arith.constant 0 : index
      %14 = vector.load %arg5[%c0_12, %c0_13] : memref<1x128xf32, #tpu.memory_space<vmem>>, vector<1x128xf32>
      %15 = vector.broadcast %14 : vector<1x128xf32> to vector<14x128xf32>
      %16 = arith.addf %13, %15 : vector<14x128xf32>
      %c0_14 = arith.constant 0 : index
      %c0_15 = arith.constant 0 : index
      %17 = vector.load %arg6[%c0_14, %c0_15] : memref<14x128xf32, #tpu.memory_space<vmem>>, vector<14x128xf32>
      tpu.vector_store %arg6[%c0_14, %c0_15], %16 {strides = array<i32>} : memref<14x128xf32, #tpu.memory_space<vmem>>, vector<14x128xf32>,
    } else {
    }
    return
  }
  func.func @transform_0(%arg0: i32, %arg1: i32, %arg2: i32) -> (i32, i32) {
    %c0_i32 = arith.constant 0 : i32
    return %arg0, %arg2 : i32, i32
  }
  func.func @transform_1(%arg0: i32, %arg1: i32, %arg2: i32) -> (i32, i32) {
    %c0_i32 = arith.constant 0 : i32
    return %arg2, %arg1 : i32, i32
  }
  func.func @transform_2(%arg0: i32, %arg1: i32, %arg2: i32) -> (i32, i32) {
    %c0_i32 = arith.constant 0 : i32
    %c0_i32_0 = arith.constant 0 : i32
    return %c0_i32, %arg1 : i32, i32
  }
  func.func @transform_3(%arg0: i32, %arg1: i32, %arg2: i32) -> (i32, i32) {
    %c0_i32 = arith.constant 0 : i32
    return %arg0, %arg1 : i32, i32
  }
}

module attributes {stable_mosaic.version = 11 : i64} {
  func.func @kernel(%arg0: i32, %arg1: i32, %arg2: i32, %arg3: memref<14x128xf32, #tpu.memory_space<vmem>>, %arg4: memref<128x32xbf16, #tpu.memory_space<vmem>>, %arg5: memref<1x32xf32, #tpu.memory_space<vmem>>, %arg6: memref<14x32xf32, #tpu.memory_space<vmem>>, %arg7: memref<1x32xf32, #tpu.memory_space<vmem>>, %arg8: memref<1x32xf32, #tpu.memory_space<vmem>>, %arg9: memref<14x32xf32, #tpu.memory_space<vmem>>, %arg10: memref<14x32xf32, #tpu.memory_space<vmem>>) attributes {dimension_semantics = [#tpu.dimension_semantics<parallel>, #tpu.dimension_semantics<parallel>, #tpu.dimension_semantics<arbitrary>], iteration_bounds = array<i64: 1, 1, 1>, scalar_prefetch = 0 : i64, scratch_operands = 1 : i64, tpu.core_type = #tpu.core_type<tc>, window_params = [{transform_indices = @transform_0, window_bounds = array<i64: 14, 128>}, {transform_indices = @transform_1, window_bounds = array<i64: 128, 32>}, {transform_indices = @transform_2, window_bounds = array<i64: 1, 32>}, {transform_indices = @transform_3, window_bounds = array<i64: 14, 32>}, {pipeline_mode = #tpu.pipeline_mode<synchronous>, transform_indices = @transform_4, window_bounds = array<i64: 1, 32>}, {pipeline_mode = #tpu.pipeline_mode<synchronous>, transform_indices = @transform_5, window_bounds = array<i64: 1, 32>}, {transform_indices = @transform_6, window_bounds = array<i64: 14, 32>}]} {
    %c0_i32 = arith.constant 0 : i32
    %0 = arith.cmpi eq, %arg2, %c0_i32 : i32
    %1 = arith.extui %0 : i1 to i32
    %c0_i32_0 = arith.constant 0 : i32
    %2 = arith.cmpi ne, %1, %c0_i32_0 : i32
    scf.if %2 {
      %cst_10 = arith.constant 0.000000e+00 : f32
      %13 = vector.broadcast %cst_10 : f32 to vector<14x32xf32>
      %c0_11 = arith.constant 0 : index
      %c0_12 = arith.constant 0 : index
      %14 = vector.load %arg10[%c0_11, %c0_12] : memref<14x32xf32, #tpu.memory_space<vmem>>, vector<14x32xf32>
      tpu.vector_store %arg10[%c0_11, %c0_12], %13 {strides = array<i32>} : memref<14x32xf32, #tpu.memory_space<vmem>>, vector<14x32xf32>,
    } else {
    }
    %c0 = arith.constant 0 : index
    %c0_1 = arith.constant 0 : index
    %3 = vector.load %arg3[%c0, %c0_1] : memref<14x128xf32, #tpu.memory_space<vmem>>, vector<14x128xf32>
    %c0_2 = arith.constant 0 : index
    %c0_3 = arith.constant 0 : index
    %4 = vector.load %arg10[%c0_2, %c0_3] : memref<14x32xf32, #tpu.memory_space<vmem>>, vector<14x32xf32>
    %5 = arith.truncf %3 : vector<14x128xf32> to vector<14x128xbf16>
    %c0_4 = arith.constant 0 : index
    %c0_5 = arith.constant 0 : index
    %6 = vector.load %arg4[%c0_4, %c0_5] : memref<128x32xbf16, #tpu.memory_space<vmem>>, vector<128x32xbf16>
    %cst = arith.constant dense<0.000000e+00> : vector<14x32xf32>
    %7 = tpu.matmul %5, %6, %cst {dimension_numbers = #tpu.dot_dimension_numbers<[1], [0], [0], [1], [0, 0, 1, 1], [], []>} : vector<14x128xbf16>, vector<128x32xbf16>, vector<14x32xf32> -> vector<14x32xf32>
    %8 = arith.addf %4, %7 : vector<14x32xf32>
    %c0_6 = arith.constant 0 : index
    %c0_7 = arith.constant 0 : index
    %9 = vector.load %arg10[%c0_6, %c0_7] : memref<14x32xf32, #tpu.memory_space<vmem>>, vector<14x32xf32>
    tpu.vector_store %arg10[%c0_6, %c0_7], %8 {strides = array<i32>} : memref<14x32xf32, #tpu.memory_space<vmem>>, vector<14x32xf32>,
    %c0_i32_8 = arith.constant 0 : i32
    %10 = arith.cmpi eq, %arg2, %c0_i32_8 : i32
    %11 = arith.extui %10 : i1 to i32
    %c0_i32_9 = arith.constant 0 : i32
    %12 = arith.cmpi ne, %11, %c0_i32_9 : i32
    scf.if %12 {
      %c0_10 = arith.constant 0 : index
      %c0_11 = arith.constant 0 : index
      %13 = vector.load %arg10[%c0_10, %c0_11] : memref<14x32xf32, #tpu.memory_space<vmem>>, vector<14x32xf32>
      %c0_12 = arith.constant 0 : index
      %c0_13 = arith.constant 0 : index
      %14 = vector.load %arg5[%c0_12, %c0_13] : memref<1x32xf32, #tpu.memory_space<vmem>>, vector<1x32xf32>
      %15 = vector.broadcast %14 : vector<1x32xf32> to vector<14x32xf32>
      %16 = arith.addf %13, %15 : vector<14x32xf32>
      %c0_14 = arith.constant 0 : index
      %c0_15 = arith.constant 0 : index
      %17 = vector.load %arg6[%c0_14, %c0_15] : memref<14x32xf32, #tpu.memory_space<vmem>>, vector<14x32xf32>
      %cst_16 = arith.constant 5.000000e-01 : f32
      %18 = vector.broadcast %cst_16 : f32 to vector<14x32xf32>
      %19 = arith.mulf %18, %16 : vector<14x32xf32>
      %20 = arith.addf %17, %19 : vector<14x32xf32>
      %cst_17 = arith.constant dense<0.000000e+00> : vector<14xf32>
      %21 = vector.multi_reduction <add>, %20, %cst_17 [1] : vector<14x32xf32> to vector<14xf32>
      %22 = vector.shape_cast %21 : vector<14xf32> to vector<14x1xf32>
      %cst_18 = arith.constant 3.200000e+01 : f32
      %23 = vector.broadcast %cst_18 : f32 to vector<14x1xf32>
      %24 = arith.divf %22, %23 : vector<14x1xf32>
      %25 = vector.broadcast %24 : vector<14x1xf32> to vector<14x32xf32>
      %26 = arith.subf %20, %25 : vector<14x32xf32>
      %27 = arith.mulf %26, %26 : vector<14x32xf32>
      %cst_19 = arith.constant dense<0.000000e+00> : vector<14xf32>
      %28 = vector.multi_reduction <add>, %27, %cst_19 [1] : vector<14x32xf32> to vector<14xf32>
      %29 = vector.shape_cast %28 : vector<14xf32> to vector<14x1xf32>
      %cst_20 = arith.constant 3.200000e+01 : f32
      %30 = vector.broadcast %cst_20 : f32 to vector<14x1xf32>
      %31 = arith.divf %29, %30 : vector<14x1xf32>
      %32 = vector.broadcast %24 : vector<14x1xf32> to vector<14x32xf32>
      %33 = arith.subf %20, %32 : vector<14x32xf32>
      %cst_21 = arith.constant 9.99999974E-6 : f32
      %34 = vector.broadcast %cst_21 : f32 to vector<14x1xf32>
      %35 = arith.addf %31, %34 : vector<14x1xf32>
      %36 = math.rsqrt %35 : vector<14x1xf32>
      %37 = vector.broadcast %36 : vector<14x1xf32> to vector<14x32xf32>
      %38 = arith.mulf %33, %37 : vector<14x32xf32>
      %c0_22 = arith.constant 0 : index
      %c0_23 = arith.constant 0 : index
      %39 = vector.load %arg7[%c0_22, %c0_23] : memref<1x32xf32, #tpu.memory_space<vmem>>, vector<1x32xf32>
      %40 = vector.broadcast %39 : vector<1x32xf32> to vector<14x32xf32>
      %41 = arith.mulf %38, %40 : vector<14x32xf32>
      %c0_24 = arith.constant 0 : index
      %c0_25 = arith.constant 0 : index
      %42 = vector.load %arg8[%c0_24, %c0_25] : memref<1x32xf32, #tpu.memory_space<vmem>>, vector<1x32xf32>
      %43 = vector.broadcast %42 : vector<1x32xf32> to vector<14x32xf32>
      %44 = arith.addf %41, %43 : vector<14x32xf32>
      %c0_26 = arith.constant 0 : index
      %c0_27 = arith.constant 0 : index
      %45 = vector.load %arg9[%c0_26, %c0_27] : memref<14x32xf32, #tpu.memory_space<vmem>>, vector<14x32xf32>
      tpu.vector_store %arg9[%c0_26, %c0_27], %44 {strides = array<i32>} : memref<14x32xf32, #tpu.memory_space<vmem>>, vector<14x32xf32>,
    } else {
    }
    return
  }
  func.func @transform_0(%arg0: i32, %arg1: i32, %arg2: i32) -> (i32, i32) {
    %c0_i32 = arith.constant 0 : i32
    return %arg0, %arg2 : i32, i32
  }
  func.func @transform_1(%arg0: i32, %arg1: i32, %arg2: i32) -> (i32, i32) {
    %c0_i32 = arith.constant 0 : i32
    return %arg2, %arg1 : i32, i32
  }
  func.func @transform_2(%arg0: i32, %arg1: i32, %arg2: i32) -> (i32, i32) {
    %c0_i32 = arith.constant 0 : i32
    %c0_i32_0 = arith.constant 0 : i32
    return %c0_i32, %arg1 : i32, i32
  }
  func.func @transform_3(%arg0: i32, %arg1: i32, %arg2: i32) -> (i32, i32) {
    %c0_i32 = arith.constant 0 : i32
    return %arg0, %arg1 : i32, i32
  }
  func.func @transform_4(%arg0: i32, %arg1: i32, %arg2: i32) -> (i32, i32) {
    %c0_i32 = arith.constant 0 : i32
    %c0_i32_0 = arith.constant 0 : i32
    %c0_i32_1 = arith.constant 0 : i32
    return %c0_i32, %c0_i32_0 : i32, i32
  }
  func.func @transform_5(%arg0: i32, %arg1: i32, %arg2: i32) -> (i32, i32) {
    %c0_i32 = arith.constant 0 : i32
    %c0_i32_0 = arith.constant 0 : i32
    %c0_i32_1 = arith.constant 0 : i32
    return %c0_i32, %c0_i32_0 : i32, i32
  }
  func.func @transform_6(%arg0: i32, %arg1: i32, %arg2: i32) -> (i32, i32) {
    %c0_i32 = arith.constant 0 : i32
    return %arg0, %arg1 : i32, i32
  }
}

</mosaic_0001>

<llo_original>
// kernel: _lambda_.28
$region0: #{_lambda_.28}
  #allocation0 [shape = 'u32[]', space=smem, size = 0x4, offset = 0x4, fixed_abs, tag = 'smem constant byte address 0x4 - core index']
  #allocation1 [shape = 'u32[144,128]{1,0:T(1,128)}', space=vmem, size = 0x12000, scoped, tag = 'internal scratch']
  #allocation2 [shape = 'f32[210,32]{1,0:T(8,128)}', space=vmem, size = 0x1b000, scoped, tag = 'scratch operand']
  %s0 = inlined_call_operand.vmem [shape: f32[210,9], index: 0, kind: input, shape index: {}]
  %s1 = inlined_call_operand.vmem [shape: bf16[9,32], index: 1, kind: input, shape index: {}]
  %s2 = inlined_call_operand.vmem [shape: f32[1,32], index: 2, kind: input, shape index: {}]
  %s3 = inlined_call_operand.vmem [shape: f32[210,32], index: 3, kind: output, shape index: {}]
  %s4 = sld [smem:[#allocation0]]
  $region30: #{_lambda_.28} parent=0
    _
  %s6 = ssub.s32 1, %s4
  %s7 = scalar_select 0, %s6, %s4
  // Predicated region
  $region2: #{_lambda_.28} parent=0 // pred_check
    _
  $region3: #{_lambda_.28} parent=0 // pred_check_branch
    %9 = sbr.rel (0) target = $region5
  $region4: #{_lambda_.28} parent=0 // pred_region
    _
  $region5: #{_lambda_.28} parent=0 // pred_fallthru
    _
  // Predicated region
  $region6: #{_lambda_.28} parent=0 // pred_check
    _
  $region7: #{_lambda_.28} parent=0 // pred_check_branch
    %11 = sbr.rel (0) target = $region9
  $region8: #{_lambda_.28} parent=0 // pred_region
    _
  $region9: #{_lambda_.28} parent=0 // pred_fallthru
    _
  // Predicated region
  $region10: #{_lambda_.28} parent=0 // pred_check
    _
  $region11: #{_lambda_.28} parent=0 // pred_check_branch
    %13 = sbr.rel (0) target = $region13
  $region12: #{_lambda_.28} parent=0 // pred_region
    _
  $region13: #{_lambda_.28} parent=0 // pred_fallthru
    _
  %p15 = scmp.eq.s32.totalorder 0, 0
  // Predicated region
  $region14: #{_lambda_.28} parent=0 // pred_check
    %p16 = pneg %p15
  $region15: #{_lambda_.28} parent=0 // pred_check_branch
    %18 = sbr.rel (%p16) target = $region17
  $region16: #{_lambda_.28} parent=0 // pred_region
    %vm19 = vcmask 261120
    %20 = vst.msk [vmem:[#allocation2] sm:$0xff] %vm19, 0.0
    %21 = vst.msk [vmem:[#allocation2 + $0x8] sm:$0xff] %vm19, 0.0
    %22 = vst.msk [vmem:[#allocation2 + $0x10] sm:$0xff] %vm19, 0.0
    %23 = vst.msk [vmem:[#allocation2 + $0x18] sm:$0xff] %vm19, 0.0
    %24 = vst.msk [vmem:[#allocation2 + $0x20] sm:$0xff] %vm19, 0.0
    %25 = vst.msk [vmem:[#allocation2 + $0x28] sm:$0xff] %vm19, 0.0
    %26 = vst.msk [vmem:[#allocation2 + $0x30] sm:$0xff] %vm19, 0.0
    %27 = vst.msk [vmem:[#allocation2 + $0x38] sm:$0xff] %vm19, 0.0
    %28 = vst.msk [vmem:[#allocation2 + $0x40] sm:$0xff] %vm19, 0.0
    %29 = vst.msk [vmem:[#allocation2 + $0x48] sm:$0xff] %vm19, 0.0
    %30 = vst.msk [vmem:[#allocation2 + $0x50] sm:$0xff] %vm19, 0.0
    %31 = vst.msk [vmem:[#allocation2 + $0x58] sm:$0xff] %vm19, 0.0
    %32 = vst.msk [vmem:[#allocation2 + $0x60] sm:$0xff] %vm19, 0.0
    %33 = vst.msk [vmem:[#allocation2 + $0x68] sm:$0xff] %vm19, 0.0
    %34 = vst.msk [vmem:[#allocation2 + $0x70] sm:$0xff] %vm19, 0.0
    %35 = vst.msk [vmem:[#allocation2 + $0x78] sm:$0xff] %vm19, 0.0
    %36 = vst.msk [vmem:[#allocation2 + $0x80] sm:$0xff] %vm19, 0.0
    %37 = vst.msk [vmem:[#allocation2 + $0x88] sm:$0xff] %vm19, 0.0
    %38 = vst.msk [vmem:[#allocation2 + $0x90] sm:$0xff] %vm19, 0.0
    %39 = vst.msk [vmem:[#allocation2 + $0x98] sm:$0xff] %vm19, 0.0
    %40 = vst.msk [vmem:[#allocation2 + $0xa0] sm:$0xff] %vm19, 0.0
    %41 = vst.msk [vmem:[#allocation2 + $0xa8] sm:$0xff] %vm19, 0.0
    %42 = vst.msk [vmem:[#allocation2 + $0xb0] sm:$0xff] %vm19, 0.0
    %43 = vst.msk [vmem:[#allocation2 + $0xb8] sm:$0xff] %vm19, 0.0
    %44 = vst.msk [vmem:[#allocation2 + $0xc0] sm:$0xff] %vm19, 0.0
    %45 = vst.msk [vmem:[#allocation2 + $0xc8] sm:$0xff] %vm19, 0.0
    %vm46 = vcmask 254976
    %47 = vst.msk [vmem:[#allocation2 + $0xd0] sm:$0x3] %vm46, 0.0
  $region17: #{_lambda_.28} parent=0 // pred_fallthru
    _
  %v48 = vld [vmem:[%s0] sm:$0xff]
  %v49 = vld [vmem:[%s0 + $0x8] sm:$0xff]
  %v50 = vld [vmem:[%s0 + $0x10] sm:$0xff]
  %v51 = vld [vmem:[%s0 + $0x18] sm:$0xff]
  %v52 = vld [vmem:[%s0 + $0x20] sm:$0xff]
  %v53 = vld [vmem:[%s0 + $0x28] sm:$0xff]
  %v54 = vld [vmem:[%s0 + $0x30] sm:$0xff]
  %v55 = vld [vmem:[%s0 + $0x38] sm:$0xff]
  %v56 = vld [vmem:[%s0 + $0x40] sm:$0xff]
  %v57 = vld [vmem:[%s0 + $0x48] sm:$0xff]
  %v58 = vld [vmem:[%s0 + $0x50] sm:$0xff]
  %v59 = vld [vmem:[%s0 + $0x58] sm:$0xff]
  %v60 = vld [vmem:[%s0 + $0x60] sm:$0xff]
  %v61 = vld [vmem:[%s0 + $0x68] sm:$0xff]
  %v62 = vld [vmem:[%s0 + $0x70] sm:$0xff]
  %v63 = vld [vmem:[%s0 + $0x78] sm:$0xff]
  %v64 = vld [vmem:[%s0 + $0x80] sm:$0xff]
  %v65 = vld [vmem:[%s0 + $0x88] sm:$0xff]
  %v66 = vld [vmem:[%s0 + $0x90] sm:$0xff]
  %v67 = vld [vmem:[%s0 + $0x98] sm:$0xff]
  %v68 = vld [vmem:[%s0 + $0xa0] sm:$0xff]
  %v69 = vld [vmem:[%s0 + $0xa8] sm:$0xff]
  %v70 = vld [vmem:[%s0 + $0xb0] sm:$0xff]
  %v71 = vld [vmem:[%s0 + $0xb8] sm:$0xff]
  %v72 = vld [vmem:[%s0 + $0xc0] sm:$0xff]
  %v73 = vld [vmem:[%s0 + $0xc8] sm:$0xff]
  %v74 = vld [vmem:[%s0 + $0xd0] sm:$0x3]
  %v75 = vld [vmem:[#allocation2] sm:$0xff]
  %v76 = vld [vmem:[#allocation2 + $0x8] sm:$0xff]
  %v77 = vld [vmem:[#allocation2 + $0x10] sm:$0xff]
  %v78 = vld [vmem:[#allocation2 + $0x18] sm:$0xff]
  %v79 = vld [vmem:[#allocation2 + $0x20] sm:$0xff]
  %v80 = vld [vmem:[#allocation2 + $0x28] sm:$0xff]
  %v81 = vld [vmem:[#allocation2 + $0x30] sm:$0xff]
  %v82 = vld [vmem:[#allocation2 + $0x38] sm:$0xff]
  %v83 = vld [vmem:[#allocation2 + $0x40] sm:$0xff]
  %v84 = vld [vmem:[#allocation2 + $0x48] sm:$0xff]
  %v85 = vld [vmem:[#allocation2 + $0x50] sm:$0xff]
  %v86 = vld [vmem:[#allocation2 + $0x58] sm:$0xff]
  %v87 = vld [vmem:[#allocation2 + $0x60] sm:$0xff]
  %v88 = vld [vmem:[#allocation2 + $0x68] sm:$0xff]
  %v89 = vld [vmem:[#allocation2 + $0x70] sm:$0xff]
  %v90 = vld [vmem:[#allocation2 + $0x78] sm:$0xff]
  %v91 = vld [vmem:[#allocation2 + $0x80] sm:$0xff]
  %v92 = vld [vmem:[#allocation2 + $0x88] sm:$0xff]
  %v93 = vld [vmem:[#allocation2 + $0x90] sm:$0xff]
  %v94 = vld [vmem:[#allocation2 + $0x98] sm:$0xff]
  %v95 = vld [vmem:[#allocation2 + $0xa0] sm:$0xff]
  %v96 = vld [vmem:[#allocation2 + $0xa8] sm:$0xff]
  %v97 = vld [vmem:[#allocation2 + $0xb0] sm:$0xff]
  %v98 = vld [vmem:[#allocation2 + $0xb8] sm:$0xff]
  %v99 = vld [vmem:[#allocation2 + $0xc0] sm:$0xff]
  %v100 = vld [vmem:[#allocation2 + $0xc8] sm:$0xff]
  %v101 = vld [vmem:[#allocation2 + $0xd0] sm:$0x3]
  %v102 = vpack.c.bf16 %v49, %v48
  %v103 = vpack.c.bf16 %v51, %v50
  %v104 = vpack.c.bf16 %v53, %v52
  %v105 = vpack.c.bf16 %v55, %v54
  %v106 = vpack.c.bf16 %v57, %v56
  %v107 = vpack.c.bf16 %v59, %v58
  %v108 = vpack.c.bf16 %v61, %v60
  %v109 = vpack.c.bf16 %v63, %v62
  %v110 = vpack.c.bf16 %v65, %v64
  %v111 = vpack.c.bf16 %v67, %v66
  %v112 = vpack.c.bf16 %v69, %v68
  %v113 = vpack.c.bf16 %v71, %v70
  %v114 = vpack.c.bf16 %v73, %v72
  %v115 = vpack.c.bf16 %v74, %v74
  %v116 = vld [vmem:[%s1] sm:$0xf]
  %v117 = vld [vmem:[%s1 + $0x4] sm:$0x1]
  %v120 = vunpack.c.l.b16 %v116
  %v121 = vunpack.c.l.b16 %v117
  %v122 = vpack.c.b16 %v121, %v120
  %vm123 = vcmask 72704
  %v125 = vsel %vm123, %v102, 0
  %v128 = vsel %vm123, %v103, 0
  %v131 = vsel %vm123, %v104, 0
  %v134 = vsel %vm123, %v105, 0
  %v137 = vsel %vm123, %v106, 0
  %v140 = vsel %vm123, %v107, 0
  %v143 = vsel %vm123, %v108, 0
  %v146 = vsel %vm123, %v109, 0
  %v149 = vsel %vm123, %v110, 0
  %v152 = vsel %vm123, %v111, 0
  %v155 = vsel %vm123, %v112, 0
  %v158 = vsel %vm123, %v113, 0
  %v161 = vsel %vm123, %v114, 0
  %v164 = vsel %vm123, %v115, 0
  %vm166 = vcmask 1043456
  %vm167 = vcmask 1044480
  %v168 = vsel %vm166, 4294967295, 65535
  %v169 = vsel %vm167, %v168, 0
  %v171 = vand.u32 %v122, %v169
  %173 = vmatprep.subr.bf16.mxu0 0
  %174 = vmatpush1.bf16.msra.mxu0 0
  %175 = vmatprep.subr.bf16.mxu0 0
  %176 = vmatpush1.bf16.msra.mxu0 0
  %177 = vmatprep.subr.bf16.mxu0 0
  %178 = vmatpush1.bf16.msra.mxu0 0
  %179 = vmatprep.subr.bf16.mxu0 0
  %180 = vmatpush1.bf16.msra.mxu0 0
  %181 = vmatprep.subr.bf16.mxu0 0
  %182 = vmatpush1.bf16.msra.mxu0 0
  %183 = vmatprep.subr.bf16.mxu0 0
  %184 = vmatpush1.bf16.msra.mxu0 0
  %185 = vmatprep.subr.bf16.mxu0 0
  %186 = vmatpush1.bf16.msra.mxu0 0
  %187 = vmatprep.subr.bf16.mxu0 0
  %188 = vmatpush1.bf16.msra.mxu0 %v171
  %189 = vmatprep.subr.bf16.mxu0 0
  %190 = vmatpush2.bf16.msra.mxu0 0
  %191 = vmatprep.subr.bf16.mxu0 0
  %192 = vmatpush2.bf16.msra.mxu0 0
  %193 = vmatprep.subr.bf16.mxu0 0
  %194 = vmatpush2.bf16.msra.mxu0 0
  %195 = vmatprep.subr.bf16.mxu0 0
  %196 = vmatpush2.bf16.msra.mxu0 0
  %197 = vmatprep.subr.bf16.mxu0 0
  %198 = vmatpush2.bf16.msra.mxu0 0
  %199 = vmatprep.subr.bf16.mxu0 0
  %200 = vmatpush2.bf16.msra.mxu0 0
  %201 = vmatprep.subr.bf16.mxu0 0
  %202 = vmatpush2.bf16.msra.mxu0 0
  %203 = vmatprep.subr.bf16.mxu0 0
  %204 = vmatpush2.bf16.msra.mxu0 0
  %205 = vmatprep.mubr.bf16.mxu0 0
  %206 = vmatmul.mubr.bf16.gmra.mxu0 %v125
  %v207 = vpop.f32.mrf.mxu0
  %v208 = vadd.f32 0.0, %v207
  %v209 = vpop.f32.mrf.mxu0
  %v210 = vpop.f32.mrf.mxu0
  %v211 = vadd.f32 0.0, %v210
  %v212 = vpop.f32.mrf.mxu0
  %213 = vmatprep.mubr.bf16.mxu0 0
  %214 = vmatmul.mubr.bf16.gmra.mxu0 %v128
  %v215 = vpop.f32.mrf.mxu0
  %v216 = vadd.f32 0.0, %v215
  %v217 = vpop.f32.mrf.mxu0
  %v218 = vpop.f32.mrf.mxu0
  %v219 = vadd.f32 0.0, %v218
  %v220 = vpop.f32.mrf.mxu0
  %221 = vmatprep.mubr.bf16.mxu0 0
  %222 = vmatmul.mubr.bf16.gmra.mxu0 %v131
  %v223 = vpop.f32.mrf.mxu0
  %v224 = vadd.f32 0.0, %v223
  %v225 = vpop.f32.mrf.mxu0
  %v226 = vpop.f32.mrf.mxu0
  %v227 = vadd.f32 0.0, %v226
  %v228 = vpop.f32.mrf.mxu0
  %229 = vmatprep.mubr.bf16.mxu0 0
  %230 = vmatmul.mubr.bf16.gmra.mxu0 %v134
  %v231 = vpop.f32.mrf.mxu0
  %v232 = vadd.f32 0.0, %v231
  %v233 = vpop.f32.mrf.mxu0
  %v234 = vpop.f32.mrf.mxu0
  %v235 = vadd.f32 0.0, %v234
  %v236 = vpop.f32.mrf.mxu0
  %237 = vmatprep.mubr.bf16.mxu0 0
  %238 = vmatmul.mubr.bf16.gmra.mxu0 %v137
  %v239 = vpop.f32.mrf.mxu0
  %v240 = vadd.f32 0.0, %v239
  %v241 = vpop.f32.mrf.mxu0
  %v242 = vpop.f32.mrf.mxu0
  %v243 = vadd.f32 0.0, %v242
  %v244 = vpop.f32.mrf.mxu0
  %245 = vmatprep.mubr.bf16.mxu0 0
  %246 = vmatmul.mubr.bf16.gmra.mxu0 %v140
  %v247 = vpop.f32.mrf.mxu0
  %v248 = vadd.f32 0.0, %v247
  %v249 = vpop.f32.mrf.mxu0
  %v250 = vpop.f32.mrf.mxu0
  %v251 = vadd.f32 0.0, %v250
  %v252 = vpop.f32.mrf.mxu0
  %253 = vmatprep.mubr.bf16.mxu0 0
  %254 = vmatmul.mubr.bf16.gmra.mxu0 %v143
  %v255 = vpop.f32.mrf.mxu0
  %v256 = vadd.f32 0.0, %v255
  %v257 = vpop.f32.mrf.mxu0
  %v258 = vpop.f32.mrf.mxu0
  %v259 = vadd.f32 0.0, %v258
  %v260 = vpop.f32.mrf.mxu0
  %261 = vmatprep.mubr.bf16.mxu0 0
  %262 = vmatmul.mubr.bf16.gmra.mxu0 %v146
  %v263 = vpop.f32.mrf.mxu0
  %v264 = vadd.f32 0.0, %v263
  %v265 = vpop.f32.mrf.mxu0
  %v266 = vpop.f32.mrf.mxu0
  %v267 = vadd.f32 0.0, %v266
  %v268 = vpop.f32.mrf.mxu0
  %269 = vmatprep.mubr.bf16.mxu0 0
  %270 = vmatmul.mubr.bf16.gmra.mxu0 %v149
  %v271 = vpop.f32.mrf.mxu0
  %v272 = vadd.f32 0.0, %v271
  %v273 = vpop.f32.mrf.mxu0
  %v274 = vpop.f32.mrf.mxu0
  %v275 = vadd.f32 0.0, %v274
  %v276 = vpop.f32.mrf.mxu0
  %277 = vmatprep.mubr.bf16.mxu0 0
  %278 = vmatmul.mubr.bf16.gmra.mxu0 %v152
  %v279 = vpop.f32.mrf.mxu0
  %v280 = vadd.f32 0.0, %v279
  %v281 = vpop.f32.mrf.mxu0
  %v282 = vpop.f32.mrf.mxu0
  %v283 = vadd.f32 0.0, %v282
  %v284 = vpop.f32.mrf.mxu0
  %285 = vmatprep.mubr.bf16.mxu0 0
  %286 = vmatmul.mubr.bf16.gmra.mxu0 %v155
  %v287 = vpop.f32.mrf.mxu0
  %v288 = vadd.f32 0.0, %v287
  %v289 = vpop.f32.mrf.mxu0
  %v290 = vpop.f32.mrf.mxu0
  %v291 = vadd.f32 0.0, %v290
  %v292 = vpop.f32.mrf.mxu0
  %293 = vmatprep.mubr.bf16.mxu0 0
  %294 = vmatmul.mubr.bf16.gmra.mxu0 %v158
  %v295 = vpop.f32.mrf.mxu0
  %v296 = vadd.f32 0.0, %v295
  %v297 = vpop.f32.mrf.mxu0
  %v298 = vpop.f32.mrf.mxu0
  %v299 = vadd.f32 0.0, %v298
  %v300 = vpop.f32.mrf.mxu0
  %301 = vmatprep.mubr.bf16.mxu0 0
  %302 = vmatmul.mubr.bf16.gmra.mxu0 %v161
  %v303 = vpop.f32.mrf.mxu0
  %v304 = vadd.f32 0.0, %v303
  %v305 = vpop.f32.mrf.mxu0
  %v306 = vpop.f32.mrf.mxu0
  %v307 = vadd.f32 0.0, %v306
  %v308 = vpop.f32.mrf.mxu0
  %309 = vmatprep.mubr.bf16.mxu0 0
  %310 = vmatmul.mubr.bf16.gmra.mxu0 %v164
  %v311 = vpop.f32.mrf.mxu0
  %v312 = vadd.f32 0.0, %v311
  %v313 = vpop.f32.mrf.mxu0
  %v314 = vpop.f32.mrf.mxu0
  %v315 = vpop.f32.mrf.mxu0
  %316 = vdwg.mxu0
  %v317 = vadd.f32 %v75, %v208
  %v318 = vadd.f32 %v76, %v211
  %v319 = vadd.f32 %v77, %v216
  %v320 = vadd.f32 %v78, %v219
  %v321 = vadd.f32 %v79, %v224
  %v322 = vadd.f32 %v80, %v227
  %v323 = vadd.f32 %v81, %v232
  %v324 = vadd.f32 %v82, %v235
  %v325 = vadd.f32 %v83, %v240
  %v326 = vadd.f32 %v84, %v243
  %v327 = vadd.f32 %v85, %v248
  %v328 = vadd.f32 %v86, %v251
  %v329 = vadd.f32 %v87, %v256
  %v330 = vadd.f32 %v88, %v259
  %v331 = vadd.f32 %v89, %v264
  %v332 = vadd.f32 %v90, %v267
  %v333 = vadd.f32 %v91, %v272
  %v334 = vadd.f32 %v92, %v275
  %v335 = vadd.f32 %v93, %v280
  %v336 = vadd.f32 %v94, %v283
  %v337 = vadd.f32 %v95, %v288
  %v338 = vadd.f32 %v96, %v291
  %v339 = vadd.f32 %v97, %v296
  %v340 = vadd.f32 %v98, %v299
  %v341 = vadd.f32 %v99, %v304
  %v342 = vadd.f32 %v100, %v307
  %v343 = vadd.f32 %v101, %v312
  %vm344 = vcmask 261120
  %345 = vst.msk [vmem:[#allocation2] sm:$0xff] %vm344, %v317
  %346 = vst.msk [vmem:[#allocation2 + $0x8] sm:$0xff] %vm344, %v318
  %347 = vst.msk [vmem:[#allocation2 + $0x10] sm:$0xff] %vm344, %v319
  %348 = vst.msk [vmem:[#allocation2 + $0x18] sm:$0xff] %vm344, %v320
  %349 = vst.msk [vmem:[#allocation2 + $0x20] sm:$0xff] %vm344, %v321
  %350 = vst.msk [vmem:[#allocation2 + $0x28] sm:$0xff] %vm344, %v322
  %351 = vst.msk [vmem:[#allocation2 + $0x30] sm:$0xff] %vm344, %v323
  %352 = vst.msk [vmem:[#allocation2 + $0x38] sm:$0xff] %vm344, %v324
  %353 = vst.msk [vmem:[#allocation2 + $0x40] sm:$0xff] %vm344, %v325
  %354 = vst.msk [vmem:[#allocation2 + $0x48] sm:$0xff] %vm344, %v326
  %355 = vst.msk [vmem:[#allocation2 + $0x50] sm:$0xff] %vm344, %v327
  %356 = vst.msk [vmem:[#allocation2 + $0x58] sm:$0xff] %vm344, %v328
  %357 = vst.msk [vmem:[#allocation2 + $0x60] sm:$0xff] %vm344, %v329
  %358 = vst.msk [vmem:[#allocation2 + $0x68] sm:$0xff] %vm344, %v330
  %359 = vst.msk [vmem:[#allocation2 + $0x70] sm:$0xff] %vm344, %v331
  %360 = vst.msk [vmem:[#allocation2 + $0x78] sm:$0xff] %vm344, %v332
  %361 = vst.msk [vmem:[#allocation2 + $0x80] sm:$0xff] %vm344, %v333
  %362 = vst.msk [vmem:[#allocation2 + $0x88] sm:$0xff] %vm344, %v334
  %363 = vst.msk [vmem:[#allocation2 + $0x90] sm:$0xff] %vm344, %v335
  %364 = vst.msk [vmem:[#allocation2 + $0x98] sm:$0xff] %vm344, %v336
  %365 = vst.msk [vmem:[#allocation2 + $0xa0] sm:$0xff] %vm344, %v337
  %366 = vst.msk [vmem:[#allocation2 + $0xa8] sm:$0xff] %vm344, %v338
  %367 = vst.msk [vmem:[#allocation2 + $0xb0] sm:$0xff] %vm344, %v339
  %368 = vst.msk [vmem:[#allocation2 + $0xb8] sm:$0xff] %vm344, %v340
  %369 = vst.msk [vmem:[#allocation2 + $0xc0] sm:$0xff] %vm344, %v341
  %370 = vst.msk [vmem:[#allocation2 + $0xc8] sm:$0xff] %vm344, %v342
  %vm371 = vcmask 254976
  %372 = vst.msk [vmem:[#allocation2 + $0xd0] sm:$0x3] %vm371, %v343
  // Predicated region
  $region18: #{_lambda_.28} parent=0 // pred_check
    %p373 = pneg %p15
  $region19: #{_lambda_.28} parent=0 // pred_check_branch
    %375 = sbr.rel (%p373) target = $region21
  $region20: #{_lambda_.28} parent=0 // pred_region
    %v376 = vld [vmem:[#allocation2] sm:$0xff]
    %v377 = vld [vmem:[#allocation2 + $0x8] sm:$0xff]
    %v378 = vld [vmem:[#allocation2 + $0x10] sm:$0xff]
    %v379 = vld [vmem:[#allocation2 + $0x18] sm:$0xff]
    %v380 = vld [vmem:[#allocation2 + $0x20] sm:$0xff]
    %v381 = vld [vmem:[#allocation2 + $0x28] sm:$0xff]
    %v382 = vld [vmem:[#allocation2 + $0x30] sm:$0xff]
    %v383 = vld [vmem:[#allocation2 + $0x38] sm:$0xff]
    %v384 = vld [vmem:[#allocation2 + $0x40] sm:$0xff]
    %v385 = vld [vmem:[#allocation2 + $0x48] sm:$0xff]
    %v386 = vld [vmem:[#allocation2 + $0x50] sm:$0xff]
    %v387 = vld [vmem:[#allocation2 + $0x58] sm:$0xff]
    %v388 = vld [vmem:[#allocation2 + $0x60] sm:$0xff]
    %v389 = vld [vmem:[#allocation2 + $0x68] sm:$0xff]
    %v390 = vld [vmem:[#allocation2 + $0x70] sm:$0xff]
    %v391 = vld [vmem:[#allocation2 + $0x78] sm:$0xff]
    %v392 = vld [vmem:[#allocation2 + $0x80] sm:$0xff]
    %v393 = vld [vmem:[#allocation2 + $0x88] sm:$0xff]
    %v394 = vld [vmem:[#allocation2 + $0x90] sm:$0xff]
    %v395 = vld [vmem:[#allocation2 + $0x98] sm:$0xff]
    %v396 = vld [vmem:[#allocation2 + $0xa0] sm:$0xff]
    %v397 = vld [vmem:[#allocation2 + $0xa8] sm:$0xff]
    %v398 = vld [vmem:[#allocation2 + $0xb0] sm:$0xff]
    %v399 = vld [vmem:[#allocation2 + $0xb8] sm:$0xff]
    %v400 = vld [vmem:[#allocation2 + $0xc0] sm:$0xff]
    %v401 = vld [vmem:[#allocation2 + $0xc8] sm:$0xff]
    %v402 = vld [vmem:[#allocation2 + $0xd0] sm:$0x3]
    %v403 = vld [vmem:[%s2] sm:$0x1]
    %v405 = vlaneseq
    %v406 = vshrl.u32 %v405, 7
    %v407 = vsub.s32 0, %v406
    %v408 = vrot.slane %v403, %v407
    %v410 = vadd.f32 %v376, %v408
    %v411 = vadd.f32 %v377, %v408
    %v412 = vadd.f32 %v378, %v408
    %v413 = vadd.f32 %v379, %v408
    %v414 = vadd.f32 %v380, %v408
    %v415 = vadd.f32 %v381, %v408
    %v416 = vadd.f32 %v382, %v408
    %v417 = vadd.f32 %v383, %v408
    %v418 = vadd.f32 %v384, %v408
    %v419 = vadd.f32 %v385, %v408
    %v420 = vadd.f32 %v386, %v408
    %v421 = vadd.f32 %v387, %v408
    %v422 = vadd.f32 %v388, %v408
    %v423 = vadd.f32 %v389, %v408
    %v424 = vadd.f32 %v390, %v408
    %v425 = vadd.f32 %v391, %v408
    %v426 = vadd.f32 %v392, %v408
    %v427 = vadd.f32 %v393, %v408
    %v428 = vadd.f32 %v394, %v408
    %v429 = vadd.f32 %v395, %v408
    %v430 = vadd.f32 %v396, %v408
    %v431 = vadd.f32 %v397, %v408
    %v432 = vadd.f32 %v398, %v408
    %v433 = vadd.f32 %v399, %v408
    %v434 = vadd.f32 %v400, %v408
    %v435 = vadd.f32 %v401, %v408
    %v436 = vadd.f32 %v402, %v408
    %v437 = vmax.f32 %v410, 0.0
    %v438 = vmax.f32 %v411, 0.0
    %v439 = vmax.f32 %v412, 0.0
    %v440 = vmax.f32 %v413, 0.0
    %v441 = vmax.f32 %v414, 0.0
    %v442 = vmax.f32 %v415, 0.0
    %v443 = vmax.f32 %v416, 0.0
    %v444 = vmax.f32 %v417, 0.0
    %v445 = vmax.f32 %v418, 0.0
    %v446 = vmax.f32 %v419, 0.0
    %v447 = vmax.f32 %v420, 0.0
    %v448 = vmax.f32 %v421, 0.0
    %v449 = vmax.f32 %v422, 0.0
    %v450 = vmax.f32 %v423, 0.0
    %v451 = vmax.f32 %v424, 0.0
    %v452 = vmax.f32 %v425, 0.0
    %v453 = vmax.f32 %v426, 0.0
    %v454 = vmax.f32 %v427, 0.0
    %v455 = vmax.f32 %v428, 0.0
    %v456 = vmax.f32 %v429, 0.0
    %v457 = vmax.f32 %v430, 0.0
    %v458 = vmax.f32 %v431, 0.0
    %v459 = vmax.f32 %v432, 0.0
    %v460 = vmax.f32 %v433, 0.0
    %v461 = vmax.f32 %v434, 0.0
    %v462 = vmax.f32 %v435, 0.0
    %v463 = vmax.f32 %v436, 0.0
    %464 = vst.msk [vmem:[%s3] sm:$0xff] %vm344, %v437
    %465 = vst.msk [vmem:[%s3 + $0x8] sm:$0xff] %vm344, %v438
    %466 = vst.msk [vmem:[%s3 + $0x10] sm:$0xff] %vm344, %v439
    %467 = vst.msk [vmem:[%s3 + $0x18] sm:$0xff] %vm344, %v440
    %468 = vst.msk [vmem:[%s3 + $0x20] sm:$0xff] %vm344, %v441
    %469 = vst.msk [vmem:[%s3 + $0x28] sm:$0xff] %vm344, %v442
    %470 = vst.msk [vmem:[%s3 + $0x30] sm:$0xff] %vm344, %v443
    %471 = vst.msk [vmem:[%s3 + $0x38] sm:$0xff] %vm344, %v444
    %472 = vst.msk [vmem:[%s3 + $0x40] sm:$0xff] %vm344, %v445
    %473 = vst.msk [vmem:[%s3 + $0x48] sm:$0xff] %vm344, %v446
    %474 = vst.msk [vmem:[%s3 + $0x50] sm:$0xff] %vm344, %v447
    %475 = vst.msk [vmem:[%s3 + $0x58] sm:$0xff] %vm344, %v448
    %476 = vst.msk [vmem:[%s3 + $0x60] sm:$0xff] %vm344, %v449
    %477 = vst.msk [vmem:[%s3 + $0x68] sm:$0xff] %vm344, %v450
    %478 = vst.msk [vmem:[%s3 + $0x70] sm:$0xff] %vm344, %v451
    %479 = vst.msk [vmem:[%s3 + $0x78] sm:$0xff] %vm344, %v452
    %480 = vst.msk [vmem:[%s3 + $0x80] sm:$0xff] %vm344, %v453
    %481 = vst.msk [vmem:[%s3 + $0x88] sm:$0xff] %vm344, %v454
    %482 = vst.msk [vmem:[%s3 + $0x90] sm:$0xff] %vm344, %v455
    %483 = vst.msk [vmem:[%s3 + $0x98] sm:$0xff] %vm344, %v456
    %484 = vst.msk [vmem:[%s3 + $0xa0] sm:$0xff] %vm344, %v457
    %485 = vst.msk [vmem:[%s3 + $0xa8] sm:$0xff] %vm344, %v458
    %486 = vst.msk [vmem:[%s3 + $0xb0] sm:$0xff] %vm344, %v459
    %487 = vst.msk [vmem:[%s3 + $0xb8] sm:$0xff] %vm344, %v460
    %488 = vst.msk [vmem:[%s3 + $0xc0] sm:$0xff] %vm344, %v461
    %489 = vst.msk [vmem:[%s3 + $0xc8] sm:$0xff] %vm344, %v462
    %490 = vst.msk [vmem:[%s3 + $0xd0] sm:$0x3] %vm371, %v463
  $region21: #{_lambda_.28} parent=0 // pred_fallthru
    _
  // Predicated region
  $region22: #{_lambda_.28} parent=0 // pred_check
    _
  $region23: #{_lambda_.28} parent=0 // pred_check_branch
    %492 = sbr.rel (0) target = $region25
  $region24: #{_lambda_.28} parent=0 // pred_region
    _
  $region25: #{_lambda_.28} parent=0 // pred_fallthru
    _
  // Predicated region
  $region26: #{_lambda_.28} parent=0 // pred_check
    _
  $region27: #{_lambda_.28} parent=0 // pred_check_branch
    %494 = sbr.rel (0) target = $region29
  $region28: #{_lambda_.28} parent=0 // pred_region
    _
  $region29: #{_lambda_.28} parent=0 // pred_fallthru
    _

// kernel: _lambda_.30
$region0: #{_lambda_.30}
  #allocation0 [shape = 'u32[]', space=smem, size = 0x4, offset = 0x4, fixed_abs, tag = 'smem constant byte address 0x4 - core index']
  #allocation1 [shape = 'u32[144,128]{1,0:T(1,128)}', space=vmem, size = 0x12000, scoped, tag = 'internal scratch']
  #allocation2 [shape = 'f32[14,32]{1,0:T(8,128)}', space=vmem, size = 0x2000, scoped, tag = 'scratch operand']
  %s0 = inlined_call_operand.vmem [shape: f32[14,96], index: 0, kind: input, shape index: {}]
  %s1 = inlined_call_operand.vmem [shape: bf16[96,32], index: 1, kind: input, shape index: {}]
  %s2 = inlined_call_operand.vmem [shape: f32[1,32], index: 2, kind: input, shape index: {}]
  %s3 = inlined_call_operand.vmem [shape: f32[14,32], index: 3, kind: output, shape index: {}]
  %s4 = sld [smem:[#allocation0]]
  $region30: #{_lambda_.30} parent=0
    _
  %s6 = ssub.s32 1, %s4
  %s7 = scalar_select 0, %s6, %s4
  // Predicated region
  $region2: #{_lambda_.30} parent=0 // pred_check
    _
  $region3: #{_lambda_.30} parent=0 // pred_check_branch
    %9 = sbr.rel (0) target = $region5
  $region4: #{_lambda_.30} parent=0 // pred_region
    _
  $region5: #{_lambda_.30} parent=0 // pred_fallthru
    _
  // Predicated region
  $region6: #{_lambda_.30} parent=0 // pred_check
    _
  $region7: #{_lambda_.30} parent=0 // pred_check_branch
    %11 = sbr.rel (0) target = $region9
  $region8: #{_lambda_.30} parent=0 // pred_region
    _
  $region9: #{_lambda_.30} parent=0 // pred_fallthru
    _
  // Predicated region
  $region10: #{_lambda_.30} parent=0 // pred_check
    _
  $region11: #{_lambda_.30} parent=0 // pred_check_branch
    %13 = sbr.rel (0) target = $region13
  $region12: #{_lambda_.30} parent=0 // pred_region
    _
  $region13: #{_lambda_.30} parent=0 // pred_fallthru
    _
  %p15 = scmp.eq.s32.totalorder 0, 0
  // Predicated region
  $region14: #{_lambda_.30} parent=0 // pred_check
    %p16 = pneg %p15
  $region15: #{_lambda_.30} parent=0 // pred_check_branch
    %18 = sbr.rel (%p16) target = $region17
  $region16: #{_lambda_.30} parent=0 // pred_region
    %vm19 = vcmask 261120
    %20 = vst.msk [vmem:[#allocation2] sm:$0xff] %vm19, 0.0
    %vm21 = vcmask 259072
    %22 = vst.msk [vmem:[#allocation2 + $0x8] sm:$0x3f] %vm21, 0.0
  $region17: #{_lambda_.30} parent=0 // pred_fallthru
    _
  %v23 = vld [vmem:[%s0] sm:$0xff]
  %v24 = vld [vmem:[%s0 + $0x8] sm:$0x3f]
  %v25 = vld [vmem:[#allocation2] sm:$0xff]
  %v26 = vld [vmem:[#allocation2 + $0x8] sm:$0x3f]
  %v27 = vpack.c.bf16 %v24, %v23
  %v28 = vld [vmem:[%s1] sm:$0xf]
  %v29 = vld [vmem:[%s1 + $0x4] sm:$0xf]
  %v30 = vld [vmem:[%s1 + $0x8] sm:$0xf]
  %v31 = vld [vmem:[%s1 + $0xc] sm:$0xf]
  %v32 = vld [vmem:[%s1 + $0x10] sm:$0xf]
  %v33 = vld [vmem:[%s1 + $0x14] sm:$0xf]
  %v34 = vld [vmem:[%s1 + $0x18] sm:$0xf]
  %v35 = vld [vmem:[%s1 + $0x1c] sm:$0xf]
  %v36 = vld [vmem:[%s1 + $0x20] sm:$0xf]
  %v37 = vld [vmem:[%s1 + $0x24] sm:$0xf]
  %v38 = vld [vmem:[%s1 + $0x28] sm:$0xf]
  %v39 = vld [vmem:[%s1 + $0x2c] sm:$0xf]
  %v52 = vunpack.c.l.b16 %v28
  %v53 = vunpack.c.l.b16 %v29
  %v54 = vunpack.c.l.b16 %v30
  %v55 = vunpack.c.l.b16 %v31
  %v56 = vunpack.c.l.b16 %v32
  %v57 = vunpack.c.l.b16 %v33
  %v58 = vunpack.c.l.b16 %v34
  %v59 = vunpack.c.l.b16 %v35
  %v60 = vunpack.c.l.b16 %v36
  %v61 = vunpack.c.l.b16 %v37
  %v62 = vunpack.c.l.b16 %v38
  %v63 = vunpack.c.l.b16 %v39
  %v64 = vpack.c.b16 %v53, %v52
  %v65 = vpack.c.b16 %v55, %v54
  %v66 = vpack.c.b16 %v57, %v56
  %v67 = vpack.c.b16 %v59, %v58
  %v68 = vpack.c.b16 %v61, %v60
  %v69 = vpack.c.b16 %v63, %v62
  %vm76 = vcmask 785408
  %v78 = vsel %vm76, %v27, 0
  %80 = vmatprep.subr.bf16.mxu0 0
  %81 = vmatpush1.bf16.msra.mxu0 0
  %82 = vmatprep.subr.bf16.mxu0 0
  %83 = vmatpush1.bf16.msra.mxu0 0
  %84 = vmatprep.subr.bf16.mxu0 0
  %85 = vmatpush1.bf16.msra.mxu0 %v69
  %86 = vmatprep.subr.bf16.mxu0 0
  %87 = vmatpush1.bf16.msra.mxu0 %v68
  %88 = vmatprep.subr.bf16.mxu0 0
  %89 = vmatpush1.bf16.msra.mxu0 %v67
  %90 = vmatprep.subr.bf16.mxu0 0
  %91 = vmatpush1.bf16.msra.mxu0 %v66
  %92 = vmatprep.subr.bf16.mxu0 0
  %93 = vmatpush1.bf16.msra.mxu0 %v65
  %94 = vmatprep.subr.bf16.mxu0 0
  %95 = vmatpush1.bf16.msra.mxu0 %v64
  %96 = vmatprep.subr.bf16.mxu0 0
  %97 = vmatpush2.bf16.msra.mxu0 0
  %98 = vmatprep.subr.bf16.mxu0 0
  %99 = vmatpush2.bf16.msra.mxu0 0
  %100 = vmatprep.subr.bf16.mxu0 0
  %101 = vmatpush2.bf16.msra.mxu0 0
  %102 = vmatprep.subr.bf16.mxu0 0
  %103 = vmatpush2.bf16.msra.mxu0 0
  %104 = vmatprep.subr.bf16.mxu0 0
  %105 = vmatpush2.bf16.msra.mxu0 0
  %106 = vmatprep.subr.bf16.mxu0 0
  %107 = vmatpush2.bf16.msra.mxu0 0
  %108 = vmatprep.subr.bf16.mxu0 0
  %109 = vmatpush2.bf16.msra.mxu0 0
  %110 = vmatprep.subr.bf16.mxu0 0
  %111 = vmatpush2.bf16.msra.mxu0 0
  %112 = vmatprep.mubr.bf16.mxu0 0
  %113 = vmatmul.mubr.bf16.gmra.mxu0 %v78
  %v114 = vpop.f32.mrf.mxu0
  %v115 = vadd.f32 0.0, %v114
  %v116 = vpop.f32.mrf.mxu0
  %v117 = vpop.f32.mrf.mxu0
  %v118 = vadd.f32 0.0, %v117
  %v119 = vpop.f32.mrf.mxu0
  %120 = vdwg.mxu0
  %v121 = vadd.f32 %v25, %v115
  %v122 = vadd.f32 %v26, %v118
  %vm123 = vcmask 261120
  %124 = vst.msk [vmem:[#allocation2] sm:$0xff] %vm123, %v121
  %vm125 = vcmask 259072
  %126 = vst.msk [vmem:[#allocation2 + $0x8] sm:$0x3f] %vm125, %v122
  // Predicated region
  $region18: #{_lambda_.30} parent=0 // pred_check
    %p127 = pneg %p15
  $region19: #{_lambda_.30} parent=0 // pred_check_branch
    %129 = sbr.rel (%p127) target = $region21
  $region20: #{_lambda_.30} parent=0 // pred_region
    %v130 = vld [vmem:[#allocation2] sm:$0xff]
    %v131 = vld [vmem:[#allocation2 + $0x8] sm:$0x3f]
    %v132 = vld [vmem:[%s2] sm:$0x1]
    %v134 = vlaneseq
    %v135 = vshrl.u32 %v134, 7
    %v136 = vsub.s32 0, %v135
    %v137 = vrot.slane %v132, %v136
    %v139 = vadd.f32 %v130, %v137
    %v140 = vadd.f32 %v131, %v137
    %141 = vst.msk [vmem:[%s3] sm:$0xff] %vm123, %v139
    %142 = vst.msk [vmem:[%s3 + $0x8] sm:$0x3f] %vm125, %v140
  $region21: #{_lambda_.30} parent=0 // pred_fallthru
    _
  // Predicated region
  $region22: #{_lambda_.30} parent=0 // pred_check
    _
  $region23: #{_lambda_.30} parent=0 // pred_check_branch
    %144 = sbr.rel (0) target = $region25
  $region24: #{_lambda_.30} parent=0 // pred_region
    _
  $region25: #{_lambda_.30} parent=0 // pred_fallthru
    _
  // Predicated region
  $region26: #{_lambda_.30} parent=0 // pred_check
    _
  $region27: #{_lambda_.30} parent=0 // pred_check_branch
    %146 = sbr.rel (0) target = $region29
  $region28: #{_lambda_.30} parent=0 // pred_region
    _
  $region29: #{_lambda_.30} parent=0 // pred_fallthru
    _

// kernel: _lambda_.31
$region0: #{_lambda_.31}
  #allocation0 [shape = 'u32[]', space=smem, size = 0x4, offset = 0x4, fixed_abs, tag = 'smem constant byte address 0x4 - core index']
  #allocation1 [shape = 'u32[144,128]{1,0:T(1,128)}', space=vmem, size = 0x12000, scoped, tag = 'internal scratch']
  #allocation2 [shape = 'f32[14,128]{1,0:T(8,128)}', space=vmem, size = 0x2000, scoped, tag = 'scratch operand']
  %s0 = inlined_call_operand.vmem [shape: f32[14,32], index: 0, kind: input, shape index: {}]
  %s1 = inlined_call_operand.vmem [shape: bf16[32,128], index: 1, kind: input, shape index: {}]
  %s2 = inlined_call_operand.vmem [shape: f32[1,128], index: 2, kind: input, shape index: {}]
  %s3 = inlined_call_operand.vmem [shape: f32[1,32], index: 3, kind: input, shape index: {}]
  %s4 = inlined_call_operand.vmem [shape: f32[1,32], index: 4, kind: input, shape index: {}]
  %s5 = inlined_call_operand.vmem [shape: f32[14,128], index: 5, kind: output, shape index: {}]
  %s6 = sld [smem:[#allocation0]]
  $region38: #{_lambda_.31} parent=0
    _
  %s8 = ssub.s32 1, %s6
  %s9 = scalar_select 0, %s8, %s6
  // Predicated region
  $region2: #{_lambda_.31} parent=0 // pred_check
    _
  $region3: #{_lambda_.31} parent=0 // pred_check_branch
    %11 = sbr.rel (0) target = $region5
  $region4: #{_lambda_.31} parent=0 // pred_region
    _
  $region5: #{_lambda_.31} parent=0 // pred_fallthru
    _
  // Predicated region
  $region6: #{_lambda_.31} parent=0 // pred_check
    _
  $region7: #{_lambda_.31} parent=0 // pred_check_branch
    %13 = sbr.rel (0) target = $region9
  $region8: #{_lambda_.31} parent=0 // pred_region
    _
  $region9: #{_lambda_.31} parent=0 // pred_fallthru
    _
  // Predicated region
  $region10: #{_lambda_.31} parent=0 // pred_check
    _
  $region11: #{_lambda_.31} parent=0 // pred_check_branch
    %15 = sbr.rel (0) target = $region13
  $region12: #{_lambda_.31} parent=0 // pred_region
    _
  $region13: #{_lambda_.31} parent=0 // pred_fallthru
    _
  // Predicated region
  $region14: #{_lambda_.31} parent=0 // pred_check
    _
  $region15: #{_lambda_.31} parent=0 // pred_check_branch
    %17 = sbr.rel (0) target = $region17
  $region16: #{_lambda_.31} parent=0 // pred_region
    _
  $region17: #{_lambda_.31} parent=0 // pred_fallthru
    _
  // Predicated region
  $region18: #{_lambda_.31} parent=0 // pred_check
    _
  $region19: #{_lambda_.31} parent=0 // pred_check_branch
    %19 = sbr.rel (0) target = $region21
  $region20: #{_lambda_.31} parent=0 // pred_region
    _
  $region21: #{_lambda_.31} parent=0 // pred_fallthru
    _
  %p21 = scmp.eq.s32.totalorder 0, 0
  // Predicated region
  $region22: #{_lambda_.31} parent=0 // pred_check
    %p22 = pneg %p21
  $region23: #{_lambda_.31} parent=0 // pred_check_branch
    %24 = sbr.rel (%p22) target = $region25
  $region24: #{_lambda_.31} parent=0 // pred_region
    %25 = vst [vmem:[#allocation2] sm:$0xff] 0.0
    %26 = vst [vmem:[#allocation2 + $0x8] sm:$0x3f] 0.0
  $region25: #{_lambda_.31} parent=0 // pred_fallthru
    _
  %v27 = vld [vmem:[%s0] sm:$0xff]
  %v28 = vld [vmem:[%s0 + $0x8] sm:$0x3f]
  %vm29 = vcmask 261120
  %v30 = vsel %vm29, %v27, 0.0
  %31 = vadd.xlane.f32.xlu0 %v30
  %v32 = vpop.xlane.xlu0 %31
  %vm33 = vcmask 259072
  %v34 = vsel %vm33, %v28, 0.0
  %35 = vadd.xlane.f32.xlu0 %v34
  %v36 = vpop.xlane.xlu0 %35
  %v37 = vrcp.pop 32.0
  %v38 = vmul.f32 %v32, %v37
  %v39 = vmul.f32 %v36, %v37
  %v40 = vsub.f32 %v27, %v38
  %v41 = vsub.f32 %v28, %v39
  %v42 = vmul.f32 %v40, %v40
  %v43 = vmul.f32 %v41, %v41
  %v44 = vsel %vm29, %v42, 0.0
  %45 = vadd.xlane.f32.xlu0 %v44
  %v46 = vpop.xlane.xlu0 %45
  %v47 = vsel %vm33, %v43, 0.0
  %48 = vadd.xlane.f32.xlu0 %v47
  %v49 = vpop.xlane.xlu0 %48
  %v50 = vmul.f32 %v46, %v37
  %v51 = vmul.f32 %v49, %v37
  %v52 = vadd.f32 %v50, 1e-05
  %v53 = vadd.f32 %v51, 1e-05
  %v54 = vrsqrt.pop %v52
  %v55 = vrsqrt.pop %v53
  %v56 = vmul.f32 %v40, %v54
  %v57 = vmul.f32 %v41, %v55
  %v58 = vld [vmem:[%s3] sm:$0x1]
  %v60 = vlaneseq
  %v61 = vshrl.u32 %v60, 7
  %v62 = vsub.s32 0, %v61
  %v63 = vrot.slane %v58, %v62
  %v65 = vmul.f32 %v56, %v63
  %v66 = vmul.f32 %v57, %v63
  %v67 = vld [vmem:[%s4] sm:$0x1]
  %v69 = vlaneseq
  %v70 = vshrl.u32 %v69, 7
  %v71 = vsub.s32 0, %v70
  %v72 = vrot.slane %v67, %v71
  %v74 = vadd.f32 %v65, %v72
  %v75 = vadd.f32 %v66, %v72
  %v76 = vld [vmem:[#allocation2] sm:$0xff]
  %v77 = vld [vmem:[#allocation2 + $0x8] sm:$0x3f]
  %v78 = vpack.c.bf16 %v75, %v74
  %v79 = vld [vmem:[%s1] sm:$0xf]
  %v80 = vld [vmem:[%s1 + $0x4] sm:$0xf]
  %v81 = vld [vmem:[%s1 + $0x8] sm:$0xf]
  %v82 = vld [vmem:[%s1 + $0xc] sm:$0xf]
  %v87 = vunpack.c.l.b16 %v79
  %v88 = vunpack.c.l.b16 %v80
  %v89 = vunpack.c.l.b16 %v81
  %v90 = vunpack.c.l.b16 %v82
  %v91 = vpack.c.b16 %v88, %v87
  %v92 = vpack.c.b16 %v90, %v89
  %v96 = vsel %vm29, %v78, 0
  %98 = vmatprep.subr.bf16.mxu0 0
  %99 = vmatpush1.bf16.msra.mxu0 0
  %100 = vmatprep.subr.bf16.mxu0 0
  %101 = vmatpush1.bf16.msra.mxu0 0
  %102 = vmatprep.subr.bf16.mxu0 0
  %103 = vmatpush1.bf16.msra.mxu0 0
  %104 = vmatprep.subr.bf16.mxu0 0
  %105 = vmatpush1.bf16.msra.mxu0 0
  %106 = vmatprep.subr.bf16.mxu0 0
  %107 = vmatpush1.bf16.msra.mxu0 0
  %108 = vmatprep.subr.bf16.mxu0 0
  %109 = vmatpush1.bf16.msra.mxu0 0
  %110 = vmatprep.subr.bf16.mxu0 0
  %111 = vmatpush1.bf16.msra.mxu0 %v92
  %112 = vmatprep.subr.bf16.mxu0 0
  %113 = vmatpush1.bf16.msra.mxu0 %v91
  %114 = vmatprep.subr.bf16.mxu0 0
  %115 = vmatpush2.bf16.msra.mxu0 0
  %116 = vmatprep.subr.bf16.mxu0 0
  %117 = vmatpush2.bf16.msra.mxu0 0
  %118 = vmatprep.subr.bf16.mxu0 0
  %119 = vmatpush2.bf16.msra.mxu0 0
  %120 = vmatprep.subr.bf16.mxu0 0
  %121 = vmatpush2.bf16.msra.mxu0 0
  %122 = vmatprep.subr.bf16.mxu0 0
  %123 = vmatpush2.bf16.msra.mxu0 0
  %124 = vmatprep.subr.bf16.mxu0 0
  %125 = vmatpush2.bf16.msra.mxu0 0
  %126 = vmatprep.subr.bf16.mxu0 0
  %127 = vmatpush2.bf16.msra.mxu0 0
  %128 = vmatprep.subr.bf16.mxu0 0
  %129 = vmatpush2.bf16.msra.mxu0 0
  %130 = vmatprep.mubr.bf16.mxu0 0
  %131 = vmatmul.mubr.bf16.gmra.mxu0 %v96
  %v132 = vpop.f32.mrf.mxu0
  %v133 = vadd.f32 0.0, %v132
  %v134 = vpop.f32.mrf.mxu0
  %v135 = vpop.f32.mrf.mxu0
  %v136 = vadd.f32 0.0, %v135
  %v137 = vpop.f32.mrf.mxu0
  %138 = vdwg.mxu0
  %v139 = vadd.f32 %v76, %v133
  %v140 = vadd.f32 %v77, %v136
  %141 = vst [vmem:[#allocation2] sm:$0xff] %v139
  %142 = vst [vmem:[#allocation2 + $0x8] sm:$0x3f] %v140
  // Predicated region
  $region26: #{_lambda_.31} parent=0 // pred_check
    %p143 = pneg %p21
  $region27: #{_lambda_.31} parent=0 // pred_check_branch
    %145 = sbr.rel (%p143) target = $region29
  $region28: #{_lambda_.31} parent=0 // pred_region
    %v146 = vld [vmem:[#allocation2] sm:$0xff]
    %v147 = vld [vmem:[#allocation2 + $0x8] sm:$0x3f]
    %v148 = vld [vmem:[%s2] sm:$0x1]
    %v150 = vlaneseq
    %v151 = vshrl.u32 %v150, 7
    %v152 = vsub.s32 0, %v151
    %v153 = vrot.slane %v148, %v152
    %v155 = vadd.f32 %v146, %v153
    %v156 = vadd.f32 %v147, %v153
    %v157 = vxor.u32 %v155, 2147483648
    %v158 = vxor.u32 %v156, 2147483648
    %v159 = vmul.f32 %v157, 1.442695
    %v160 = vpow.pop %v159
    %v161 = vmul.f32 %v158, 1.442695
    %v162 = vpow.pop %v161
    %v163 = vadd.f32 %v160, 1.0
    %v164 = vadd.f32 %v162, 1.0
    %v165 = vrcp.pop %v163
    %v166 = vmul.f32 1.0, %v165
    %v167 = vrcp.pop %v164
    %v168 = vmul.f32 1.0, %v167
    %v169 = vmul.f32 %v155, %v166
    %v170 = vmul.f32 %v156, %v168
    %171 = vst [vmem:[%s5] sm:$0xff] %v169
    %172 = vst [vmem:[%s5 + $0x8] sm:$0x3f] %v170
  $region29: #{_lambda_.31} parent=0 // pred_fallthru
    _
  // Predicated region
  $region30: #{_lambda_.31} parent=0 // pred_check
    _
  $region31: #{_lambda_.31} parent=0 // pred_check_branch
    %174 = sbr.rel (0) target = $region33
  $region32: #{_lambda_.31} parent=0 // pred_region
    _
  $region33: #{_lambda_.31} parent=0 // pred_fallthru
    _
  // Predicated region
  $region34: #{_lambda_.31} parent=0 // pred_check
    _
  $region35: #{_lambda_.31} parent=0 // pred_check_branch
    %176 = sbr.rel (0) target = $region37
  $region36: #{_lambda_.31} parent=0 // pred_region
    _
  $region37: #{_lambda_.31} parent=0 // pred_fallthru
    _

// kernel: _lambda_.29
$region0: #{_lambda_.29}
  #allocation0 [shape = 'u32[]', space=smem, size = 0x4, offset = 0x4, fixed_abs, tag = 'smem constant byte address 0x4 - core index']
  #allocation1 [shape = 'u32[144,128]{1,0:T(1,128)}', space=vmem, size = 0x12000, scoped, tag = 'internal scratch']
  #allocation2 [shape = 'f32[42,32]{1,0:T(8,128)}', space=vmem, size = 0x6000, scoped, tag = 'scratch operand']
  %s0 = inlined_call_operand.vmem [shape: f32[42,288], index: 0, kind: input, shape index: {}]
  %s1 = inlined_call_operand.vmem [shape: bf16[288,32], index: 1, kind: input, shape index: {}]
  %s2 = inlined_call_operand.vmem [shape: f32[1,32], index: 2, kind: input, shape index: {}]
  %s3 = inlined_call_operand.vmem [shape: f32[42,32], index: 3, kind: output, shape index: {}]
  %s4 = sld [smem:[#allocation0]]
  $region30: #{_lambda_.29} parent=0
    _
  %s6 = ssub.s32 1, %s4
  %s7 = scalar_select 0, %s6, %s4
  // Predicated region
  $region2: #{_lambda_.29} parent=0 // pred_check
    _
  $region3: #{_lambda_.29} parent=0 // pred_check_branch
    %9 = sbr.rel (0) target = $region5
  $region4: #{_lambda_.29} parent=0 // pred_region
    _
  $region5: #{_lambda_.29} parent=0 // pred_fallthru
    _
  // Predicated region
  $region6: #{_lambda_.29} parent=0 // pred_check
    _
  $region7: #{_lambda_.29} parent=0 // pred_check_branch
    %11 = sbr.rel (0) target = $region9
  $region8: #{_lambda_.29} parent=0 // pred_region
    _
  $region9: #{_lambda_.29} parent=0 // pred_fallthru
    _
  // Predicated region
  $region10: #{_lambda_.29} parent=0 // pred_check
    _
  $region11: #{_lambda_.29} parent=0 // pred_check_branch
    %13 = sbr.rel (0) target = $region13
  $region12: #{_lambda_.29} parent=0 // pred_region
    _
  $region13: #{_lambda_.29} parent=0 // pred_fallthru
    _
  %p15 = scmp.eq.s32.totalorder 0, 0
  // Predicated region
  $region14: #{_lambda_.29} parent=0 // pred_check
    %p16 = pneg %p15
  $region15: #{_lambda_.29} parent=0 // pred_check_branch
    %18 = sbr.rel (%p16) target = $region17
  $region16: #{_lambda_.29} parent=0 // pred_region
    %vm19 = vcmask 261120
    %20 = vst.msk [vmem:[#allocation2] sm:$0xff] %vm19, 0.0
    %21 = vst.msk [vmem:[#allocation2 + $0x8] sm:$0xff] %vm19, 0.0
    %22 = vst.msk [vmem:[#allocation2 + $0x10] sm:$0xff] %vm19, 0.0
    %23 = vst.msk [vmem:[#allocation2 + $0x18] sm:$0xff] %vm19, 0.0
    %24 = vst.msk [vmem:[#allocation2 + $0x20] sm:$0xff] %vm19, 0.0
    %vm25 = vcmask 254976
    %26 = vst.msk [vmem:[#allocation2 + $0x28] sm:$0x3] %vm25, 0.0
  $region17: #{_lambda_.29} parent=0 // pred_fallthru
    _
  %v27 = vld [vmem:[%s0] sm:$0xff]
  %v28 = vld [vmem:[%s0 + $0x8] sm:$0xff]
  %v29 = vld [vmem:[%s0 + $0x10] sm:$0xff]
  %v30 = vld [vmem:[%s0 + $0x18] sm:$0xff]
  %v31 = vld [vmem:[%s0 + $0x20] sm:$0xff]
  %v32 = vld [vmem:[%s0 + $0x28] sm:$0xff]
  %v33 = vld [vmem:[%s0 + $0x30] sm:$0xff]
  %v34 = vld [vmem:[%s0 + $0x38] sm:$0xff]
  %v35 = vld [vmem:[%s0 + $0x40] sm:$0xff]
  %v36 = vld [vmem:[%s0 + $0x48] sm:$0xff]
  %v37 = vld [vmem:[%s0 + $0x50] sm:$0xff]
  %v38 = vld [vmem:[%s0 + $0x58] sm:$0xff]
  %v39 = vld [vmem:[%s0 + $0x60] sm:$0xff]
  %v40 = vld [vmem:[%s0 + $0x68] sm:$0xff]
  %v41 = vld [vmem:[%s0 + $0x70] sm:$0xff]
  %v42 = vld [vmem:[%s0 + $0x78] sm:$0x3]
  %v43 = vld [vmem:[%s0 + $0x80] sm:$0x3]
  %v44 = vld [vmem:[%s0 + $0x88] sm:$0x3]
  %v45 = vld [vmem:[#allocation2] sm:$0xff]
  %v46 = vld [vmem:[#allocation2 + $0x8] sm:$0xff]
  %v47 = vld [vmem:[#allocation2 + $0x10] sm:$0xff]
  %v48 = vld [vmem:[#allocation2 + $0x18] sm:$0xff]
  %v49 = vld [vmem:[#allocation2 + $0x20] sm:$0xff]
  %v50 = vld [vmem:[#allocation2 + $0x28] sm:$0x3]
  %v51 = vpack.c.bf16 %v30, %v27
  %v52 = vpack.c.bf16 %v31, %v28
  %v53 = vpack.c.bf16 %v32, %v29
  %v54 = vpack.c.bf16 %v36, %v33
  %v55 = vpack.c.bf16 %v37, %v34
  %v56 = vpack.c.bf16 %v38, %v35
  %v57 = vpack.c.bf16 %v42, %v39
  %v58 = vpack.c.bf16 %v43, %v40
  %v59 = vpack.c.bf16 %v44, %v41
  %v60 = vld [vmem:[%s1] sm:$0xf]
  %v61 = vld [vmem:[%s1 + $0x4] sm:$0xf]
  %v62 = vld [vmem:[%s1 + $0x8] sm:$0xf]
  %v63 = vld [vmem:[%s1 + $0xc] sm:$0xf]
  %v64 = vld [vmem:[%s1 + $0x10] sm:$0xf]
  %v65 = vld [vmem:[%s1 + $0x14] sm:$0xf]
  %v66 = vld [vmem:[%s1 + $0x18] sm:$0xf]
  %v67 = vld [vmem:[%s1 + $0x1c] sm:$0xf]
  %v68 = vld [vmem:[%s1 + $0x20] sm:$0xf]
  %v69 = vld [vmem:[%s1 + $0x24] sm:$0xf]
  %v70 = vld [vmem:[%s1 + $0x28] sm:$0xf]
  %v71 = vld [vmem:[%s1 + $0x2c] sm:$0xf]
  %v72 = vld [vmem:[%s1 + $0x30] sm:$0xf]
  %v73 = vld [vmem:[%s1 + $0x34] sm:$0xf]
  %v74 = vld [vmem:[%s1 + $0x38] sm:$0xf]
  %v75 = vld [vmem:[%s1 + $0x3c] sm:$0xf]
  %v76 = vld [vmem:[%s1 + $0x40] sm:$0xf]
  %v77 = vld [vmem:[%s1 + $0x44] sm:$0xf]
  %v78 = vld [vmem:[%s1 + $0x48] sm:$0xf]
  %v79 = vld [vmem:[%s1 + $0x4c] sm:$0xf]
  %v80 = vld [vmem:[%s1 + $0x50] sm:$0xf]
  %v81 = vld [vmem:[%s1 + $0x54] sm:$0xf]
  %v82 = vld [vmem:[%s1 + $0x58] sm:$0xf]
  %v83 = vld [vmem:[%s1 + $0x5c] sm:$0xf]
  %v84 = vld [vmem:[%s1 + $0x60] sm:$0xf]
  %v85 = vld [vmem:[%s1 + $0x64] sm:$0xf]
  %v86 = vld [vmem:[%s1 + $0x68] sm:$0xf]
  %v87 = vld [vmem:[%s1 + $0x6c] sm:$0xf]
  %v88 = vld [vmem:[%s1 + $0x70] sm:$0xf]
  %v89 = vld [vmem:[%s1 + $0x74] sm:$0xf]
  %v90 = vld [vmem:[%s1 + $0x78] sm:$0xf]
  %v91 = vld [vmem:[%s1 + $0x7c] sm:$0xf]
  %v92 = vld [vmem:[%s1 + $0x80] sm:$0xf]
  %v93 = vld [vmem:[%s1 + $0x84] sm:$0xf]
  %v94 = vld [vmem:[%s1 + $0x88] sm:$0xf]
  %v95 = vld [vmem:[%s1 + $0x8c] sm:$0xf]
  %v132 = vunpack.c.l.b16 %v60
  %v133 = vunpack.c.l.b16 %v61
  %v134 = vunpack.c.l.b16 %v62
  %v135 = vunpack.c.l.b16 %v63
  %v136 = vunpack.c.l.b16 %v64
  %v137 = vunpack.c.l.b16 %v65
  %v138 = vunpack.c.l.b16 %v66
  %v139 = vunpack.c.l.b16 %v67
  %v140 = vunpack.c.l.b16 %v68
  %v141 = vunpack.c.l.b16 %v69
  %v142 = vunpack.c.l.b16 %v70
  %v143 = vunpack.c.l.b16 %v71
  %v144 = vunpack.c.l.b16 %v72
  %v145 = vunpack.c.l.b16 %v73
  %v146 = vunpack.c.l.b16 %v74
  %v147 = vunpack.c.l.b16 %v75
  %v148 = vunpack.c.l.b16 %v76
  %v149 = vunpack.c.l.b16 %v77
  %v150 = vunpack.c.l.b16 %v78
  %v151 = vunpack.c.l.b16 %v79
  %v152 = vunpack.c.l.b16 %v80
  %v153 = vunpack.c.l.b16 %v81
  %v154 = vunpack.c.l.b16 %v82
  %v155 = vunpack.c.l.b16 %v83
  %v156 = vunpack.c.l.b16 %v84
  %v157 = vunpack.c.l.b16 %v85
  %v158 = vunpack.c.l.b16 %v86
  %v159 = vunpack.c.l.b16 %v87
  %v160 = vunpack.c.l.b16 %v88
  %v161 = vunpack.c.l.b16 %v89
  %v162 = vunpack.c.l.b16 %v90
  %v163 = vunpack.c.l.b16 %v91
  %v164 = vunpack.c.l.b16 %v92
  %v165 = vunpack.c.l.b16 %v93
  %v166 = vunpack.c.l.b16 %v94
  %v167 = vunpack.c.l.b16 %v95
  %v168 = vpack.c.b16 %v133, %v132
  %v169 = vpack.c.b16 %v135, %v134
  %v170 = vpack.c.b16 %v137, %v136
  %v171 = vpack.c.b16 %v139, %v138
  %v172 = vpack.c.b16 %v141, %v140
  %v173 = vpack.c.b16 %v143, %v142
  %v174 = vpack.c.b16 %v145, %v144
  %v175 = vpack.c.b16 %v147, %v146
  %v176 = vpack.c.b16 %v149, %v148
  %v177 = vpack.c.b16 %v151, %v150
  %v178 = vpack.c.b16 %v153, %v152
  %v179 = vpack.c.b16 %v155, %v154
  %v180 = vpack.c.b16 %v157, %v156
  %v181 = vpack.c.b16 %v159, %v158
  %v182 = vpack.c.b16 %v161, %v160
  %v183 = vpack.c.b16 %v163, %v162
  %v184 = vpack.c.b16 %v165, %v164
  %v185 = vpack.c.b16 %v167, %v166
  %vm204 = vcmask 261120
  %v206 = vsel %vm204, %v53, 0
  %v209 = vsel %vm204, %v56, 0
  %v212 = vsel %vm204, %v59, 0
  %214 = vmatprep.subr.bf16.mxu0 0
  %215 = vmatpush1.bf16.msra.mxu0 %v175
  %216 = vmatprep.subr.bf16.mxu0 0
  %217 = vmatpush1.bf16.msra.mxu0 %v174
  %218 = vmatprep.subr.bf16.mxu0 0
  %219 = vmatpush1.bf16.msra.mxu0 %v173
  %220 = vmatprep.subr.bf16.mxu0 0
  %221 = vmatpush1.bf16.msra.mxu0 %v172
  %222 = vmatprep.subr.bf16.mxu0 0
  %223 = vmatpush1.bf16.msra.mxu0 %v171
  %224 = vmatprep.subr.bf16.mxu0 0
  %225 = vmatpush1.bf16.msra.mxu0 %v170
  %226 = vmatprep.subr.bf16.mxu0 0
  %227 = vmatpush1.bf16.msra.mxu0 %v169
  %228 = vmatprep.subr.bf16.mxu0 0
  %229 = vmatpush1.bf16.msra.mxu0 %v168
  %230 = vmatprep.subr.bf16.mxu0 0
  %231 = vmatpush2.bf16.msra.mxu0 %v183
  %232 = vmatprep.subr.bf16.mxu0 0
  %233 = vmatpush2.bf16.msra.mxu0 %v182
  %234 = vmatprep.subr.bf16.mxu0 0
  %235 = vmatpush2.bf16.msra.mxu0 %v181
  %236 = vmatprep.subr.bf16.mxu0 0
  %237 = vmatpush2.bf16.msra.mxu0 %v180
  %238 = vmatprep.subr.bf16.mxu0 0
  %239 = vmatpush2.bf16.msra.mxu0 %v179
  %240 = vmatprep.subr.bf16.mxu0 0
  %241 = vmatpush2.bf16.msra.mxu0 %v178
  %242 = vmatprep.subr.bf16.mxu0 0
  %243 = vmatpush2.bf16.msra.mxu0 %v177
  %244 = vmatprep.subr.bf16.mxu0 0
  %245 = vmatpush2.bf16.msra.mxu0 %v176
  %246 = vmatprep.mubr.bf16.mxu0 %v52
  %247 = vmatmul.mubr.bf16.gmra.mxu0 %v51
  %v248 = vpop.f32.mrf.mxu0
  %v249 = vadd.f32 0.0, %v248
  %v250 = vpop.f32.mrf.mxu0
  %v251 = vpop.f32.mrf.mxu0
  %v252 = vadd.f32 0.0, %v251
  %v253 = vpop.f32.mrf.mxu0
  %254 = vmatprep.mubr.bf16.mxu0 %v55
  %255 = vmatmul.mubr.bf16.gmra.mxu0 %v54
  %v256 = vpop.f32.mrf.mxu0
  %v257 = vadd.f32 0.0, %v256
  %v258 = vpop.f32.mrf.mxu0
  %v259 = vpop.f32.mrf.mxu0
  %v260 = vadd.f32 0.0, %v259
  %v261 = vpop.f32.mrf.mxu0
  %262 = vmatprep.mubr.bf16.mxu0 %v58
  %263 = vmatmul.mubr.bf16.gmra.mxu0 %v57
  %v264 = vpop.f32.mrf.mxu0
  %v265 = vadd.f32 0.0, %v264
  %v266 = vpop.f32.mrf.mxu0
  %v267 = vpop.f32.mrf.mxu0
  %v268 = vadd.f32 0.0, %v267
  %v269 = vpop.f32.mrf.mxu0
  %270 = vdwg.mxu0
  %271 = vmatprep.subr.bf16.mxu0 0
  %272 = vmatpush1.bf16.msra.mxu0 0
  %273 = vmatprep.subr.bf16.mxu0 0
  %274 = vmatpush1.bf16.msra.mxu0 0
  %275 = vmatprep.subr.bf16.mxu0 0
  %276 = vmatpush1.bf16.msra.mxu0 0
  %277 = vmatprep.subr.bf16.mxu0 0
  %278 = vmatpush1.bf16.msra.mxu0 0
  %279 = vmatprep.subr.bf16.mxu0 0
  %280 = vmatpush1.bf16.msra.mxu0 0
  %281 = vmatprep.subr.bf16.mxu0 0
  %282 = vmatpush1.bf16.msra.mxu0 0
  %283 = vmatprep.subr.bf16.mxu0 0
  %284 = vmatpush1.bf16.msra.mxu0 %v185
  %285 = vmatprep.subr.bf16.mxu0 0
  %286 = vmatpush1.bf16.msra.mxu0 %v184
  %287 = vmatprep.subr.bf16.mxu0 0
  %288 = vmatpush2.bf16.msra.mxu0 0
  %289 = vmatprep.subr.bf16.mxu0 0
  %290 = vmatpush2.bf16.msra.mxu0 0
  %291 = vmatprep.subr.bf16.mxu0 0
  %292 = vmatpush2.bf16.msra.mxu0 0
  %293 = vmatprep.subr.bf16.mxu0 0
  %294 = vmatpush2.bf16.msra.mxu0 0
  %295 = vmatprep.subr.bf16.mxu0 0
  %296 = vmatpush2.bf16.msra.mxu0 0
  %297 = vmatprep.subr.bf16.mxu0 0
  %298 = vmatpush2.bf16.msra.mxu0 0
  %299 = vmatprep.subr.bf16.mxu0 0
  %300 = vmatpush2.bf16.msra.mxu0 0
  %301 = vmatprep.subr.bf16.mxu0 0
  %302 = vmatpush2.bf16.msra.mxu0 0
  %303 = vmatprep.mubr.bf16.mxu0 0
  %304 = vmatmul.mubr.bf16.gmra.mxu0 %v206
  %v305 = vpop.f32.mrf.mxu0
  %v306 = vadd.f32 %v249, %v305
  %v307 = vpop.f32.mrf.mxu0
  %v308 = vpop.f32.mrf.mxu0
  %v309 = vadd.f32 %v252, %v308
  %v310 = vpop.f32.mrf.mxu0
  %311 = vmatprep.mubr.bf16.mxu0 0
  %312 = vmatmul.mubr.bf16.gmra.mxu0 %v209
  %v313 = vpop.f32.mrf.mxu0
  %v314 = vadd.f32 %v257, %v313
  %v315 = vpop.f32.mrf.mxu0
  %v316 = vpop.f32.mrf.mxu0
  %v317 = vadd.f32 %v260, %v316
  %v318 = vpop.f32.mrf.mxu0
  %319 = vmatprep.mubr.bf16.mxu0 0
  %320 = vmatmul.mubr.bf16.gmra.mxu0 %v212
  %v321 = vpop.f32.mrf.mxu0
  %v322 = vadd.f32 %v265, %v321
  %v323 = vpop.f32.mrf.mxu0
  %v324 = vpop.f32.mrf.mxu0
  %v325 = vadd.f32 %v268, %v324
  %v326 = vpop.f32.mrf.mxu0
  %327 = vdwg.mxu0
  %v328 = vadd.f32 %v45, %v306
  %v329 = vadd.f32 %v46, %v309
  %v330 = vadd.f32 %v47, %v314
  %v331 = vadd.f32 %v48, %v317
  %v332 = vadd.f32 %v49, %v322
  %v333 = vadd.f32 %v50, %v325
  %334 = vst.msk [vmem:[#allocation2] sm:$0xff] %vm204, %v328
  %335 = vst.msk [vmem:[#allocation2 + $0x8] sm:$0xff] %vm204, %v329
  %336 = vst.msk [vmem:[#allocation2 + $0x10] sm:$0xff] %vm204, %v330
  %337 = vst.msk [vmem:[#allocation2 + $0x18] sm:$0xff] %vm204, %v331
  %338 = vst.msk [vmem:[#allocation2 + $0x20] sm:$0xff] %vm204, %v332
  %vm339 = vcmask 254976
  %340 = vst.msk [vmem:[#allocation2 + $0x28] sm:$0x3] %vm339, %v333
  // Predicated region
  $region18: #{_lambda_.29} parent=0 // pred_check
    %p341 = pneg %p15
  $region19: #{_lambda_.29} parent=0 // pred_check_branch
    %343 = sbr.rel (%p341) target = $region21
  $region20: #{_lambda_.29} parent=0 // pred_region
    %v344 = vld [vmem:[#allocation2] sm:$0xff]
    %v345 = vld [vmem:[#allocation2 + $0x8] sm:$0xff]
    %v346 = vld [vmem:[#allocation2 + $0x10] sm:$0xff]
    %v347 = vld [vmem:[#allocation2 + $0x18] sm:$0xff]
    %v348 = vld [vmem:[#allocation2 + $0x20] sm:$0xff]
    %v349 = vld [vmem:[#allocation2 + $0x28] sm:$0x3]
    %v350 = vld [vmem:[%s2] sm:$0x1]
    %v352 = vlaneseq
    %v353 = vshrl.u32 %v352, 7
    %v354 = vsub.s32 0, %v353
    %v355 = vrot.slane %v350, %v354
    %v357 = vadd.f32 %v344, %v355
    %v358 = vadd.f32 %v345, %v355
    %v359 = vadd.f32 %v346, %v355
    %v360 = vadd.f32 %v347, %v355
    %v361 = vadd.f32 %v348, %v355
    %v362 = vadd.f32 %v349, %v355
    %v363 = vmax.f32 %v357, 0.0
    %v364 = vmax.f32 %v358, 0.0
    %v365 = vmax.f32 %v359, 0.0
    %v366 = vmax.f32 %v360, 0.0
    %v367 = vmax.f32 %v361, 0.0
    %v368 = vmax.f32 %v362, 0.0
    %369 = vst.msk [vmem:[%s3] sm:$0xff] %vm204, %v363
    %370 = vst.msk [vmem:[%s3 + $0x8] sm:$0xff] %vm204, %v364
    %371 = vst.msk [vmem:[%s3 + $0x10] sm:$0xff] %vm204, %v365
    %372 = vst.msk [vmem:[%s3 + $0x18] sm:$0xff] %vm204, %v366
    %373 = vst.msk [vmem:[%s3 + $0x20] sm:$0xff] %vm204, %v367
    %374 = vst.msk [vmem:[%s3 + $0x28] sm:$0x3] %vm339, %v368
  $region21: #{_lambda_.29} parent=0 // pred_fallthru
    _
  // Predicated region
  $region22: #{_lambda_.29} parent=0 // pred_check
    _
  $region23: #{_lambda_.29} parent=0 // pred_check_branch
    %376 = sbr.rel (0) target = $region25
  $region24: #{_lambda_.29} parent=0 // pred_region
    _
  $region25: #{_lambda_.29} parent=0 // pred_fallthru
    _
  // Predicated region
  $region26: #{_lambda_.29} parent=0 // pred_check
    _
  $region27: #{_lambda_.29} parent=0 // pred_check_branch
    %378 = sbr.rel (0) target = $region29
  $region28: #{_lambda_.29} parent=0 // pred_region
    _
  $region29: #{_lambda_.29} parent=0 // pred_fallthru
    _

// kernel: _lambda_.32
$region0: #{_lambda_.32}
  #allocation0 [shape = 'u32[]', space=smem, size = 0x4, offset = 0x4, fixed_abs, tag = 'smem constant byte address 0x4 - core index']
  #allocation1 [shape = 'u32[144,128]{1,0:T(1,128)}', space=vmem, size = 0x12000, scoped, tag = 'internal scratch']
  #allocation2 [shape = 'f32[14,32]{1,0:T(8,128)}', space=vmem, size = 0x2000, scoped, tag = 'scratch operand']
  %s0 = inlined_call_operand.vmem [shape: f32[14,128], index: 0, kind: input, shape index: {}]
  %s1 = inlined_call_operand.vmem [shape: bf16[128,32], index: 1, kind: input, shape index: {}]
  %s2 = inlined_call_operand.vmem [shape: f32[1,32], index: 2, kind: input, shape index: {}]
  %s3 = inlined_call_operand.vmem [shape: f32[14,32], index: 3, kind: input, shape index: {}]
  %s4 = inlined_call_operand.vmem [shape: f32[14,32], index: 4, kind: output, shape index: {}]
  %s5 = sld [smem:[#allocation0]]
  $region34: #{_lambda_.32} parent=0
    _
  %s7 = ssub.s32 1, %s5
  %s8 = scalar_select 0, %s7, %s5
  // Predicated region
  $region2: #{_lambda_.32} parent=0 // pred_check
    _
  $region3: #{_lambda_.32} parent=0 // pred_check_branch
    %10 = sbr.rel (0) target = $region5
  $region4: #{_lambda_.32} parent=0 // pred_region
    _
  $region5: #{_lambda_.32} parent=0 // pred_fallthru
    _
  // Predicated region
  $region6: #{_lambda_.32} parent=0 // pred_check
    _
  $region7: #{_lambda_.32} parent=0 // pred_check_branch
    %12 = sbr.rel (0) target = $region9
  $region8: #{_lambda_.32} parent=0 // pred_region
    _
  $region9: #{_lambda_.32} parent=0 // pred_fallthru
    _
  // Predicated region
  $region10: #{_lambda_.32} parent=0 // pred_check
    _
  $region11: #{_lambda_.32} parent=0 // pred_check_branch
    %14 = sbr.rel (0) target = $region13
  $region12: #{_lambda_.32} parent=0 // pred_region
    _
  $region13: #{_lambda_.32} parent=0 // pred_fallthru
    _
  // Predicated region
  $region14: #{_lambda_.32} parent=0 // pred_check
    _
  $region15: #{_lambda_.32} parent=0 // pred_check_branch
    %16 = sbr.rel (0) target = $region17
  $region16: #{_lambda_.32} parent=0 // pred_region
    _
  $region17: #{_lambda_.32} parent=0 // pred_fallthru
    _
  %p18 = scmp.eq.s32.totalorder 0, 0
  // Predicated region
  $region18: #{_lambda_.32} parent=0 // pred_check
    %p19 = pneg %p18
  $region19: #{_lambda_.32} parent=0 // pred_check_branch
    %21 = sbr.rel (%p19) target = $region21
  $region20: #{_lambda_.32} parent=0 // pred_region
    %vm22 = vcmask 261120
    %23 = vst.msk [vmem:[#allocation2] sm:$0xff] %vm22, 0.0
    %vm24 = vcmask 259072
    %25 = vst.msk [vmem:[#allocation2 + $0x8] sm:$0x3f] %vm24, 0.0
  $region21: #{_lambda_.32} parent=0 // pred_fallthru
    _
  %v26 = vld [vmem:[%s0] sm:$0xff]
  %v27 = vld [vmem:[%s0 + $0x8] sm:$0x3f]
  %v28 = vld [vmem:[#allocation2] sm:$0xff]
  %v29 = vld [vmem:[#allocation2 + $0x8] sm:$0x3f]
  %v30 = vpack.c.bf16 %v27, %v26
  %v31 = vld [vmem:[%s1] sm:$0xf]
  %v32 = vld [vmem:[%s1 + $0x4] sm:$0xf]
  %v33 = vld [vmem:[%s1 + $0x8] sm:$0xf]
  %v34 = vld [vmem:[%s1 + $0xc] sm:$0xf]
  %v35 = vld [vmem:[%s1 + $0x10] sm:$0xf]
  %v36 = vld [vmem:[%s1 + $0x14] sm:$0xf]
  %v37 = vld [vmem:[%s1 + $0x18] sm:$0xf]
  %v38 = vld [vmem:[%s1 + $0x1c] sm:$0xf]
  %v39 = vld [vmem:[%s1 + $0x20] sm:$0xf]
  %v40 = vld [vmem:[%s1 + $0x24] sm:$0xf]
  %v41 = vld [vmem:[%s1 + $0x28] sm:$0xf]
  %v42 = vld [vmem:[%s1 + $0x2c] sm:$0xf]
  %v43 = vld [vmem:[%s1 + $0x30] sm:$0xf]
  %v44 = vld [vmem:[%s1 + $0x34] sm:$0xf]
  %v45 = vld [vmem:[%s1 + $0x38] sm:$0xf]
  %v46 = vld [vmem:[%s1 + $0x3c] sm:$0xf]
  %v63 = vunpack.c.l.b16 %v31
  %v64 = vunpack.c.l.b16 %v32
  %v65 = vunpack.c.l.b16 %v33
  %v66 = vunpack.c.l.b16 %v34
  %v67 = vunpack.c.l.b16 %v35
  %v68 = vunpack.c.l.b16 %v36
  %v69 = vunpack.c.l.b16 %v37
  %v70 = vunpack.c.l.b16 %v38
  %v71 = vunpack.c.l.b16 %v39
  %v72 = vunpack.c.l.b16 %v40
  %v73 = vunpack.c.l.b16 %v41
  %v74 = vunpack.c.l.b16 %v42
  %v75 = vunpack.c.l.b16 %v43
  %v76 = vunpack.c.l.b16 %v44
  %v77 = vunpack.c.l.b16 %v45
  %v78 = vunpack.c.l.b16 %v46
  %v79 = vpack.c.b16 %v64, %v63
  %v80 = vpack.c.b16 %v66, %v65
  %v81 = vpack.c.b16 %v68, %v67
  %v82 = vpack.c.b16 %v70, %v69
  %v83 = vpack.c.b16 %v72, %v71
  %v84 = vpack.c.b16 %v74, %v73
  %v85 = vpack.c.b16 %v76, %v75
  %v86 = vpack.c.b16 %v78, %v77
  %95 = vmatprep.subr.bf16.mxu0 0
  %96 = vmatpush1.bf16.msra.mxu0 %v86
  %97 = vmatprep.subr.bf16.mxu0 0
  %98 = vmatpush1.bf16.msra.mxu0 %v85
  %99 = vmatprep.subr.bf16.mxu0 0
  %100 = vmatpush1.bf16.msra.mxu0 %v84
  %101 = vmatprep.subr.bf16.mxu0 0
  %102 = vmatpush1.bf16.msra.mxu0 %v83
  %103 = vmatprep.subr.bf16.mxu0 0
  %104 = vmatpush1.bf16.msra.mxu0 %v82
  %105 = vmatprep.subr.bf16.mxu0 0
  %106 = vmatpush1.bf16.msra.mxu0 %v81
  %107 = vmatprep.subr.bf16.mxu0 0
  %108 = vmatpush1.bf16.msra.mxu0 %v80
  %109 = vmatprep.subr.bf16.mxu0 0
  %110 = vmatpush1.bf16.msra.mxu0 %v79
  %111 = vmatprep.subr.bf16.mxu0 0
  %112 = vmatpush2.bf16.msra.mxu0 0
  %113 = vmatprep.subr.bf16.mxu0 0
  %114 = vmatpush2.bf16.msra.mxu0 0
  %115 = vmatprep.subr.bf16.mxu0 0
  %116 = vmatpush2.bf16.msra.mxu0 0
  %117 = vmatprep.subr.bf16.mxu0 0
  %118 = vmatpush2.bf16.msra.mxu0 0
  %119 = vmatprep.subr.bf16.mxu0 0
  %120 = vmatpush2.bf16.msra.mxu0 0
  %121 = vmatprep.subr.bf16.mxu0 0
  %122 = vmatpush2.bf16.msra.mxu0 0
  %123 = vmatprep.subr.bf16.mxu0 0
  %124 = vmatpush2.bf16.msra.mxu0 0
  %125 = vmatprep.subr.bf16.mxu0 0
  %126 = vmatpush2.bf16.msra.mxu0 0
  %127 = vmatprep.mubr.bf16.mxu0 0
  %128 = vmatmul.mubr.bf16.gmra.mxu0 %v30
  %v129 = vpop.f32.mrf.mxu0
  %v130 = vadd.f32 0.0, %v129
  %v131 = vpop.f32.mrf.mxu0
  %v132 = vpop.f32.mrf.mxu0
  %v133 = vadd.f32 0.0, %v132
  %v134 = vpop.f32.mrf.mxu0
  %135 = vdwg.mxu0
  %v136 = vadd.f32 %v28, %v130
  %v137 = vadd.f32 %v29, %v133
  %vm138 = vcmask 261120
  %139 = vst.msk [vmem:[#allocation2] sm:$0xff] %vm138, %v136
  %vm140 = vcmask 259072
  %141 = vst.msk [vmem:[#allocation2 + $0x8] sm:$0x3f] %vm140, %v137
  // Predicated region
  $region22: #{_lambda_.32} parent=0 // pred_check
    %p142 = pneg %p18
  $region23: #{_lambda_.32} parent=0 // pred_check_branch
    %144 = sbr.rel (%p142) target = $region25
  $region24: #{_lambda_.32} parent=0 // pred_region
    %v145 = vld [vmem:[#allocation2] sm:$0xff]
    %v146 = vld [vmem:[#allocation2 + $0x8] sm:$0x3f]
    %v147 = vld [vmem:[%s2] sm:$0x1]
    %v149 = vlaneseq
    %v150 = vshrl.u32 %v149, 7
    %v151 = vsub.s32 0, %v150
    %v152 = vrot.slane %v147, %v151
    %v154 = vadd.f32 %v145, %v152
    %v155 = vadd.f32 %v146, %v152
    %v156 = vld [vmem:[%s3] sm:$0xff]
    %v157 = vld [vmem:[%s3 + $0x8] sm:$0x3f]
    %v158 = vmul.f32 %v154, 0.5
    %v159 = vmul.f32 %v155, 0.5
    %v160 = vadd.f32 %v156, %v158
    %v161 = vadd.f32 %v157, %v159
    %162 = vst.msk [vmem:[%s4] sm:$0xff] %vm138, %v160
    %163 = vst.msk [vmem:[%s4 + $0x8] sm:$0x3f] %vm140, %v161
  $region25: #{_lambda_.32} parent=0 // pred_fallthru
    _
  // Predicated region
  $region26: #{_lambda_.32} parent=0 // pred_check
    _
  $region27: #{_lambda_.32} parent=0 // pred_check_branch
    %165 = sbr.rel (0) target = $region29
  $region28: #{_lambda_.32} parent=0 // pred_region
    _
  $region29: #{_lambda_.32} parent=0 // pred_fallthru
    _
  // Predicated region
  $region30: #{_lambda_.32} parent=0 // pred_check
    _
  $region31: #{_lambda_.32} parent=0 // pred_check_branch
    %167 = sbr.rel (0) target = $region33
  $region32: #{_lambda_.32} parent=0 // pred_region
    _
  $region33: #{_lambda_.32} parent=0 // pred_fallthru
    _

// kernel: _lambda_.33
$region0: #{_lambda_.33}
  #allocation0 [shape = 'u32[]', space=smem, size = 0x4, offset = 0x4, fixed_abs, tag = 'smem constant byte address 0x4 - core index']
  #allocation1 [shape = 'u32[144,128]{1,0:T(1,128)}', space=vmem, size = 0x12000, scoped, tag = 'internal scratch']
  #allocation2 [shape = 'f32[14,96]{1,0:T(8,128)}', space=vmem, size = 0x2000, scoped, tag = 'scratch operand']
  %s0 = inlined_call_operand.vmem [shape: f32[14,32], index: 0, kind: input, shape index: {}]
  %s1 = inlined_call_operand.vmem [shape: bf16[32,96], index: 1, kind: input, shape index: {}]
  %s2 = inlined_call_operand.vmem [shape: f32[1,96], index: 2, kind: input, shape index: {}]
  %s3 = inlined_call_operand.vmem [shape: f32[1,32], index: 3, kind: input, shape index: {}]
  %s4 = inlined_call_operand.vmem [shape: f32[1,32], index: 4, kind: input, shape index: {}]
  %s5 = inlined_call_operand.vmem [shape: f32[14,96], index: 5, kind: output, shape index: {}]
  %s6 = sld [smem:[#allocation0]]
  $region38: #{_lambda_.33} parent=0
    _
  %s8 = ssub.s32 1, %s6
  %s9 = scalar_select 0, %s8, %s6
  // Predicated region
  $region2: #{_lambda_.33} parent=0 // pred_check
    _
  $region3: #{_lambda_.33} parent=0 // pred_check_branch
    %11 = sbr.rel (0) target = $region5
  $region4: #{_lambda_.33} parent=0 // pred_region
    _
  $region5: #{_lambda_.33} parent=0 // pred_fallthru
    _
  // Predicated region
  $region6: #{_lambda_.33} parent=0 // pred_check
    _
  $region7: #{_lambda_.33} parent=0 // pred_check_branch
    %13 = sbr.rel (0) target = $region9
  $region8: #{_lambda_.33} parent=0 // pred_region
    _
  $region9: #{_lambda_.33} parent=0 // pred_fallthru
    _
  // Predicated region
  $region10: #{_lambda_.33} parent=0 // pred_check
    _
  $region11: #{_lambda_.33} parent=0 // pred_check_branch
    %15 = sbr.rel (0) target = $region13
  $region12: #{_lambda_.33} parent=0 // pred_region
    _
  $region13: #{_lambda_.33} parent=0 // pred_fallthru
    _
  // Predicated region
  $region14: #{_lambda_.33} parent=0 // pred_check
    _
  $region15: #{_lambda_.33} parent=0 // pred_check_branch
    %17 = sbr.rel (0) target = $region17
  $region16: #{_lambda_.33} parent=0 // pred_region
    _
  $region17: #{_lambda_.33} parent=0 // pred_fallthru
    _
  // Predicated region
  $region18: #{_lambda_.33} parent=0 // pred_check
    _
  $region19: #{_lambda_.33} parent=0 // pred_check_branch
    %19 = sbr.rel (0) target = $region21
  $region20: #{_lambda_.33} parent=0 // pred_region
    _
  $region21: #{_lambda_.33} parent=0 // pred_fallthru
    _
  %p21 = scmp.eq.s32.totalorder 0, 0
  // Predicated region
  $region22: #{_lambda_.33} parent=0 // pred_check
    %p22 = pneg %p21
  $region23: #{_lambda_.33} parent=0 // pred_check_branch
    %24 = sbr.rel (%p22) target = $region25
  $region24: #{_lambda_.33} parent=0 // pred_region
    %vm25 = vcmask 785408
    %26 = vst.msk [vmem:[#allocation2] sm:$0xff] %vm25, 0.0
    %vm27 = vcmask 783360
    %28 = vst.msk [vmem:[#allocation2 + $0x8] sm:$0x3f] %vm27, 0.0
  $region25: #{_lambda_.33} parent=0 // pred_fallthru
    _
  %v29 = vld [vmem:[%s0] sm:$0xff]
  %v30 = vld [vmem:[%s0 + $0x8] sm:$0x3f]
  %vm31 = vcmask 261120
  %v32 = vsel %vm31, %v29, 0.0
  %33 = vadd.xlane.f32.xlu0 %v32
  %v34 = vpop.xlane.xlu0 %33
  %vm35 = vcmask 259072
  %v36 = vsel %vm35, %v30, 0.0
  %37 = vadd.xlane.f32.xlu0 %v36
  %v38 = vpop.xlane.xlu0 %37
  %v39 = vrcp.pop 32.0
  %v40 = vmul.f32 %v34, %v39
  %v41 = vmul.f32 %v38, %v39
  %v42 = vsub.f32 %v29, %v40
  %v43 = vsub.f32 %v30, %v41
  %v44 = vmul.f32 %v42, %v42
  %v45 = vmul.f32 %v43, %v43
  %v46 = vsel %vm31, %v44, 0.0
  %47 = vadd.xlane.f32.xlu0 %v46
  %v48 = vpop.xlane.xlu0 %47
  %v49 = vsel %vm35, %v45, 0.0
  %50 = vadd.xlane.f32.xlu0 %v49
  %v51 = vpop.xlane.xlu0 %50
  %v52 = vmul.f32 %v48, %v39
  %v53 = vmul.f32 %v51, %v39
  %v54 = vadd.f32 %v52, 1e-05
  %v55 = vadd.f32 %v53, 1e-05
  %v56 = vrsqrt.pop %v54
  %v57 = vrsqrt.pop %v55
  %v58 = vmul.f32 %v42, %v56
  %v59 = vmul.f32 %v43, %v57
  %v60 = vld [vmem:[%s3] sm:$0x1]
  %v62 = vlaneseq
  %v63 = vshrl.u32 %v62, 7
  %v64 = vsub.s32 0, %v63
  %v65 = vrot.slane %v60, %v64
  %v67 = vmul.f32 %v58, %v65
  %v68 = vmul.f32 %v59, %v65
  %v69 = vld [vmem:[%s4] sm:$0x1]
  %v71 = vlaneseq
  %v72 = vshrl.u32 %v71, 7
  %v73 = vsub.s32 0, %v72
  %v74 = vrot.slane %v69, %v73
  %v76 = vadd.f32 %v67, %v74
  %v77 = vadd.f32 %v68, %v74
  %v78 = vld [vmem:[#allocation2] sm:$0xff]
  %v79 = vld [vmem:[#allocation2 + $0x8] sm:$0x3f]
  %v80 = vpack.c.bf16 %v77, %v76
  %v81 = vld [vmem:[%s1] sm:$0xf]
  %v82 = vld [vmem:[%s1 + $0x4] sm:$0xf]
  %v83 = vld [vmem:[%s1 + $0x8] sm:$0xf]
  %v84 = vld [vmem:[%s1 + $0xc] sm:$0xf]
  %v89 = vunpack.c.l.b16 %v81
  %v90 = vunpack.c.l.b16 %v82
  %v91 = vunpack.c.l.b16 %v83
  %v92 = vunpack.c.l.b16 %v84
  %v93 = vpack.c.b16 %v90, %v89
  %v94 = vpack.c.b16 %v92, %v91
  %v98 = vsel %vm31, %v80, 0
  %100 = vmatprep.subr.bf16.mxu0 0
  %101 = vmatpush1.bf16.msra.mxu0 0
  %102 = vmatprep.subr.bf16.mxu0 0
  %103 = vmatpush1.bf16.msra.mxu0 0
  %104 = vmatprep.subr.bf16.mxu0 0
  %105 = vmatpush1.bf16.msra.mxu0 0
  %106 = vmatprep.subr.bf16.mxu0 0
  %107 = vmatpush1.bf16.msra.mxu0 0
  %108 = vmatprep.subr.bf16.mxu0 0
  %109 = vmatpush1.bf16.msra.mxu0 0
  %110 = vmatprep.subr.bf16.mxu0 0
  %111 = vmatpush1.bf16.msra.mxu0 0
  %112 = vmatprep.subr.bf16.mxu0 0
  %113 = vmatpush1.bf16.msra.mxu0 %v94
  %114 = vmatprep.subr.bf16.mxu0 0
  %115 = vmatpush1.bf16.msra.mxu0 %v93
  %116 = vmatprep.subr.bf16.mxu0 0
  %117 = vmatpush2.bf16.msra.mxu0 0
  %118 = vmatprep.subr.bf16.mxu0 0
  %119 = vmatpush2.bf16.msra.mxu0 0
  %120 = vmatprep.subr.bf16.mxu0 0
  %121 = vmatpush2.bf16.msra.mxu0 0
  %122 = vmatprep.subr.bf16.mxu0 0
  %123 = vmatpush2.bf16.msra.mxu0 0
  %124 = vmatprep.subr.bf16.mxu0 0
  %125 = vmatpush2.bf16.msra.mxu0 0
  %126 = vmatprep.subr.bf16.mxu0 0
  %127 = vmatpush2.bf16.msra.mxu0 0
  %128 = vmatprep.subr.bf16.mxu0 0
  %129 = vmatpush2.bf16.msra.mxu0 0
  %130 = vmatprep.subr.bf16.mxu0 0
  %131 = vmatpush2.bf16.msra.mxu0 0
  %132 = vmatprep.mubr.bf16.mxu0 0
  %133 = vmatmul.mubr.bf16.gmra.mxu0 %v98
  %v134 = vpop.f32.mrf.mxu0
  %v135 = vadd.f32 0.0, %v134
  %v136 = vpop.f32.mrf.mxu0
  %v137 = vpop.f32.mrf.mxu0
  %v138 = vadd.f32 0.0, %v137
  %v139 = vpop.f32.mrf.mxu0
  %140 = vdwg.mxu0
  %v141 = vadd.f32 %v78, %v135
  %v142 = vadd.f32 %v79, %v138
  %vm143 = vcmask 785408
  %144 = vst.msk [vmem:[#allocation2] sm:$0xff] %vm143, %v141
  %vm145 = vcmask 783360
  %146 = vst.msk [vmem:[#allocation2 + $0x8] sm:$0x3f] %vm145, %v142
  // Predicated region
  $region26: #{_lambda_.33} parent=0 // pred_check
    %p147 = pneg %p21
  $region27: #{_lambda_.33} parent=0 // pred_check_branch
    %149 = sbr.rel (%p147) target = $region29
  $region28: #{_lambda_.33} parent=0 // pred_region
    %v150 = vld [vmem:[#allocation2] sm:$0xff]
    %v151 = vld [vmem:[#allocation2 + $0x8] sm:$0x3f]
    %v152 = vld [vmem:[%s2] sm:$0x1]
    %v154 = vlaneseq
    %v155 = vshrl.u32 %v154, 7
    %v156 = vsub.s32 0, %v155
    %v157 = vrot.slane %v152, %v156
    %v159 = vadd.f32 %v150, %v157
    %v160 = vadd.f32 %v151, %v157
    %161 = vst.msk [vmem:[%s5] sm:$0xff] %vm143, %v159
    %162 = vst.msk [vmem:[%s5 + $0x8] sm:$0x3f] %vm145, %v160
  $region29: #{_lambda_.33} parent=0 // pred_fallthru
    _
  // Predicated region
  $region30: #{_lambda_.33} parent=0 // pred_check
    _
  $region31: #{_lambda_.33} parent=0 // pred_check_branch
    %164 = sbr.rel (0) target = $region33
  $region32: #{_lambda_.33} parent=0 // pred_region
    _
  $region33: #{_lambda_.33} parent=0 // pred_fallthru
    _
  // Predicated region
  $region34: #{_lambda_.33} parent=0 // pred_check
    _
  $region35: #{_lambda_.33} parent=0 // pred_check_branch
    %166 = sbr.rel (0) target = $region37
  $region36: #{_lambda_.33} parent=0 // pred_region
    _
  $region37: #{_lambda_.33} parent=0 // pred_fallthru
    _

// kernel: _lambda_.34
$region0: #{_lambda_.34}
  #allocation0 [shape = 'u32[]', space=smem, size = 0x4, offset = 0x4, fixed_abs, tag = 'smem constant byte address 0x4 - core index']
  #allocation1 [shape = 'u32[144,128]{1,0:T(1,128)}', space=vmem, size = 0x12000, scoped, tag = 'internal scratch']
  #allocation2 [shape = 'f32[7,32]{1,0:T(8,128)}', space=vmem, size = 0x1000, scoped, tag = 'scratch operand']
  %s0 = inlined_call_operand.vmem [shape: f32[7,32], index: 0, kind: input, shape index: {}]
  %s1 = inlined_call_operand.vmem [shape: bf16[32,32], index: 1, kind: input, shape index: {}]
  %s2 = inlined_call_operand.vmem [shape: f32[7,32], index: 2, kind: output, shape index: {}]
  %s3 = sld [smem:[#allocation0]]
  $region26: #{_lambda_.34} parent=0
    _
  %s5 = ssub.s32 1, %s3
  %s6 = scalar_select 0, %s5, %s3
  // Predicated region
  $region2: #{_lambda_.34} parent=0 // pred_check
    _
  $region3: #{_lambda_.34} parent=0 // pred_check_branch
    %8 = sbr.rel (0) target = $region5
  $region4: #{_lambda_.34} parent=0 // pred_region
    _
  $region5: #{_lambda_.34} parent=0 // pred_fallthru
    _
  // Predicated region
  $region6: #{_lambda_.34} parent=0 // pred_check
    _
  $region7: #{_lambda_.34} parent=0 // pred_check_branch
    %10 = sbr.rel (0) target = $region9
  $region8: #{_lambda_.34} parent=0 // pred_region
    _
  $region9: #{_lambda_.34} parent=0 // pred_fallthru
    _
  %p12 = scmp.eq.s32.totalorder 0, 0
  // Predicated region
  $region10: #{_lambda_.34} parent=0 // pred_check
    %p13 = pneg %p12
  $region11: #{_lambda_.34} parent=0 // pred_check_branch
    %15 = sbr.rel (%p13) target = $region13
  $region12: #{_lambda_.34} parent=0 // pred_region
    %vm16 = vcmask 260096
    %17 = vst.msk [vmem:[#allocation2] sm:$0x7f] %vm16, 0.0
  $region13: #{_lambda_.34} parent=0 // pred_fallthru
    _
  %v18 = vld [vmem:[%s0] sm:$0x7f]
  %v19 = vld [vmem:[#allocation2] sm:$0x7f]
  %v20 = vpack.c.bf16 %v18, %v18
  %v21 = vld [vmem:[%s1] sm:$0xf]
  %v22 = vld [vmem:[%s1 + $0x4] sm:$0xf]
  %v23 = vld [vmem:[%s1 + $0x8] sm:$0xf]
  %v24 = vld [vmem:[%s1 + $0xc] sm:$0xf]
  %v29 = vunpack.c.l.b16 %v21
  %v30 = vunpack.c.l.b16 %v22
  %v31 = vunpack.c.l.b16 %v23
  %v32 = vunpack.c.l.b16 %v24
  %v33 = vpack.c.b16 %v30, %v29
  %v34 = vpack.c.b16 %v32, %v31
  %vm37 = vcmask 261120
  %v39 = vsel %vm37, %v20, 0
  %41 = vmatprep.subr.bf16.mxu0 0
  %42 = vmatpush1.bf16.msra.mxu0 0
  %43 = vmatprep.subr.bf16.mxu0 0
  %44 = vmatpush1.bf16.msra.mxu0 0
  %45 = vmatprep.subr.bf16.mxu0 0
  %46 = vmatpush1.bf16.msra.mxu0 0
  %47 = vmatprep.subr.bf16.mxu0 0
  %48 = vmatpush1.bf16.msra.mxu0 0
  %49 = vmatprep.subr.bf16.mxu0 0
  %50 = vmatpush1.bf16.msra.mxu0 0
  %51 = vmatprep.subr.bf16.mxu0 0
  %52 = vmatpush1.bf16.msra.mxu0 0
  %53 = vmatprep.subr.bf16.mxu0 0
  %54 = vmatpush1.bf16.msra.mxu0 %v34
  %55 = vmatprep.subr.bf16.mxu0 0
  %56 = vmatpush1.bf16.msra.mxu0 %v33
  %57 = vmatprep.subr.bf16.mxu0 0
  %58 = vmatpush2.bf16.msra.mxu0 0
  %59 = vmatprep.subr.bf16.mxu0 0
  %60 = vmatpush2.bf16.msra.mxu0 0
  %61 = vmatprep.subr.bf16.mxu0 0
  %62 = vmatpush2.bf16.msra.mxu0 0
  %63 = vmatprep.subr.bf16.mxu0 0
  %64 = vmatpush2.bf16.msra.mxu0 0
  %65 = vmatprep.subr.bf16.mxu0 0
  %66 = vmatpush2.bf16.msra.mxu0 0
  %67 = vmatprep.subr.bf16.mxu0 0
  %68 = vmatpush2.bf16.msra.mxu0 0
  %69 = vmatprep.subr.bf16.mxu0 0
  %70 = vmatpush2.bf16.msra.mxu0 0
  %71 = vmatprep.subr.bf16.mxu0 0
  %72 = vmatpush2.bf16.msra.mxu0 0
  %73 = vmatprep.mubr.bf16.mxu0 0
  %74 = vmatmul.mubr.bf16.gmra.mxu0 %v39
  %v75 = vpop.f32.mrf.mxu0
  %v76 = vadd.f32 0.0, %v75
  %v77 = vpop.f32.mrf.mxu0
  %v78 = vpop.f32.mrf.mxu0
  %v79 = vpop.f32.mrf.mxu0
  %80 = vdwg.mxu0
  %v81 = vadd.f32 %v19, %v76
  %vm82 = vcmask 260096
  %83 = vst.msk [vmem:[#allocation2] sm:$0x7f] %vm82, %v81
  // Predicated region
  $region14: #{_lambda_.34} parent=0 // pred_check
    %p84 = pneg %p12
  $region15: #{_lambda_.34} parent=0 // pred_check_branch
    %86 = sbr.rel (%p84) target = $region17
  $region16: #{_lambda_.34} parent=0 // pred_region
    %v87 = vld [vmem:[#allocation2] sm:$0x7f]
    %88 = vst.msk [vmem:[%s2] sm:$0x7f] %vm82, %v87
  $region17: #{_lambda_.34} parent=0 // pred_fallthru
    _
  // Predicated region
  $region18: #{_lambda_.34} parent=0 // pred_check
    _
  $region19: #{_lambda_.34} parent=0 // pred_check_branch
    %90 = sbr.rel (0) target = $region21
  $region20: #{_lambda_.34} parent=0 // pred_region
    _
  $region21: #{_lambda_.34} parent=0 // pred_fallthru
    _
  // Predicated region
  $region22: #{_lambda_.34} parent=0 // pred_check
    _
  $region23: #{_lambda_.34} parent=0 // pred_check_branch
    %92 = sbr.rel (0) target = $region25
  $region24: #{_lambda_.34} parent=0 // pred_region
    _
  $region25: #{_lambda_.34} parent=0 // pred_fallthru
    _

// kernel: _lambda_.36
$region0: #{_lambda_.36}
  #allocation0 [shape = 'u32[]', space=smem, size = 0x4, offset = 0x4, fixed_abs, tag = 'smem constant byte address 0x4 - core index']
  #allocation1 [shape = 'u32[144,128]{1,0:T(1,128)}', space=vmem, size = 0x12000, scoped, tag = 'internal scratch']
  %s0 = inlined_call_operand.vmem [shape: f32[3,2,4,7,8], index: 0, kind: input, shape index: {}, may-alias: {0,1,2}]
  %s1 = inlined_call_operand.vmem [shape: f32[3,2,4,7,8], index: 1, kind: input, shape index: {}, may-alias: {0,1,2}]
  %s2 = inlined_call_operand.vmem [shape: f32[3,2,4,7,8], index: 2, kind: input, shape index: {}, may-alias: {0,1,2}]
  %s3 = inlined_call_operand.vmem [shape: f32[2,4,7,7], index: 3, kind: input, shape index: {}]
  %s4 = inlined_call_operand.vmem [shape: f32[4,1,8], index: 4, kind: input, shape index: {}]
  %s5 = inlined_call_operand.vmem [shape: f32[2,4,7,8], index: 5, kind: output, shape index: {}]
  %s6 = sld [smem:[#allocation0]]
  $region53: #{_lambda_.36} parent=0
    _
  %s8 = ssub.s32 1, %s6
  %s9 = scalar_select 0, %s8, %s6
  loop: start=0, step=1, limit=10
  $region2: #{_lambda_.36} parent=0 // loop_pre_header
    _
  $region3: #{_lambda_.36} parent=0 // loop_header
    %s11 = sphi 0, %s15
    %p12 = scmp.ge.s32.totalorder %s11, 10
    %s18 = sphi 0, %s30
    %s19 = sphi 0, %s26
    %s20 = sphi 0, %s18
    %s21 = sphi 0, %s19
    %s22 = sphi 0, %s20
    %s23 = sphi 0, %s21
    %s35 = sphi 0, %s37
    %s38 = sphi 0, %s35
    %s39 = sphi 0, %s38
    %s55 = sphi 0, %s39
    %s63 = sphi 0, %s65
    %s66 = sphi 0, %s63
    %s67 = sphi 0, %s66
    %s83 = sphi 0, %s67
    %s91 = sphi 0, %s93
    %s94 = sphi 0, %s91
    %s95 = sphi 0, %s94
    %s111 = sphi 0, %s95
    %s119 = sphi 0, %s121
    %s122 = sphi 0, %s119
    %s123 = sphi 0, %s122
    %s139 = sphi 0, %s123
    %s145 = sphi 0, %s147
    %s148 = sphi 0, %s145
    %s149 = sphi 0, %s148
    %s165 = sphi 0, %s149
    %s173 = sphi 0, %s175
    %s176 = sphi 0, %s173
    %s177 = sphi 0, %s176
    %s193 = sphi 0, %s177
  $region4: #{_lambda_.36} parent=0 // loop_header_branch
    %14 = sbr.rel (%p12) target = $region8
  $region5: #{_lambda_.36} parent=0 // loop_body
    %s16 = ssub.s32 %s11, 1
    %s17 = ssub.s32 %s11, 2
    %s24 = sadd.s32 1, %s19
    %p25 = scmp.ge.s32.totalorder %s24, 4
    %s26 = scalar_select %p25, 0, %s24
    %s27 = sadd.s32 1, %s18
    %s28 = scalar_select %p25, %s27, %s18
    %p29 = scmp.ge.s32.totalorder %s28, 2
    %s30 = scalar_select %p29, 0, %s28
    %s31 = ssub.s32 %s18, %s30
    %s32 = ssub.s32 %s19, %s26
    %s33 = sor.u32 %s31, %s32
    %p34 = scmp.eq.s32.totalorder %s33, 0
    %s36 = sadd.s32 %s35, 1
    %s37 = scalar_select %p34, %s35, %s36
    %p40 = pneg %p34
    %p41 = scmp.eq.s32.totalorder %s11, 7
    %p42 = por %p40, %p41
    %p43 = scmp.ne.s32.totalorder %s35, %s38
    %p44 = scmp.eq.s32.totalorder %s11, 0
    %p45 = por %p43, %p44
    %p46 = scmp.ne.s32.totalorder %s35, %s38
    %p47 = scmp.eq.s32.totalorder %s16, 7
    %p48 = por %p46, %p47
    %p49 = scmp.ne.s32.totalorder %s38, %s39
    %p50 = scmp.eq.s32.totalorder %s16, 0
    %p51 = por %p49, %p50
    %p52 = scmp.ne.s32.totalorder %s38, %s39
    %p53 = scmp.eq.s32.totalorder %s17, 7
    %p54 = por %p52, %p53
    %p56 = scmp.ne.s32.totalorder %s39, %s55
    %p57 = scmp.eq.s32.totalorder %s17, 0
    %p58 = por %p56, %p57
    %s59 = ssub.s32 %s18, %s30
    %s60 = ssub.s32 %s19, %s26
    %s61 = sor.u32 %s59, %s60
    %p62 = scmp.eq.s32.totalorder %s61, 0
    %s64 = sadd.s32 %s63, 1
    %s65 = scalar_select %p62, %s63, %s64
    %p68 = pneg %p62
    %p69 = scmp.eq.s32.totalorder %s11, 7
    %p70 = por %p68, %p69
    %p71 = scmp.ne.s32.totalorder %s63, %s66
    %p72 = scmp.eq.s32.totalorder %s11, 0
    %p73 = por %p71, %p72
    %p74 = scmp.ne.s32.totalorder %s63, %s66
    %p75 = scmp.eq.s32.totalorder %s16, 7
    %p76 = por %p74, %p75
    %p77 = scmp.ne.s32.totalorder %s66, %s67
    %p78 = scmp.eq.s32.totalorder %s16, 0
    %p79 = por %p77, %p78
    %p80 = scmp.ne.s32.totalorder %s66, %s67
    %p81 = scmp.eq.s32.totalorder %s17, 7
    %p82 = por %p80, %p81
    %p84 = scmp.ne.s32.totalorder %s67, %s83
    %p85 = scmp.eq.s32.totalorder %s17, 0
    %p86 = por %p84, %p85
    %s87 = ssub.s32 %s18, %s30
    %s88 = ssub.s32 %s19, %s26
    %s89 = sor.u32 %s87, %s88
    %p90 = scmp.eq.s32.totalorder %s89, 0
    %s92 = sadd.s32 %s91, 1
    %s93 = scalar_select %p90, %s91, %s92
    %p96 = pneg %p90
    %p97 = scmp.eq.s32.totalorder %s11, 7
    %p98 = por %p96, %p97
    %p99 = scmp.ne.s32.totalorder %s91, %s94
    %p100 = scmp.eq.s32.totalorder %s11, 0
    %p101 = por %p99, %p100
    %p102 = scmp.ne.s32.totalorder %s91, %s94
    %p103 = scmp.eq.s32.totalorder %s16, 7
    %p104 = por %p102, %p103
    %p105 = scmp.ne.s32.totalorder %s94, %s95
    %p106 = scmp.eq.s32.totalorder %s16, 0
    %p107 = por %p105, %p106
    %p108 = scmp.ne.s32.totalorder %s94, %s95
    %p109 = scmp.eq.s32.totalorder %s17, 7
    %p110 = por %p108, %p109
    %p112 = scmp.ne.s32.totalorder %s95, %s111
    %p113 = scmp.eq.s32.totalorder %s17, 0
    %p114 = por %p112, %p113
    %s115 = ssub.s32 %s18, %s30
    %s116 = ssub.s32 %s19, %s26
    %s117 = sor.u32 %s115, %s116
    %p118 = scmp.eq.s32.totalorder %s117, 0
    %s120 = sadd.s32 %s119, 1
    %s121 = scalar_select %p118, %s119, %s120
    %p124 = pneg %p118
    %p125 = scmp.eq.s32.totalorder %s11, 7
    %p126 = por %p124, %p125
    %p127 = scmp.ne.s32.totalorder %s119, %s122
    %p128 = scmp.eq.s32.totalorder %s11, 0
    %p129 = por %p127, %p128
    %p130 = scmp.ne.s32.totalorder %s119, %s122
    %p131 = scmp.eq.s32.totalorder %s16, 7
    %p132 = por %p130, %p131
    %p133 = scmp.ne.s32.totalorder %s122, %s123
    %p134 = scmp.eq.s32.totalorder %s16, 0
    %p135 = por %p133, %p134
    %p136 = scmp.ne.s32.totalorder %s122, %s123
    %p137 = scmp.eq.s32.totalorder %s17, 7
    %p138 = por %p136, %p137
    %p140 = scmp.ne.s32.totalorder %s123, %s139
    %p141 = scmp.eq.s32.totalorder %s17, 0
    %p142 = por %p140, %p141
    %s143 = ssub.s32 %s19, %s26
    %p144 = scmp.eq.s32.totalorder %s143, 0
    %s146 = sadd.s32 %s145, 1
    %s147 = scalar_select %p144, %s145, %s146
    %p150 = pneg %p144
    %p151 = scmp.eq.s32.totalorder %s11, 7
    %p152 = por %p150, %p151
    %p153 = scmp.ne.s32.totalorder %s145, %s148
    %p154 = scmp.eq.s32.totalorder %s11, 0
    %p155 = por %p153, %p154
    %p156 = scmp.ne.s32.totalorder %s145, %s148
    %p157 = scmp.eq.s32.totalorder %s16, 7
    %p158 = por %p156, %p157
    %p159 = scmp.ne.s32.totalorder %s148, %s149
    %p160 = scmp.eq.s32.totalorder %s16, 0
    %p161 = por %p159, %p160
    %p162 = scmp.ne.s32.totalorder %s148, %s149
    %p163 = scmp.eq.s32.totalorder %s17, 7
    %p164 = por %p162, %p163
    %p166 = scmp.ne.s32.totalorder %s149, %s165
    %p167 = scmp.eq.s32.totalorder %s17, 0
    %p168 = por %p166, %p167
    %s169 = ssub.s32 %s18, %s30
    %s170 = ssub.s32 %s19, %s26
    %s171 = sor.u32 %s169, %s170
    %p172 = scmp.eq.s32.totalorder %s171, 0
    %s174 = sadd.s32 %s173, 1
    %s175 = scalar_select %p172, %s173, %s174
    %p178 = pneg %p172
    %p179 = scmp.eq.s32.totalorder %s11, 7
    %p180 = por %p178, %p179
    %p181 = scmp.ne.s32.totalorder %s173, %s176
    %p182 = scmp.eq.s32.totalorder %s11, 0
    %p183 = por %p181, %p182
    %p184 = scmp.ne.s32.totalorder %s173, %s176
    %p185 = scmp.eq.s32.totalorder %s16, 7
    %p186 = por %p184, %p185
    %p187 = scmp.ne.s32.totalorder %s176, %s177
    %p188 = scmp.eq.s32.totalorder %s16, 0
    %p189 = por %p187, %p188
    %p190 = scmp.ne.s32.totalorder %s176, %s177
    %p191 = scmp.eq.s32.totalorder %s17, 7
    %p192 = por %p190, %p191
    %p194 = scmp.ne.s32.totalorder %s177, %s193
    %p195 = scmp.eq.s32.totalorder %s17, 0
    %p196 = por %p194, %p195
    %p197 = scmp.le.s32.totalorder 1, %s11
    %p198 = scmp.lt.s32.totalorder %s11, 9
    %p199 = pnand %p197, %p198
    %p200 = pneg %p199
    // Predicated region
    $region9: #{_lambda_.36} parent=5 // pred_check
      _
    $region10: #{_lambda_.36} parent=5 // pred_check_branch
      %202 = sbr.rel (%p199) target = $region12
    $region11: #{_lambda_.36} parent=5 // pred_region
      %s203 = ssub.s32 %s11, 1
    $region12: #{_lambda_.36} parent=5 // pred_fallthru
      _
    %p204 = scmp.lt.s32.totalorder %s11, 8
    // Predicated region
    $region13: #{_lambda_.36} parent=5 // pred_check
      %p205 = pneg %p204
    $region14: #{_lambda_.36} parent=5 // pred_check_branch
      %207 = sbr.rel (%p205) target = $region16
    $region15: #{_lambda_.36} parent=5 // pred_region
      // Predicated region
      $region17: #{_lambda_.36} parent=15 // pred_check
        %p208 = pneg %p45
      $region18: #{_lambda_.36} parent=15 // pred_check_branch
        %210 = sbr.rel (%p208) target = $region20
      $region19: #{_lambda_.36} parent=15 // pred_region
        %p211 = scmp.lt.s32.totalorder %s18, 1
        %s212 = scalar_select %p211, %s18, 1
        %p213 = scmp.lt.s32.totalorder %s19, 3
        %s214 = scalar_select %p213, %s19, 3
        %s215 = smul.addr %s212, 4
        %s216 = sadd.s32 %s214, %s215
        %s217 = smul.addr %s216, 8
        %s218 = scalar_lea.vmem %s0, %s217
      $region20: #{_lambda_.36} parent=15 // pred_fallthru
        _
      // Predicated region
      $region21: #{_lambda_.36} parent=15 // pred_check
        %p219 = pneg %p73
      $region22: #{_lambda_.36} parent=15 // pred_check_branch
        %221 = sbr.rel (%p219) target = $region24
      $region23: #{_lambda_.36} parent=15 // pred_region
        %p222 = scmp.lt.s32.totalorder %s18, 1
        %s223 = scalar_select %p222, %s18, 1
        %p224 = scmp.lt.s32.totalorder %s19, 3
        %s225 = scalar_select %p224, %s19, 3
        %s226 = smul.addr %s223, 4
        %s227 = sadd.s32 %s225, %s226
        %s228 = sadd.s32 %s227, 8
        %s229 = smul.addr %s228, 8
        %s230 = scalar_lea.vmem %s1, %s229
      $region24: #{_lambda_.36} parent=15 // pred_fallthru
        _
      // Predicated region
      $region25: #{_lambda_.36} parent=15 // pred_check
        %p231 = pneg %p101
      $region26: #{_lambda_.36} parent=15 // pred_check_branch
        %233 = sbr.rel (%p231) target = $region28
      $region27: #{_lambda_.36} parent=15 // pred_region
        %p234 = scmp.lt.s32.totalorder %s18, 1
        %s235 = scalar_select %p234, %s18, 1
        %p236 = scmp.lt.s32.totalorder %s19, 3
        %s237 = scalar_select %p236, %s19, 3
        %s238 = smul.addr %s235, 4
        %s239 = sadd.s32 %s237, %s238
        %s240 = sadd.s32 %s239, 16
        %s241 = smul.addr %s240, 8
        %s242 = scalar_lea.vmem %s2, %s241
      $region28: #{_lambda_.36} parent=15 // pred_fallthru
        _
      // Predicated region
      $region29: #{_lambda_.36} parent=15 // pred_check
        %p243 = pneg %p129
      $region30: #{_lambda_.36} parent=15 // pred_check_branch
        %245 = sbr.rel (%p243) target = $region32
      $region31: #{_lambda_.36} parent=15 // pred_region
        %p246 = scmp.lt.s32.totalorder %s18, 1
        %s247 = scalar_select %p246, %s18, 1
        %p248 = scmp.lt.s32.totalorder %s19, 3
        %s249 = scalar_select %p248, %s19, 3
        %s250 = smul.addr %s247, 4
        %s251 = sadd.s32 %s249, %s250
        %s252 = smul.addr %s251, 8
        %s253 = scalar_lea.vmem %s3, %s252
      $region32: #{_lambda_.36} parent=15 // pred_fallthru
        _
      // Predicated region
      $region33: #{_lambda_.36} parent=15 // pred_check
        %p254 = pneg %p155
      $region34: #{_lambda_.36} parent=15 // pred_check_branch
        %256 = sbr.rel (%p254) target = $region36
      $region35: #{_lambda_.36} parent=15 // pred_region
        %p257 = scmp.lt.s32.totalorder %s19, 3
        %s258 = scalar_select %p257, %s19, 3
        %s259 = scalar_lea.vmem %s4, %s258
      $region36: #{_lambda_.36} parent=15 // pred_fallthru
        _
    $region16: #{_lambda_.36} parent=5 // pred_fallthru
      _
    %p260 = scmp.le.s32.totalorder 1, %s11
    %p261 = scmp.lt.s32.totalorder %s11, 9
    %p262 = pnand %p260, %p261
    %p263 = pneg %p262
    // Predicated region
    $region37: #{_lambda_.36} parent=5 // pred_check
      _
    $region38: #{_lambda_.36} parent=5 // pred_check_branch
      %265 = sbr.rel (%p262) target = $region40
    $region39: #{_lambda_.36} parent=5 // pred_region
      %s266 = ssub.s32 %s11, 1
      %p267 = scmp.lt.s32.totalorder %s20, 1
      %s268 = scalar_select %p267, %s20, 1
      %p269 = scmp.lt.s32.totalorder %s21, 3
      %s270 = scalar_select %p269, %s21, 3
      %s271 = smul.addr %s268, 4
      %s272 = sadd.s32 %s270, %s271
      %s273 = smul.addr %s272, 8
      %s274 = scalar_lea.vmem %s0, %s273
      %p275 = pneg %p51
      %p276 = pneg %p48
      %p277 = scmp.lt.s32.totalorder %s20, 1
      %s278 = scalar_select %p277, %s20, 1
      %p279 = scmp.lt.s32.totalorder %s21, 3
      %s280 = scalar_select %p279, %s21, 3
      %s281 = smul.addr %s278, 4
      %s282 = sadd.s32 %s280, %s281
      %s283 = sadd.s32 %s282, 8
      %s284 = smul.addr %s283, 8
      %s285 = scalar_lea.vmem %s1, %s284
      %p286 = pneg %p79
      %p287 = pneg %p76
      %p288 = scmp.lt.s32.totalorder %s20, 1
      %s289 = scalar_select %p288, %s20, 1
      %p290 = scmp.lt.s32.totalorder %s21, 3
      %s291 = scalar_select %p290, %s21, 3
      %s292 = smul.addr %s289, 4
      %s293 = sadd.s32 %s291, %s292
      %s294 = sadd.s32 %s293, 16
      %s295 = smul.addr %s294, 8
      %s296 = scalar_lea.vmem %s2, %s295
      %p297 = pneg %p107
      %p298 = pneg %p104
      %p299 = scmp.lt.s32.totalorder %s20, 1
      %s300 = scalar_select %p299, %s20, 1
      %p301 = scmp.lt.s32.totalorder %s21, 3
      %s302 = scalar_select %p301, %s21, 3
      %s303 = smul.addr %s300, 4
      %s304 = sadd.s32 %s302, %s303
      %s305 = smul.addr %s304, 8
      %s306 = scalar_lea.vmem %s3, %s305
      %p307 = pneg %p135
      %p308 = pneg %p132
      %p309 = scmp.lt.s32.totalorder %s21, 3
      %s310 = scalar_select %p309, %s21, 3
      %s311 = scalar_lea.vmem %s4, %s310
      %p312 = pneg %p161
      %p313 = pneg %p158
      %p314 = pneg %p189
      %p315 = pneg %p186
      %p316 = scmp.lt.s32.totalorder %s20, 1
      %s317 = scalar_select %p316, %s20, 1
      %p318 = scmp.lt.s32.totalorder %s21, 3
      %s319 = scalar_select %p318, %s21, 3
      %s320 = smul.addr %s317, 4
      %s321 = sadd.s32 %s319, %s320
      %s322 = smul.addr %s321, 8
      %s323 = scalar_lea.vmem %s5, %s322
      %p324 = scmp.lt.s32.totalorder %s20, 1
      %s325 = scalar_select %p324, %s20, 1
      %p326 = scmp.lt.s32.totalorder %s21, 3
      %s327 = scalar_select %p326, %s21, 3
      %s328 = smul.addr %s325, 4
      %s329 = sadd.s32 %s327, %s328
      %s330 = smul.addr %s329, 8
      %s331 = scalar_lea.vmem %s0, %s330
      %p332 = scmp.lt.s32.totalorder %s20, 1
      %s333 = scalar_select %p332, %s20, 1
      %p334 = scmp.lt.s32.totalorder %s21, 3
      %s335 = scalar_select %p334, %s21, 3
      %s336 = smul.addr %s333, 4
      %s337 = sadd.s32 %s335, %s336
      %s338 = sadd.s32 %s337, 8
      %s339 = smul.addr %s338, 8
      %s340 = scalar_lea.vmem %s1, %s339
      %p341 = scmp.lt.s32.totalorder %s20, 1
      %s342 = scalar_select %p341, %s20, 1
      %p343 = scmp.lt.s32.totalorder %s21, 3
      %s344 = scalar_select %p343, %s21, 3
      %s345 = smul.addr %s342, 4
      %s346 = sadd.s32 %s344, %s345
      %s347 = sadd.s32 %s346, 16
      %s348 = smul.addr %s347, 8
      %s349 = scalar_lea.vmem %s2, %s348
      %p350 = scmp.lt.s32.totalorder %s20, 1
      %s351 = scalar_select %p350, %s20, 1
      %p352 = scmp.lt.s32.totalorder %s21, 3
      %s353 = scalar_select %p352, %s21, 3
      %s354 = smul.addr %s351, 4
      %s355 = sadd.s32 %s353, %s354
      %s356 = smul.addr %s355, 8
      %s357 = scalar_lea.vmem %s3, %s356
      %p358 = scmp.lt.s32.totalorder %s21, 3
      %s359 = scalar_select %p358, %s21, 3
      %s360 = scalar_lea.vmem %s4, %s359
      %p361 = scmp.lt.s32.totalorder %s20, 1
      %s362 = scalar_select %p361, %s20, 1
      %p363 = scmp.lt.s32.totalorder %s21, 3
      %s364 = scalar_select %p363, %s21, 3
      %s365 = smul.addr %s362, 4
      %s366 = sadd.s32 %s364, %s365
      %s367 = smul.addr %s366, 8
      %s368 = scalar_lea.vmem %s5, %s367
      %v370 = vld [vmem:[%s331] sm:$0x7f]
      %v371 = vld [vmem:[%s340] sm:$0x7f]
      %v372 = vld [vmem:[%s349] sm:$0x7f]
      %v373 = vld [vmem:[%s360] sm:$0x1]
      %v375 = vlaneseq
      %v376 = vshrl.u32 %v375, 7
      %v377 = vsub.s32 0, %v376
      %v378 = vrot.slane %v373, %v377
      %v380 = vadd.f32 %v370, %v378
      %v381 = vpack.c.bf16 %v380, %v380
      %v382 = vpack.c.bf16 %v371, %v371
      %v383 = vld [vmem:[%s357] sm:$0x7f]
      %vm384 = vcmask 64512
      %v386 = vsel %vm384, %v381, 0
      %v389 = vsel %vm384, %v382, 0
      %391 = vmatprep.subr.bf16.mxu0 0
      %392 = vmatpush1.bf16.xpose.msra.mxu0 0
      %393 = vmatprep.subr.bf16.mxu0 0
      %394 = vmatpush1.bf16.xpose.msra.mxu0 0
      %395 = vmatprep.subr.bf16.mxu0 0
      %396 = vmatpush1.bf16.xpose.msra.mxu0 0
      %397 = vmatprep.subr.bf16.mxu0 0
      %398 = vmatpush1.bf16.xpose.msra.mxu0 0
      %399 = vmatprep.subr.bf16.mxu0 0
      %400 = vmatpush1.bf16.xpose.msra.mxu0 0
      %401 = vmatprep.subr.bf16.mxu0 0
      %402 = vmatpush1.bf16.xpose.msra.mxu0 0
      %403 = vmatprep.subr.bf16.mxu0 0
      %404 = vmatpush1.bf16.xpose.msra.mxu0 0
      %405 = vmatprep.subr.bf16.mxu0 0
      %406 = vmatpush1.bf16.xpose.msra.mxu0 %v389
      %407 = vmatprep.subr.bf16.mxu0 0
      %408 = vmatpush2.bf16.xpose.msra.mxu0 0
      %409 = vmatprep.subr.bf16.mxu0 0
      %410 = vmatpush2.bf16.xpose.msra.mxu0 0
      %411 = vmatprep.subr.bf16.mxu0 0
      %412 = vmatpush2.bf16.xpose.msra.mxu0 0
      %413 = vmatprep.subr.bf16.mxu0 0
      %414 = vmatpush2.bf16.xpose.msra.mxu0 0
      %415 = vmatprep.subr.bf16.mxu0 0
      %416 = vmatpush2.bf16.xpose.msra.mxu0 0
      %417 = vmatprep.subr.bf16.mxu0 0
      %418 = vmatpush2.bf16.xpose.msra.mxu0 0
      %419 = vmatprep.subr.bf16.mxu0 0
      %420 = vmatpush2.bf16.xpose.msra.mxu0 0
      %421 = vmatprep.subr.bf16.mxu0 0
      %422 = vmatpush2.bf16.xpose.msra.mxu0 0
      %423 = vmatprep.mubr.bf16.mxu0 0
      %424 = vmatmul.mubr.bf16.gmra.mxu0 %v386
      %v425 = vpop.f32.mrf.mxu0
      %v426 = vadd.f32 %v383, %v425
      %v427 = vpop.f32.mrf.mxu0
      %v428 = vpop.f32.mrf.mxu0
      %v429 = vpop.f32.mrf.mxu0
      %430 = vdwg.mxu0
      %v431 = vmul.f32 %v426, 0.17677669
      %vm432 = vcmask 55296
      %v433 = vsel %vm432, %v431, -inf
      %434 = vmax.xlane.f32.xlu0 %v433
      %v435 = vpop.xlane.xlu0 %434
      %v436 = vsub.f32 %v431, %v435
      %v437 = vmul.f32 %v436, 1.442695
      %v438 = vpow.pop %v437
      %v439 = vsel %vm432, %v438, 0.0
      %440 = vadd.xlane.f32.xlu0 %v439
      %v441 = vpop.xlane.xlu0 %440
      %v442 = vrcp.pop %v441
      %v443 = vmul.f32 %v438, %v442
      %v444 = vpack.c.bf16 %v443, %v443
      %v445 = vpack.c.bf16 %v372, %v372
      %vm446 = vcmask 56320
      %v448 = vsel %vm446, %v444, 0
      %vm450 = vcmask 1042432
      %vm451 = vcmask 1043456
      %v452 = vsel %vm450, 4294967295, 65535
      %v453 = vsel %vm451, %v452, 0
      %v455 = vand.u32 %v445, %v453
      %457 = vmatprep.subr.bf16.mxu0 0
      %458 = vmatpush1.bf16.msra.mxu0 0
      %459 = vmatprep.subr.bf16.mxu0 0
      %460 = vmatpush1.bf16.msra.mxu0 0
      %461 = vmatprep.subr.bf16.mxu0 0
      %462 = vmatpush1.bf16.msra.mxu0 0
      %463 = vmatprep.subr.bf16.mxu0 0
      %464 = vmatpush1.bf16.msra.mxu0 0
      %465 = vmatprep.subr.bf16.mxu0 0
      %466 = vmatpush1.bf16.msra.mxu0 0
      %467 = vmatprep.subr.bf16.mxu0 0
      %468 = vmatpush1.bf16.msra.mxu0 0
      %469 = vmatprep.subr.bf16.mxu0 0
      %470 = vmatpush1.bf16.msra.mxu0 0
      %471 = vmatprep.subr.bf16.mxu0 0
      %472 = vmatpush1.bf16.msra.mxu0 %v455
      %473 = vmatprep.subr.bf16.mxu0 0
      %474 = vmatpush2.bf16.msra.mxu0 0
      %475 = vmatprep.subr.bf16.mxu0 0
      %476 = vmatpush2.bf16.msra.mxu0 0
      %477 = vmatprep.subr.bf16.mxu0 0
      %478 = vmatpush2.bf16.msra.mxu0 0
      %479 = vmatprep.subr.bf16.mxu0 0
      %480 = vmatpush2.bf16.msra.mxu0 0
      %481 = vmatprep.subr.bf16.mxu0 0
      %482 = vmatpush2.bf16.msra.mxu0 0
      %483 = vmatprep.subr.bf16.mxu0 0
      %484 = vmatpush2.bf16.msra.mxu0 0
      %485 = vmatprep.subr.bf16.mxu0 0
      %486 = vmatpush2.bf16.msra.mxu0 0
      %487 = vmatprep.subr.bf16.mxu0 0
      %488 = vmatpush2.bf16.msra.mxu0 0
      %489 = vmatprep.mubr.bf16.mxu0 0
      %490 = vmatmul.mubr.bf16.gmra.mxu0 %v448
      %v491 = vpop.f32.mrf.mxu0
      %v492 = vadd.f32 0.0, %v491
      %v493 = vpop.f32.mrf.mxu0
      %v494 = vpop.f32.mrf.mxu0
      %v495 = vpop.f32.mrf.mxu0
      %496 = vdwg.mxu0
      %vm497 = vcmask 63488
      %498 = vst.msk [vmem:[%s368] sm:$0x7f] %vm497, %v492
      %p499 = scmp.lt.s32.totalorder %s20, 1
      %s500 = scalar_select %p499, %s20, 1
      %p501 = scmp.lt.s32.totalorder %s21, 3
      %s502 = scalar_select %p501, %s21, 3
      %s503 = smul.addr %s500, 4
      %s504 = sadd.s32 %s502, %s503
      %s505 = smul.addr %s504, 8
      %s506 = scalar_lea.vmem %s5, %s505
      // Predicated region
      $region41: #{_lambda_.36} parent=39 // pred_check
        %p507 = pneg %p186
      $region42: #{_lambda_.36} parent=39 // pred_check_branch
        %509 = sbr.rel (%p507) target = $region44
      $region43: #{_lambda_.36} parent=39 // pred_region
        _
      $region44: #{_lambda_.36} parent=39 // pred_fallthru
        _
    $region40: #{_lambda_.36} parent=5 // pred_fallthru
      _
    %p510 = scmp.le.s32.totalorder 2, %s11
    // Predicated region
    $region45: #{_lambda_.36} parent=5 // pred_check
      %p511 = pneg %p510
    $region46: #{_lambda_.36} parent=5 // pred_check_branch
      %513 = sbr.rel (%p511) target = $region48
    $region47: #{_lambda_.36} parent=5 // pred_region
      %s514 = ssub.s32 %s11, 2
      // Predicated region
      $region49: #{_lambda_.36} parent=47 // pred_check
        %p515 = pneg %p192
      $region50: #{_lambda_.36} parent=47 // pred_check_branch
        %517 = sbr.rel (%p515) target = $region52
      $region51: #{_lambda_.36} parent=47 // pred_region
        %p518 = scmp.lt.s32.totalorder %s22, 1
        %s519 = scalar_select %p518, %s22, 1
        %p520 = scmp.lt.s32.totalorder %s23, 3
        %s521 = scalar_select %p520, %s23, 3
        %s522 = smul.addr %s519, 4
        %s523 = sadd.s32 %s521, %s522
        %s524 = smul.addr %s523, 8
        %s525 = scalar_lea.vmem %s5, %s524
      $region52: #{_lambda_.36} parent=47 // pred_fallthru
        _
    $region48: #{_lambda_.36} parent=5 // pred_fallthru
      _
  $region6: #{_lambda_.36} parent=0 // loop_footer
    %s15 = sadd.s32 1, %s11
  $region7: #{_lambda_.36} parent=0 // loop_footer_branch
    %10 = sbr.rel target = $region3
  $region8: #{_lambda_.36} parent=0 // loop_exit
    _

// kernel: _lambda_.38
$region0: #{_lambda_.38}
  #allocation0 [shape = 'u32[]', space=smem, size = 0x4, offset = 0x4, fixed_abs, tag = 'smem constant byte address 0x4 - core index']
  #allocation1 [shape = 'u32[144,128]{1,0:T(1,128)}', space=vmem, size = 0x12000, scoped, tag = 'internal scratch']
  #allocation2 [shape = 'f32[14,64]{1,0:T(8,128)}', space=vmem, size = 0x2000, scoped, tag = 'scratch operand']
  %s0 = inlined_call_operand.vmem [shape: f32[14,32], index: 0, kind: input, shape index: {}]
  %s1 = inlined_call_operand.vmem [shape: bf16[32,64], index: 1, kind: input, shape index: {}]
  %s2 = inlined_call_operand.vmem [shape: f32[1,64], index: 2, kind: input, shape index: {}]
  %s3 = inlined_call_operand.vmem [shape: f32[1,32], index: 3, kind: input, shape index: {}]
  %s4 = inlined_call_operand.vmem [shape: f32[1,32], index: 4, kind: input, shape index: {}]
  %s5 = inlined_call_operand.vmem [shape: f32[14,32], index: 5, kind: output, shape index: {}]
  %s6 = sld [smem:[#allocation0]]
  $region38: #{_lambda_.38} parent=0
    _
  %s8 = ssub.s32 1, %s6
  %s9 = scalar_select 0, %s8, %s6
  // Predicated region
  $region2: #{_lambda_.38} parent=0 // pred_check
    _
  $region3: #{_lambda_.38} parent=0 // pred_check_branch
    %11 = sbr.rel (0) target = $region5
  $region4: #{_lambda_.38} parent=0 // pred_region
    _
  $region5: #{_lambda_.38} parent=0 // pred_fallthru
    _
  // Predicated region
  $region6: #{_lambda_.38} parent=0 // pred_check
    _
  $region7: #{_lambda_.38} parent=0 // pred_check_branch
    %13 = sbr.rel (0) target = $region9
  $region8: #{_lambda_.38} parent=0 // pred_region
    _
  $region9: #{_lambda_.38} parent=0 // pred_fallthru
    _
  // Predicated region
  $region10: #{_lambda_.38} parent=0 // pred_check
    _
  $region11: #{_lambda_.38} parent=0 // pred_check_branch
    %15 = sbr.rel (0) target = $region13
  $region12: #{_lambda_.38} parent=0 // pred_region
    _
  $region13: #{_lambda_.38} parent=0 // pred_fallthru
    _
  // Predicated region
  $region14: #{_lambda_.38} parent=0 // pred_check
    _
  $region15: #{_lambda_.38} parent=0 // pred_check_branch
    %17 = sbr.rel (0) target = $region17
  $region16: #{_lambda_.38} parent=0 // pred_region
    _
  $region17: #{_lambda_.38} parent=0 // pred_fallthru
    _
  // Predicated region
  $region18: #{_lambda_.38} parent=0 // pred_check
    _
  $region19: #{_lambda_.38} parent=0 // pred_check_branch
    %19 = sbr.rel (0) target = $region21
  $region20: #{_lambda_.38} parent=0 // pred_region
    _
  $region21: #{_lambda_.38} parent=0 // pred_fallthru
    _
  %p21 = scmp.eq.s32.totalorder 0, 0
  // Predicated region
  $region22: #{_lambda_.38} parent=0 // pred_check
    %p22 = pneg %p21
  $region23: #{_lambda_.38} parent=0 // pred_check_branch
    %24 = sbr.rel (%p22) target = $region25
  $region24: #{_lambda_.38} parent=0 // pred_region
    %vm25 = vcmask 523264
    %26 = vst.msk [vmem:[#allocation2] sm:$0xff] %vm25, 0.0
    %vm27 = vcmask 521216
    %28 = vst.msk [vmem:[#allocation2 + $0x8] sm:$0x3f] %vm27, 0.0
  $region25: #{_lambda_.38} parent=0 // pred_fallthru
    _
  %v29 = vld [vmem:[%s0] sm:$0xff]
  %v30 = vld [vmem:[%s0 + $0x8] sm:$0x3f]
  %vm31 = vcmask 261120
  %v32 = vsel %vm31, %v29, 0.0
  %33 = vadd.xlane.f32.xlu0 %v32
  %v34 = vpop.xlane.xlu0 %33
  %vm35 = vcmask 259072
  %v36 = vsel %vm35, %v30, 0.0
  %37 = vadd.xlane.f32.xlu0 %v36
  %v38 = vpop.xlane.xlu0 %37
  %v39 = vrcp.pop 32.0
  %v40 = vmul.f32 %v34, %v39
  %v41 = vmul.f32 %v38, %v39
  %v42 = vsub.f32 %v29, %v40
  %v43 = vsub.f32 %v30, %v41
  %v44 = vmul.f32 %v42, %v42
  %v45 = vmul.f32 %v43, %v43
  %v46 = vsel %vm31, %v44, 0.0
  %47 = vadd.xlane.f32.xlu0 %v46
  %v48 = vpop.xlane.xlu0 %47
  %v49 = vsel %vm35, %v45, 0.0
  %50 = vadd.xlane.f32.xlu0 %v49
  %v51 = vpop.xlane.xlu0 %50
  %v52 = vmul.f32 %v48, %v39
  %v53 = vmul.f32 %v51, %v39
  %v54 = vadd.f32 %v52, 1e-05
  %v55 = vadd.f32 %v53, 1e-05
  %v56 = vrsqrt.pop %v54
  %v57 = vrsqrt.pop %v55
  %v58 = vmul.f32 %v42, %v56
  %v59 = vmul.f32 %v43, %v57
  %v60 = vld [vmem:[%s3] sm:$0x1]
  %v62 = vlaneseq
  %v63 = vshrl.u32 %v62, 7
  %v64 = vsub.s32 0, %v63
  %v65 = vrot.slane %v60, %v64
  %v67 = vmul.f32 %v58, %v65
  %v68 = vmul.f32 %v59, %v65
  %v69 = vld [vmem:[%s4] sm:$0x1]
  %v71 = vlaneseq
  %v72 = vshrl.u32 %v71, 7
  %v73 = vsub.s32 0, %v72
  %v74 = vrot.slane %v69, %v73
  %v76 = vadd.f32 %v67, %v74
  %v77 = vadd.f32 %v68, %v74
  %v78 = vld [vmem:[#allocation2] sm:$0xff]
  %v79 = vld [vmem:[#allocation2 + $0x8] sm:$0x3f]
  %v80 = vpack.c.bf16 %v77, %v76
  %v81 = vld [vmem:[%s1] sm:$0xf]
  %v82 = vld [vmem:[%s1 + $0x4] sm:$0xf]
  %v83 = vld [vmem:[%s1 + $0x8] sm:$0xf]
  %v84 = vld [vmem:[%s1 + $0xc] sm:$0xf]
  %v89 = vunpack.c.l.b16 %v81
  %v90 = vunpack.c.l.b16 %v82
  %v91 = vunpack.c.l.b16 %v83
  %v92 = vunpack.c.l.b16 %v84
  %v93 = vpack.c.b16 %v90, %v89
  %v94 = vpack.c.b16 %v92, %v91
  %v98 = vsel %vm31, %v80, 0
  %100 = vmatprep.subr.bf16.mxu0 0
  %101 = vmatpush1.bf16.msra.mxu0 0
  %102 = vmatprep.subr.bf16.mxu0 0
  %103 = vmatpush1.bf16.msra.mxu0 0
  %104 = vmatprep.subr.bf16.mxu0 0
  %105 = vmatpush1.bf16.msra.mxu0 0
  %106 = vmatprep.subr.bf16.mxu0 0
  %107 = vmatpush1.bf16.msra.mxu0 0
  %108 = vmatprep.subr.bf16.mxu0 0
  %109 = vmatpush1.bf16.msra.mxu0 0
  %110 = vmatprep.subr.bf16.mxu0 0
  %111 = vmatpush1.bf16.msra.mxu0 0
  %112 = vmatprep.subr.bf16.mxu0 0
  %113 = vmatpush1.bf16.msra.mxu0 %v94
  %114 = vmatprep.subr.bf16.mxu0 0
  %115 = vmatpush1.bf16.msra.mxu0 %v93
  %116 = vmatprep.subr.bf16.mxu0 0
  %117 = vmatpush2.bf16.msra.mxu0 0
  %118 = vmatprep.subr.bf16.mxu0 0
  %119 = vmatpush2.bf16.msra.mxu0 0
  %120 = vmatprep.subr.bf16.mxu0 0
  %121 = vmatpush2.bf16.msra.mxu0 0
  %122 = vmatprep.subr.bf16.mxu0 0
  %123 = vmatpush2.bf16.msra.mxu0 0
  %124 = vmatprep.subr.bf16.mxu0 0
  %125 = vmatpush2.bf16.msra.mxu0 0
  %126 = vmatprep.subr.bf16.mxu0 0
  %127 = vmatpush2.bf16.msra.mxu0 0
  %128 = vmatprep.subr.bf16.mxu0 0
  %129 = vmatpush2.bf16.msra.mxu0 0
  %130 = vmatprep.subr.bf16.mxu0 0
  %131 = vmatpush2.bf16.msra.mxu0 0
  %132 = vmatprep.mubr.bf16.mxu0 0
  %133 = vmatmul.mubr.bf16.gmra.mxu0 %v98
  %v134 = vpop.f32.mrf.mxu0
  %v135 = vadd.f32 0.0, %v134
  %v136 = vpop.f32.mrf.mxu0
  %v137 = vpop.f32.mrf.mxu0
  %v138 = vadd.f32 0.0, %v137
  %v139 = vpop.f32.mrf.mxu0
  %140 = vdwg.mxu0
  %v141 = vadd.f32 %v78, %v135
  %v142 = vadd.f32 %v79, %v138
  %vm143 = vcmask 523264
  %144 = vst.msk [vmem:[#allocation2] sm:$0xff] %vm143, %v141
  %vm145 = vcmask 521216
  %146 = vst.msk [vmem:[#allocation2 + $0x8] sm:$0x3f] %vm145, %v142
  // Predicated region
  $region26: #{_lambda_.38} parent=0 // pred_check
    %p147 = pneg %p21
  $region27: #{_lambda_.38} parent=0 // pred_check_branch
    %149 = sbr.rel (%p147) target = $region29
  $region28: #{_lambda_.38} parent=0 // pred_region
    %v150 = vld [vmem:[#allocation2] sm:$0xff]
    %v151 = vld [vmem:[#allocation2 + $0x8] sm:$0x3f]
    %v152 = vld [vmem:[%s2] sm:$0x1]
    %v154 = vlaneseq
    %v155 = vshrl.u32 %v154, 7
    %v156 = vsub.s32 0, %v155
    %v157 = vrot.slane %v152, %v156
    %v159 = vadd.f32 %v150, %v157
    %v160 = vadd.f32 %v151, %v157
    %v161 = vxor.u32 %v159, 2147483648
    %v162 = vxor.u32 %v160, 2147483648
    %v163 = vmul.f32 %v161, 1.442695
    %v164 = vpow.pop %v163
    %v165 = vmul.f32 %v162, 1.442695
    %v166 = vpow.pop %v165
    %v167 = vadd.f32 %v164, 1.0
    %v168 = vadd.f32 %v166, 1.0
    %v169 = vrcp.pop %v167
    %v170 = vmul.f32 1.0, %v169
    %v171 = vrcp.pop %v168
    %v172 = vmul.f32 1.0, %v171
    %175 = vrot.lane.b32.xlu0 %v170, 96
    %v176 = vpop.permute.xlu0 %175
    %177 = vrot.lane.b32.xlu0 %v172, 96
    %v178 = vpop.permute.xlu0 %177
    %v181 = vmul.f32 %v159, %v176
    %v182 = vmul.f32 %v160, %v178
    %183 = vst.msk [vmem:[%s5] sm:$0xff] %vm31, %v181
    %184 = vst.msk [vmem:[%s5 + $0x8] sm:$0x3f] %vm35, %v182
  $region29: #{_lambda_.38} parent=0 // pred_fallthru
    _
  // Predicated region
  $region30: #{_lambda_.38} parent=0 // pred_check
    _
  $region31: #{_lambda_.38} parent=0 // pred_check_branch
    %186 = sbr.rel (0) target = $region33
  $region32: #{_lambda_.38} parent=0 // pred_region
    _
  $region33: #{_lambda_.38} parent=0 // pred_fallthru
    _
  // Predicated region
  $region34: #{_lambda_.38} parent=0 // pred_check
    _
  $region35: #{_lambda_.38} parent=0 // pred_check_branch
    %188 = sbr.rel (0) target = $region37
  $region36: #{_lambda_.38} parent=0 // pred_region
    _
  $region37: #{_lambda_.38} parent=0 // pred_fallthru
    _

// kernel: _lambda_.35
$region0: #{_lambda_.35}
  #allocation0 [shape = 'u32[]', space=smem, size = 0x4, offset = 0x4, fixed_abs, tag = 'smem constant byte address 0x4 - core index']
  #allocation1 [shape = 'u32[144,128]{1,0:T(1,128)}', space=vmem, size = 0x12000, scoped, tag = 'internal scratch']
  %s0 = inlined_call_operand.vmem [shape: f32[3,2,4,7,8], index: 0, kind: input, shape index: {}]
  %s1 = inlined_call_operand.vmem [shape: f32[4,7,8], index: 1, kind: input, shape index: {}]
  %s2 = inlined_call_operand.vmem [shape: f32[4,1,8], index: 2, kind: input, shape index: {}]
  %s3 = inlined_call_operand.vmem [shape: f32[2,4,7,7], index: 3, kind: output, shape index: {}]
  %s4 = sld [smem:[#allocation0]]
  $region45: #{_lambda_.35} parent=0
    _
  %s6 = ssub.s32 1, %s4
  %s7 = scalar_select 0, %s6, %s4
  loop: start=0, step=1, limit=10
  $region2: #{_lambda_.35} parent=0 // loop_pre_header
    _
  $region3: #{_lambda_.35} parent=0 // loop_header
    %s9 = sphi 0, %s13
    %p10 = scmp.ge.s32.totalorder %s9, 10
    %s16 = sphi 0, %s28
    %s17 = sphi 0, %s24
    %s18 = sphi 0, %s16
    %s19 = sphi 0, %s17
    %s20 = sphi 0, %s18
    %s21 = sphi 0, %s19
    %s33 = sphi 0, %s35
    %s36 = sphi 0, %s33
    %s37 = sphi 0, %s36
    %s53 = sphi 0, %s37
    %s59 = sphi 0, %s61
    %s62 = sphi 0, %s59
    %s63 = sphi 0, %s62
    %s79 = sphi 0, %s63
    %s85 = sphi 0, %s87
    %s88 = sphi 0, %s85
    %s89 = sphi 0, %s88
    %s105 = sphi 0, %s89
    %s113 = sphi 0, %s115
    %s116 = sphi 0, %s113
    %s117 = sphi 0, %s116
    %s133 = sphi 0, %s117
  $region4: #{_lambda_.35} parent=0 // loop_header_branch
    %12 = sbr.rel (%p10) target = $region8
  $region5: #{_lambda_.35} parent=0 // loop_body
    %s14 = ssub.s32 %s9, 1
    %s15 = ssub.s32 %s9, 2
    %s22 = sadd.s32 1, %s17
    %p23 = scmp.ge.s32.totalorder %s22, 4
    %s24 = scalar_select %p23, 0, %s22
    %s25 = sadd.s32 1, %s16
    %s26 = scalar_select %p23, %s25, %s16
    %p27 = scmp.ge.s32.totalorder %s26, 2
    %s28 = scalar_select %p27, 0, %s26
    %s29 = ssub.s32 %s16, %s28
    %s30 = ssub.s32 %s17, %s24
    %s31 = sor.u32 %s29, %s30
    %p32 = scmp.eq.s32.totalorder %s31, 0
    %s34 = sadd.s32 %s33, 1
    %s35 = scalar_select %p32, %s33, %s34
    %p38 = pneg %p32
    %p39 = scmp.eq.s32.totalorder %s9, 7
    %p40 = por %p38, %p39
    %p41 = scmp.ne.s32.totalorder %s33, %s36
    %p42 = scmp.eq.s32.totalorder %s9, 0
    %p43 = por %p41, %p42
    %p44 = scmp.ne.s32.totalorder %s33, %s36
    %p45 = scmp.eq.s32.totalorder %s14, 7
    %p46 = por %p44, %p45
    %p47 = scmp.ne.s32.totalorder %s36, %s37
    %p48 = scmp.eq.s32.totalorder %s14, 0
    %p49 = por %p47, %p48
    %p50 = scmp.ne.s32.totalorder %s36, %s37
    %p51 = scmp.eq.s32.totalorder %s15, 7
    %p52 = por %p50, %p51
    %p54 = scmp.ne.s32.totalorder %s37, %s53
    %p55 = scmp.eq.s32.totalorder %s15, 0
    %p56 = por %p54, %p55
    %s57 = ssub.s32 %s17, %s24
    %p58 = scmp.eq.s32.totalorder %s57, 0
    %s60 = sadd.s32 %s59, 1
    %s61 = scalar_select %p58, %s59, %s60
    %p64 = pneg %p58
    %p65 = scmp.eq.s32.totalorder %s9, 7
    %p66 = por %p64, %p65
    %p67 = scmp.ne.s32.totalorder %s59, %s62
    %p68 = scmp.eq.s32.totalorder %s9, 0
    %p69 = por %p67, %p68
    %p70 = scmp.ne.s32.totalorder %s59, %s62
    %p71 = scmp.eq.s32.totalorder %s14, 7
    %p72 = por %p70, %p71
    %p73 = scmp.ne.s32.totalorder %s62, %s63
    %p74 = scmp.eq.s32.totalorder %s14, 0
    %p75 = por %p73, %p74
    %p76 = scmp.ne.s32.totalorder %s62, %s63
    %p77 = scmp.eq.s32.totalorder %s15, 7
    %p78 = por %p76, %p77
    %p80 = scmp.ne.s32.totalorder %s63, %s79
    %p81 = scmp.eq.s32.totalorder %s15, 0
    %p82 = por %p80, %p81
    %s83 = ssub.s32 %s17, %s24
    %p84 = scmp.eq.s32.totalorder %s83, 0
    %s86 = sadd.s32 %s85, 1
    %s87 = scalar_select %p84, %s85, %s86
    %p90 = pneg %p84
    %p91 = scmp.eq.s32.totalorder %s9, 7
    %p92 = por %p90, %p91
    %p93 = scmp.ne.s32.totalorder %s85, %s88
    %p94 = scmp.eq.s32.totalorder %s9, 0
    %p95 = por %p93, %p94
    %p96 = scmp.ne.s32.totalorder %s85, %s88
    %p97 = scmp.eq.s32.totalorder %s14, 7
    %p98 = por %p96, %p97
    %p99 = scmp.ne.s32.totalorder %s88, %s89
    %p100 = scmp.eq.s32.totalorder %s14, 0
    %p101 = por %p99, %p100
    %p102 = scmp.ne.s32.totalorder %s88, %s89
    %p103 = scmp.eq.s32.totalorder %s15, 7
    %p104 = por %p102, %p103
    %p106 = scmp.ne.s32.totalorder %s89, %s105
    %p107 = scmp.eq.s32.totalorder %s15, 0
    %p108 = por %p106, %p107
    %s109 = ssub.s32 %s16, %s28
    %s110 = ssub.s32 %s17, %s24
    %s111 = sor.u32 %s109, %s110
    %p112 = scmp.eq.s32.totalorder %s111, 0
    %s114 = sadd.s32 %s113, 1
    %s115 = scalar_select %p112, %s113, %s114
    %p118 = pneg %p112
    %p119 = scmp.eq.s32.totalorder %s9, 7
    %p120 = por %p118, %p119
    %p121 = scmp.ne.s32.totalorder %s113, %s116
    %p122 = scmp.eq.s32.totalorder %s9, 0
    %p123 = por %p121, %p122
    %p124 = scmp.ne.s32.totalorder %s113, %s116
    %p125 = scmp.eq.s32.totalorder %s14, 7
    %p126 = por %p124, %p125
    %p127 = scmp.ne.s32.totalorder %s116, %s117
    %p128 = scmp.eq.s32.totalorder %s14, 0
    %p129 = por %p127, %p128
    %p130 = scmp.ne.s32.totalorder %s116, %s117
    %p131 = scmp.eq.s32.totalorder %s15, 7
    %p132 = por %p130, %p131
    %p134 = scmp.ne.s32.totalorder %s117, %s133
    %p135 = scmp.eq.s32.totalorder %s15, 0
    %p136 = por %p134, %p135
    %p137 = scmp.le.s32.totalorder 1, %s9
    %p138 = scmp.lt.s32.totalorder %s9, 9
    %p139 = pnand %p137, %p138
    %p140 = pneg %p139
    // Predicated region
    $region9: #{_lambda_.35} parent=5 // pred_check
      _
    $region10: #{_lambda_.35} parent=5 // pred_check_branch
      %142 = sbr.rel (%p139) target = $region12
    $region11: #{_lambda_.35} parent=5 // pred_region
      %s143 = ssub.s32 %s9, 1
    $region12: #{_lambda_.35} parent=5 // pred_fallthru
      _
    %p144 = scmp.lt.s32.totalorder %s9, 8
    // Predicated region
    $region13: #{_lambda_.35} parent=5 // pred_check
      %p145 = pneg %p144
    $region14: #{_lambda_.35} parent=5 // pred_check_branch
      %147 = sbr.rel (%p145) target = $region16
    $region15: #{_lambda_.35} parent=5 // pred_region
      // Predicated region
      $region17: #{_lambda_.35} parent=15 // pred_check
        %p148 = pneg %p43
      $region18: #{_lambda_.35} parent=15 // pred_check_branch
        %150 = sbr.rel (%p148) target = $region20
      $region19: #{_lambda_.35} parent=15 // pred_region
        %p151 = scmp.lt.s32.totalorder %s16, 1
        %s152 = scalar_select %p151, %s16, 1
        %p153 = scmp.lt.s32.totalorder %s17, 3
        %s154 = scalar_select %p153, %s17, 3
        %s155 = smul.addr %s152, 4
        %s156 = sadd.s32 %s154, %s155
        %s157 = smul.addr %s156, 8
        %s158 = scalar_lea.vmem %s0, %s157
      $region20: #{_lambda_.35} parent=15 // pred_fallthru
        _
      // Predicated region
      $region21: #{_lambda_.35} parent=15 // pred_check
        %p159 = pneg %p69
      $region22: #{_lambda_.35} parent=15 // pred_check_branch
        %161 = sbr.rel (%p159) target = $region24
      $region23: #{_lambda_.35} parent=15 // pred_region
        %p162 = scmp.lt.s32.totalorder %s17, 3
        %s163 = scalar_select %p162, %s17, 3
        %s164 = smul.addr %s163, 8
        %s165 = scalar_lea.vmem %s1, %s164
      $region24: #{_lambda_.35} parent=15 // pred_fallthru
        _
      // Predicated region
      $region25: #{_lambda_.35} parent=15 // pred_check
        %p166 = pneg %p95
      $region26: #{_lambda_.35} parent=15 // pred_check_branch
        %168 = sbr.rel (%p166) target = $region28
      $region27: #{_lambda_.35} parent=15 // pred_region
        %p169 = scmp.lt.s32.totalorder %s17, 3
        %s170 = scalar_select %p169, %s17, 3
        %s171 = scalar_lea.vmem %s2, %s170
      $region28: #{_lambda_.35} parent=15 // pred_fallthru
        _
    $region16: #{_lambda_.35} parent=5 // pred_fallthru
      _
    %p172 = scmp.le.s32.totalorder 1, %s9
    %p173 = scmp.lt.s32.totalorder %s9, 9
    %p174 = pnand %p172, %p173
    %p175 = pneg %p174
    // Predicated region
    $region29: #{_lambda_.35} parent=5 // pred_check
      _
    $region30: #{_lambda_.35} parent=5 // pred_check_branch
      %177 = sbr.rel (%p174) target = $region32
    $region31: #{_lambda_.35} parent=5 // pred_region
      %s178 = ssub.s32 %s9, 1
      %p179 = scmp.lt.s32.totalorder %s18, 1
      %s180 = scalar_select %p179, %s18, 1
      %p181 = scmp.lt.s32.totalorder %s19, 3
      %s182 = scalar_select %p181, %s19, 3
      %s183 = smul.addr %s180, 4
      %s184 = sadd.s32 %s182, %s183
      %s185 = smul.addr %s184, 8
      %s186 = scalar_lea.vmem %s0, %s185
      %p187 = pneg %p49
      %p188 = pneg %p46
      %p189 = scmp.lt.s32.totalorder %s19, 3
      %s190 = scalar_select %p189, %s19, 3
      %s191 = smul.addr %s190, 8
      %s192 = scalar_lea.vmem %s1, %s191
      %p193 = pneg %p75
      %p194 = pneg %p72
      %p195 = scmp.lt.s32.totalorder %s19, 3
      %s196 = scalar_select %p195, %s19, 3
      %s197 = scalar_lea.vmem %s2, %s196
      %p198 = pneg %p101
      %p199 = pneg %p98
      %p200 = pneg %p129
      %p201 = pneg %p126
      %p202 = scmp.lt.s32.totalorder %s18, 1
      %s203 = scalar_select %p202, %s18, 1
      %p204 = scmp.lt.s32.totalorder %s19, 3
      %s205 = scalar_select %p204, %s19, 3
      %s206 = smul.addr %s203, 4
      %s207 = sadd.s32 %s205, %s206
      %s208 = smul.addr %s207, 8
      %s209 = scalar_lea.vmem %s3, %s208
      %p210 = scmp.lt.s32.totalorder %s18, 1
      %s211 = scalar_select %p210, %s18, 1
      %p212 = scmp.lt.s32.totalorder %s19, 3
      %s213 = scalar_select %p212, %s19, 3
      %s214 = smul.addr %s211, 4
      %s215 = sadd.s32 %s213, %s214
      %s216 = smul.addr %s215, 8
      %s217 = scalar_lea.vmem %s0, %s216
      %p218 = scmp.lt.s32.totalorder %s19, 3
      %s219 = scalar_select %p218, %s19, 3
      %s220 = smul.addr %s219, 8
      %s221 = scalar_lea.vmem %s1, %s220
      %p222 = scmp.lt.s32.totalorder %s19, 3
      %s223 = scalar_select %p222, %s19, 3
      %s224 = scalar_lea.vmem %s2, %s223
      %p225 = scmp.lt.s32.totalorder %s18, 1
      %s226 = scalar_select %p225, %s18, 1
      %p227 = scmp.lt.s32.totalorder %s19, 3
      %s228 = scalar_select %p227, %s19, 3
      %s229 = smul.addr %s226, 4
      %s230 = sadd.s32 %s228, %s229
      %s231 = smul.addr %s230, 8
      %s232 = scalar_lea.vmem %s3, %s231
      %v234 = vld [vmem:[%s217] sm:$0x7f]
      %v235 = vld [vmem:[%s224] sm:$0x1]
      %v237 = vlaneseq
      %v238 = vshrl.u32 %v237, 7
      %v239 = vsub.s32 0, %v238
      %v240 = vrot.slane %v235, %v239
      %v242 = vadd.f32 %v234, %v240
      %v243 = vpack.c.bf16 %v242, %v242
      %v244 = vld [vmem:[%s221] sm:$0x7f]
      %v245 = vpack.c.bf16 %v244, %v244
      %vm246 = vcmask 64512
      %v248 = vsel %vm246, %v243, 0
      %v251 = vsel %vm246, %v245, 0
      %253 = vmatprep.subr.bf16.mxu0 0
      %254 = vmatpush1.bf16.xpose.msra.mxu0 0
      %255 = vmatprep.subr.bf16.mxu0 0
      %256 = vmatpush1.bf16.xpose.msra.mxu0 0
      %257 = vmatprep.subr.bf16.mxu0 0
      %258 = vmatpush1.bf16.xpose.msra.mxu0 0
      %259 = vmatprep.subr.bf16.mxu0 0
      %260 = vmatpush1.bf16.xpose.msra.mxu0 0
      %261 = vmatprep.subr.bf16.mxu0 0
      %262 = vmatpush1.bf16.xpose.msra.mxu0 0
      %263 = vmatprep.subr.bf16.mxu0 0
      %264 = vmatpush1.bf16.xpose.msra.mxu0 0
      %265 = vmatprep.subr.bf16.mxu0 0
      %266 = vmatpush1.bf16.xpose.msra.mxu0 0
      %267 = vmatprep.subr.bf16.mxu0 0
      %268 = vmatpush1.bf16.xpose.msra.mxu0 %v251
      %269 = vmatprep.subr.bf16.mxu0 0
      %270 = vmatpush2.bf16.xpose.msra.mxu0 0
      %271 = vmatprep.subr.bf16.mxu0 0
      %272 = vmatpush2.bf16.xpose.msra.mxu0 0
      %273 = vmatprep.subr.bf16.mxu0 0
      %274 = vmatpush2.bf16.xpose.msra.mxu0 0
      %275 = vmatprep.subr.bf16.mxu0 0
      %276 = vmatpush2.bf16.xpose.msra.mxu0 0
      %277 = vmatprep.subr.bf16.mxu0 0
      %278 = vmatpush2.bf16.xpose.msra.mxu0 0
      %279 = vmatprep.subr.bf16.mxu0 0
      %280 = vmatpush2.bf16.xpose.msra.mxu0 0
      %281 = vmatprep.subr.bf16.mxu0 0
      %282 = vmatpush2.bf16.xpose.msra.mxu0 0
      %283 = vmatprep.subr.bf16.mxu0 0
      %284 = vmatpush2.bf16.xpose.msra.mxu0 0
      %285 = vmatprep.mubr.bf16.mxu0 0
      %286 = vmatmul.mubr.bf16.gmra.mxu0 %v248
      %v287 = vpop.f32.mrf.mxu0
      %v288 = vadd.f32 0.0, %v287
      %v289 = vpop.f32.mrf.mxu0
      %v290 = vpop.f32.mrf.mxu0
      %v291 = vpop.f32.mrf.mxu0
      %292 = vdwg.mxu0
      %vm293 = vcmask 55296
      %294 = vst.msk [vmem:[%s232] sm:$0x7f] %vm293, %v288
      %p295 = scmp.lt.s32.totalorder %s18, 1
      %s296 = scalar_select %p295, %s18, 1
      %p297 = scmp.lt.s32.totalorder %s19, 3
      %s298 = scalar_select %p297, %s19, 3
      %s299 = smul.addr %s296, 4
      %s300 = sadd.s32 %s298, %s299
      %s301 = smul.addr %s300, 8
      %s302 = scalar_lea.vmem %s3, %s301
      // Predicated region
      $region33: #{_lambda_.35} parent=31 // pred_check
        %p303 = pneg %p126
      $region34: #{_lambda_.35} parent=31 // pred_check_branch
        %305 = sbr.rel (%p303) target = $region36
      $region35: #{_lambda_.35} parent=31 // pred_region
        _
      $region36: #{_lambda_.35} parent=31 // pred_fallthru
        _
    $region32: #{_lambda_.35} parent=5 // pred_fallthru
      _
    %p306 = scmp.le.s32.totalorder 2, %s9
    // Predicated region
    $region37: #{_lambda_.35} parent=5 // pred_check
      %p307 = pneg %p306
    $region38: #{_lambda_.35} parent=5 // pred_check_branch
      %309 = sbr.rel (%p307) target = $region40
    $region39: #{_lambda_.35} parent=5 // pred_region
      %s310 = ssub.s32 %s9, 2
      // Predicated region
      $region41: #{_lambda_.35} parent=39 // pred_check
        %p311 = pneg %p132
      $region42: #{_lambda_.35} parent=39 // pred_check_branch
        %313 = sbr.rel (%p311) target = $region44
      $region43: #{_lambda_.35} parent=39 // pred_region
        %p314 = scmp.lt.s32.totalorder %s20, 1
        %s315 = scalar_select %p314, %s20, 1
        %p316 = scmp.lt.s32.totalorder %s21, 3
        %s317 = scalar_select %p316, %s21, 3
        %s318 = smul.addr %s315, 4
        %s319 = sadd.s32 %s317, %s318
        %s320 = smul.addr %s319, 8
        %s321 = scalar_lea.vmem %s3, %s320
      $region44: #{_lambda_.35} parent=39 // pred_fallthru
        _
    $region40: #{_lambda_.35} parent=5 // pred_fallthru
      _
  $region6: #{_lambda_.35} parent=0 // loop_footer
    %s13 = sadd.s32 1, %s9
  $region7: #{_lambda_.35} parent=0 // loop_footer_branch
    %8 = sbr.rel target = $region3
  $region8: #{_lambda_.35} parent=0 // loop_exit
    _

// kernel: _lambda_.37
$region0: #{_lambda_.37}
  #allocation0 [shape = 'u32[]', space=smem, size = 0x4, offset = 0x4, fixed_abs, tag = 'smem constant byte address 0x4 - core index']
  #allocation1 [shape = 'u32[144,128]{1,0:T(1,128)}', space=vmem, size = 0x12000, scoped, tag = 'internal scratch']
  #allocation2 [shape = 'f32[14,32]{1,0:T(8,128)}', space=vmem, size = 0x2000, scoped, tag = 'scratch operand']
  %s0 = inlined_call_operand.vmem [shape: f32[14,32], index: 0, kind: input, shape index: {}]
  %s1 = inlined_call_operand.vmem [shape: bf16[32,32], index: 1, kind: input, shape index: {}]
  %s2 = inlined_call_operand.vmem [shape: f32[1,32], index: 2, kind: input, shape index: {}]
  %s3 = inlined_call_operand.vmem [shape: f32[14,32], index: 3, kind: input, shape index: {}]
  %s4 = inlined_call_operand.vmem [shape: f32[14,32], index: 4, kind: output, shape index: {}]
  %s5 = sld [smem:[#allocation0]]
  $region34: #{_lambda_.37} parent=0
    _
  %s7 = ssub.s32 1, %s5
  %s8 = scalar_select 0, %s7, %s5
  // Predicated region
  $region2: #{_lambda_.37} parent=0 // pred_check
    _
  $region3: #{_lambda_.37} parent=0 // pred_check_branch
    %10 = sbr.rel (0) target = $region5
  $region4: #{_lambda_.37} parent=0 // pred_region
    _
  $region5: #{_lambda_.37} parent=0 // pred_fallthru
    _
  // Predicated region
  $region6: #{_lambda_.37} parent=0 // pred_check
    _
  $region7: #{_lambda_.37} parent=0 // pred_check_branch
    %12 = sbr.rel (0) target = $region9
  $region8: #{_lambda_.37} parent=0 // pred_region
    _
  $region9: #{_lambda_.37} parent=0 // pred_fallthru
    _
  // Predicated region
  $region10: #{_lambda_.37} parent=0 // pred_check
    _
  $region11: #{_lambda_.37} parent=0 // pred_check_branch
    %14 = sbr.rel (0) target = $region13
  $region12: #{_lambda_.37} parent=0 // pred_region
    _
  $region13: #{_lambda_.37} parent=0 // pred_fallthru
    _
  // Predicated region
  $region14: #{_lambda_.37} parent=0 // pred_check
    _
  $region15: #{_lambda_.37} parent=0 // pred_check_branch
    %16 = sbr.rel (0) target = $region17
  $region16: #{_lambda_.37} parent=0 // pred_region
    _
  $region17: #{_lambda_.37} parent=0 // pred_fallthru
    _
  %p18 = scmp.eq.s32.totalorder 0, 0
  // Predicated region
  $region18: #{_lambda_.37} parent=0 // pred_check
    %p19 = pneg %p18
  $region19: #{_lambda_.37} parent=0 // pred_check_branch
    %21 = sbr.rel (%p19) target = $region21
  $region20: #{_lambda_.37} parent=0 // pred_region
    %vm22 = vcmask 261120
    %23 = vst.msk [vmem:[#allocation2] sm:$0xff] %vm22, 0.0
    %vm24 = vcmask 259072
    %25 = vst.msk [vmem:[#allocation2 + $0x8] sm:$0x3f] %vm24, 0.0
  $region21: #{_lambda_.37} parent=0 // pred_fallthru
    _
  %v26 = vld [vmem:[%s0] sm:$0xff]
  %v27 = vld [vmem:[%s0 + $0x8] sm:$0x3f]
  %v28 = vld [vmem:[#allocation2] sm:$0xff]
  %v29 = vld [vmem:[#allocation2 + $0x8] sm:$0x3f]
  %v30 = vpack.c.bf16 %v27, %v26
  %v31 = vld [vmem:[%s1] sm:$0xf]
  %v32 = vld [vmem:[%s1 + $0x4] sm:$0xf]
  %v33 = vld [vmem:[%s1 + $0x8] sm:$0xf]
  %v34 = vld [vmem:[%s1 + $0xc] sm:$0xf]
  %v39 = vunpack.c.l.b16 %v31
  %v40 = vunpack.c.l.b16 %v32
  %v41 = vunpack.c.l.b16 %v33
  %v42 = vunpack.c.l.b16 %v34
  %v43 = vpack.c.b16 %v40, %v39
  %v44 = vpack.c.b16 %v42, %v41
  %vm47 = vcmask 261120
  %v49 = vsel %vm47, %v30, 0
  %51 = vmatprep.subr.bf16.mxu0 0
  %52 = vmatpush1.bf16.msra.mxu0 0
  %53 = vmatprep.subr.bf16.mxu0 0
  %54 = vmatpush1.bf16.msra.mxu0 0
  %55 = vmatprep.subr.bf16.mxu0 0
  %56 = vmatpush1.bf16.msra.mxu0 0
  %57 = vmatprep.subr.bf16.mxu0 0
  %58 = vmatpush1.bf16.msra.mxu0 0
  %59 = vmatprep.subr.bf16.mxu0 0
  %60 = vmatpush1.bf16.msra.mxu0 0
  %61 = vmatprep.subr.bf16.mxu0 0
  %62 = vmatpush1.bf16.msra.mxu0 0
  %63 = vmatprep.subr.bf16.mxu0 0
  %64 = vmatpush1.bf16.msra.mxu0 %v44
  %65 = vmatprep.subr.bf16.mxu0 0
  %66 = vmatpush1.bf16.msra.mxu0 %v43
  %67 = vmatprep.subr.bf16.mxu0 0
  %68 = vmatpush2.bf16.msra.mxu0 0
  %69 = vmatprep.subr.bf16.mxu0 0
  %70 = vmatpush2.bf16.msra.mxu0 0
  %71 = vmatprep.subr.bf16.mxu0 0
  %72 = vmatpush2.bf16.msra.mxu0 0
  %73 = vmatprep.subr.bf16.mxu0 0
  %74 = vmatpush2.bf16.msra.mxu0 0
  %75 = vmatprep.subr.bf16.mxu0 0
  %76 = vmatpush2.bf16.msra.mxu0 0
  %77 = vmatprep.subr.bf16.mxu0 0
  %78 = vmatpush2.bf16.msra.mxu0 0
  %79 = vmatprep.subr.bf16.mxu0 0
  %80 = vmatpush2.bf16.msra.mxu0 0
  %81 = vmatprep.subr.bf16.mxu0 0
  %82 = vmatpush2.bf16.msra.mxu0 0
  %83 = vmatprep.mubr.bf16.mxu0 0
  %84 = vmatmul.mubr.bf16.gmra.mxu0 %v49
  %v85 = vpop.f32.mrf.mxu0
  %v86 = vadd.f32 0.0, %v85
  %v87 = vpop.f32.mrf.mxu0
  %v88 = vpop.f32.mrf.mxu0
  %v89 = vadd.f32 0.0, %v88
  %v90 = vpop.f32.mrf.mxu0
  %91 = vdwg.mxu0
  %v92 = vadd.f32 %v28, %v86
  %v93 = vadd.f32 %v29, %v89
  %94 = vst.msk [vmem:[#allocation2] sm:$0xff] %vm47, %v92
  %vm95 = vcmask 259072
  %96 = vst.msk [vmem:[#allocation2 + $0x8] sm:$0x3f] %vm95, %v93
  // Predicated region
  $region22: #{_lambda_.37} parent=0 // pred_check
    %p97 = pneg %p18
  $region23: #{_lambda_.37} parent=0 // pred_check_branch
    %99 = sbr.rel (%p97) target = $region25
  $region24: #{_lambda_.37} parent=0 // pred_region
    %v100 = vld [vmem:[#allocation2] sm:$0xff]
    %v101 = vld [vmem:[#allocation2 + $0x8] sm:$0x3f]
    %v102 = vld [vmem:[%s2] sm:$0x1]
    %v104 = vlaneseq
    %v105 = vshrl.u32 %v104, 7
    %v106 = vsub.s32 0, %v105
    %v107 = vrot.slane %v102, %v106
    %v109 = vadd.f32 %v100, %v107
    %v110 = vadd.f32 %v101, %v107
    %v111 = vld [vmem:[%s3] sm:$0xff]
    %v112 = vld [vmem:[%s3 + $0x8] sm:$0x3f]
    %v113 = vadd.f32 %v111, %v109
    %v114 = vadd.f32 %v112, %v110
    %115 = vst.msk [vmem:[%s4] sm:$0xff] %vm47, %v113
    %116 = vst.msk [vmem:[%s4 + $0x8] sm:$0x3f] %vm95, %v114
  $region25: #{_lambda_.37} parent=0 // pred_fallthru
    _
  // Predicated region
  $region26: #{_lambda_.37} parent=0 // pred_check
    _
  $region27: #{_lambda_.37} parent=0 // pred_check_branch
    %118 = sbr.rel (0) target = $region29
  $region28: #{_lambda_.37} parent=0 // pred_region
    _
  $region29: #{_lambda_.37} parent=0 // pred_fallthru
    _
  // Predicated region
  $region30: #{_lambda_.37} parent=0 // pred_check
    _
  $region31: #{_lambda_.37} parent=0 // pred_check_branch
    %120 = sbr.rel (0) target = $region33
  $region32: #{_lambda_.37} parent=0 // pred_region
    _
  $region33: #{_lambda_.37} parent=0 // pred_fallthru
    _

// kernel: _lambda_.39
$region0: #{_lambda_.39}
  #allocation0 [shape = 'u32[]', space=smem, size = 0x4, offset = 0x4, fixed_abs, tag = 'smem constant byte address 0x4 - core index']
  #allocation1 [shape = 'u32[144,128]{1,0:T(1,128)}', space=vmem, size = 0x12000, scoped, tag = 'internal scratch']
  %s0 = inlined_call_operand.vmem [shape: f32[2,16,32], index: 0, kind: input, shape index: {}]
  %s1 = inlined_call_operand.vmem [shape: f32[7,32], index: 1, kind: input, shape index: {}]
  %s2 = inlined_call_operand.vmem [shape: f32[1,32], index: 2, kind: input, shape index: {}]
  %s3 = inlined_call_operand.vmem [shape: f32[1,32], index: 3, kind: input, shape index: {}]
  %s4 = inlined_call_operand.vmem [shape: f32[2,7,32], index: 4, kind: output, shape index: {}]
  %s5 = sld [smem:[#allocation0]]
  $region49: #{_lambda_.39} parent=0
    _
  %s7 = ssub.s32 1, %s5
  %s8 = scalar_select 0, %s7, %s5
  loop: start=0, step=1, limit=4
  $region2: #{_lambda_.39} parent=0 // loop_pre_header
    _
  $region3: #{_lambda_.39} parent=0 // loop_header
    %s10 = sphi 0, %s14
    %p11 = scmp.ge.s32.totalorder %s10, 4
    %s20 = sphi 0, %s22
    %s23 = sphi 0, %s20
    %s24 = sphi 0, %s23
    %s40 = sphi 0, %s24
    %s44 = sphi 0, %s44
    %s46 = sphi 0, %s44
    %s47 = sphi 0, %s46
    %s61 = sphi 0, %s47
    %s65 = sphi 0, %s65
    %s67 = sphi 0, %s65
    %s68 = sphi 0, %s67
    %s82 = sphi 0, %s68
    %s86 = sphi 0, %s86
    %s88 = sphi 0, %s86
    %s89 = sphi 0, %s88
    %s103 = sphi 0, %s89
    %s109 = sphi 0, %s111
    %s112 = sphi 0, %s109
    %s113 = sphi 0, %s112
    %s129 = sphi 0, %s113
  $region4: #{_lambda_.39} parent=0 // loop_header_branch
    %13 = sbr.rel (%p11) target = $region8
  $region5: #{_lambda_.39} parent=0 // loop_body
    %s15 = ssub.s32 %s10, 1
    %s16 = ssub.s32 %s10, 2
    %s17 = sadd.s32 %s10, 1
    %s18 = ssub.s32 %s10, %s17
    %p19 = scmp.eq.s32.totalorder %s18, 0
    %s21 = sadd.s32 %s20, 1
    %s22 = scalar_select %p19, %s20, %s21
    %p25 = pneg %p19
    %p26 = scmp.eq.s32.totalorder %s10, 1
    %p27 = por %p25, %p26
    %p28 = scmp.ne.s32.totalorder %s20, %s23
    %p29 = scmp.eq.s32.totalorder %s10, 0
    %p30 = por %p28, %p29
    %p31 = scmp.ne.s32.totalorder %s20, %s23
    %p32 = scmp.eq.s32.totalorder %s15, 1
    %p33 = por %p31, %p32
    %p34 = scmp.ne.s32.totalorder %s23, %s24
    %p35 = scmp.eq.s32.totalorder %s15, 0
    %p36 = por %p34, %p35
    %p37 = scmp.ne.s32.totalorder %s23, %s24
    %p38 = scmp.eq.s32.totalorder %s16, 1
    %p39 = por %p37, %p38
    %p41 = scmp.ne.s32.totalorder %s24, %s40
    %p42 = scmp.eq.s32.totalorder %s16, 0
    %p43 = por %p41, %p42
    %s45 = sadd.s32 %s44, 1
    %p48 = scmp.eq.s32.totalorder %s10, 1
    %p49 = scmp.ne.s32.totalorder %s44, %s46
    %p50 = scmp.eq.s32.totalorder %s10, 0
    %p51 = por %p49, %p50
    %p52 = scmp.ne.s32.totalorder %s44, %s46
    %p53 = scmp.eq.s32.totalorder %s15, 1
    %p54 = por %p52, %p53
    %p55 = scmp.ne.s32.totalorder %s46, %s47
    %p56 = scmp.eq.s32.totalorder %s15, 0
    %p57 = por %p55, %p56
    %p58 = scmp.ne.s32.totalorder %s46, %s47
    %p59 = scmp.eq.s32.totalorder %s16, 1
    %p60 = por %p58, %p59
    %p62 = scmp.ne.s32.totalorder %s47, %s61
    %p63 = scmp.eq.s32.totalorder %s16, 0
    %p64 = por %p62, %p63
    %s66 = sadd.s32 %s65, 1
    %p69 = scmp.eq.s32.totalorder %s10, 1
    %p70 = scmp.ne.s32.totalorder %s65, %s67
    %p71 = scmp.eq.s32.totalorder %s10, 0
    %p72 = por %p70, %p71
    %p73 = scmp.ne.s32.totalorder %s65, %s67
    %p74 = scmp.eq.s32.totalorder %s15, 1
    %p75 = por %p73, %p74
    %p76 = scmp.ne.s32.totalorder %s67, %s68
    %p77 = scmp.eq.s32.totalorder %s15, 0
    %p78 = por %p76, %p77
    %p79 = scmp.ne.s32.totalorder %s67, %s68
    %p80 = scmp.eq.s32.totalorder %s16, 1
    %p81 = por %p79, %p80
    %p83 = scmp.ne.s32.totalorder %s68, %s82
    %p84 = scmp.eq.s32.totalorder %s16, 0
    %p85 = por %p83, %p84
    %s87 = sadd.s32 %s86, 1
    %p90 = scmp.eq.s32.totalorder %s10, 1
    %p91 = scmp.ne.s32.totalorder %s86, %s88
    %p92 = scmp.eq.s32.totalorder %s10, 0
    %p93 = por %p91, %p92
    %p94 = scmp.ne.s32.totalorder %s86, %s88
    %p95 = scmp.eq.s32.totalorder %s15, 1
    %p96 = por %p94, %p95
    %p97 = scmp.ne.s32.totalorder %s88, %s89
    %p98 = scmp.eq.s32.totalorder %s15, 0
    %p99 = por %p97, %p98
    %p100 = scmp.ne.s32.totalorder %s88, %s89
    %p101 = scmp.eq.s32.totalorder %s16, 1
    %p102 = por %p100, %p101
    %p104 = scmp.ne.s32.totalorder %s89, %s103
    %p105 = scmp.eq.s32.totalorder %s16, 0
    %p106 = por %p104, %p105
    %s107 = ssub.s32 %s10, %s17
    %p108 = scmp.eq.s32.totalorder %s107, 0
    %s110 = sadd.s32 %s109, 1
    %s111 = scalar_select %p108, %s109, %s110
    %p114 = pneg %p108
    %p115 = scmp.eq.s32.totalorder %s10, 1
    %p116 = por %p114, %p115
    %p117 = scmp.ne.s32.totalorder %s109, %s112
    %p118 = scmp.eq.s32.totalorder %s10, 0
    %p119 = por %p117, %p118
    %p120 = scmp.ne.s32.totalorder %s109, %s112
    %p121 = scmp.eq.s32.totalorder %s15, 1
    %p122 = por %p120, %p121
    %p123 = scmp.ne.s32.totalorder %s112, %s113
    %p124 = scmp.eq.s32.totalorder %s15, 0
    %p125 = por %p123, %p124
    %p126 = scmp.ne.s32.totalorder %s112, %s113
    %p127 = scmp.eq.s32.totalorder %s16, 1
    %p128 = por %p126, %p127
    %p130 = scmp.ne.s32.totalorder %s113, %s129
    %p131 = scmp.eq.s32.totalorder %s16, 0
    %p132 = por %p130, %p131
    %p133 = scmp.le.s32.totalorder 1, %s10
    %p134 = scmp.lt.s32.totalorder %s10, 3
    %p135 = pnand %p133, %p134
    %p136 = pneg %p135
    // Predicated region
    $region9: #{_lambda_.39} parent=5 // pred_check
      _
    $region10: #{_lambda_.39} parent=5 // pred_check_branch
      %138 = sbr.rel (%p135) target = $region12
    $region11: #{_lambda_.39} parent=5 // pred_region
      %s139 = ssub.s32 %s10, 1
      // Predicated region
      $region13: #{_lambda_.39} parent=11 // pred_check
        %p140 = pneg %p57
      $region14: #{_lambda_.39} parent=11 // pred_check_branch
        %142 = sbr.rel (%p140) target = $region16
      $region15: #{_lambda_.39} parent=11 // pred_region
        _
      $region16: #{_lambda_.39} parent=11 // pred_fallthru
        _
      // Predicated region
      $region17: #{_lambda_.39} parent=11 // pred_check
        %p143 = pneg %p78
      $region18: #{_lambda_.39} parent=11 // pred_check_branch
        %145 = sbr.rel (%p143) target = $region20
      $region19: #{_lambda_.39} parent=11 // pred_region
        _
      $region20: #{_lambda_.39} parent=11 // pred_fallthru
        _
      // Predicated region
      $region21: #{_lambda_.39} parent=11 // pred_check
        %p146 = pneg %p99
      $region22: #{_lambda_.39} parent=11 // pred_check_branch
        %148 = sbr.rel (%p146) target = $region24
      $region23: #{_lambda_.39} parent=11 // pred_region
        _
      $region24: #{_lambda_.39} parent=11 // pred_fallthru
        _
    $region12: #{_lambda_.39} parent=5 // pred_fallthru
      _
    %p149 = scmp.lt.s32.totalorder %s10, 2
    // Predicated region
    $region25: #{_lambda_.39} parent=5 // pred_check
      %p150 = pneg %p149
    $region26: #{_lambda_.39} parent=5 // pred_check_branch
      %152 = sbr.rel (%p150) target = $region28
    $region27: #{_lambda_.39} parent=5 // pred_region
      // Predicated region
      $region29: #{_lambda_.39} parent=27 // pred_check
        %p153 = pneg %p30
      $region30: #{_lambda_.39} parent=27 // pred_check_branch
        %155 = sbr.rel (%p153) target = $region32
      $region31: #{_lambda_.39} parent=27 // pred_region
        %p156 = scmp.lt.s32.totalorder %s10, 1
        %s157 = scalar_select %p156, %s10, 1
        %s158 = smul.addr %s157, 2
        %s159 = smul.addr %s158, 8
        %s160 = scalar_lea.vmem %s0, %s159
      $region32: #{_lambda_.39} parent=27 // pred_fallthru
        _
    $region28: #{_lambda_.39} parent=5 // pred_fallthru
      _
    %p161 = scmp.le.s32.totalorder 1, %s10
    %p162 = scmp.lt.s32.totalorder %s10, 3
    %p163 = pnand %p161, %p162
    %p164 = pneg %p163
    // Predicated region
    $region33: #{_lambda_.39} parent=5 // pred_check
      _
    $region34: #{_lambda_.39} parent=5 // pred_check_branch
      %166 = sbr.rel (%p163) target = $region36
    $region35: #{_lambda_.39} parent=5 // pred_region
      %s167 = ssub.s32 %s10, 1
      %p168 = scmp.lt.s32.totalorder %s15, 1
      %s169 = scalar_select %p168, %s15, 1
      %s170 = smul.addr %s169, 2
      %s171 = smul.addr %s170, 8
      %s172 = scalar_lea.vmem %s0, %s171
      %p173 = pneg %p36
      %p174 = pneg %p33
      %p175 = pneg %p57
      %p176 = pneg %p54
      %p177 = pneg %p78
      %p178 = pneg %p75
      %p179 = pneg %p99
      %p180 = pneg %p96
      %p181 = pneg %p125
      %p182 = pneg %p122
      %p183 = scmp.lt.s32.totalorder %s15, 1
      %s184 = scalar_select %p183, %s15, 1
      %s185 = smul.addr %s184, 8
      %s186 = scalar_lea.vmem %s4, %s185
      %p187 = scmp.lt.s32.totalorder %s15, 1
      %s188 = scalar_select %p187, %s15, 1
      %s189 = smul.addr %s188, 2
      %s190 = smul.addr %s189, 8
      %s191 = scalar_lea.vmem %s0, %s190
      %p192 = scmp.lt.s32.totalorder %s15, 1
      %s193 = scalar_select %p192, %s15, 1
      %s194 = smul.addr %s193, 8
      %s195 = scalar_lea.vmem %s4, %s194
      %v196 = vld [vmem:[%s191] sm:$0xff]
      %v197 = vld [vmem:[%s191 + $0x8] sm:$0xff]
      %v198 = vld [vmem:[%s1] sm:$0x7f]
      %v199 = vlaneseq
      %v200 = vshrl.u32 %v199, 7
      %v201 = vsub.s32 0, %v200
      %v202 = vrot.slane %v198, %v201
      %v203 = vmul.f32 %v196, %v202
      %v204 = vlaneseq
      %v205 = vshrl.u32 %v204, 7
      %v206 = vsub.s32 1, %v205
      %v207 = vrot.slane %v198, %v206
      %v208 = vmul.f32 %v196, %v207
      %v210 = vrot.slane %v208, 1
      %v212 = vadd.f32 %v203, %v210
      %v213 = vlaneseq
      %v214 = vshrl.u32 %v213, 7
      %v215 = vsub.s32 2, %v214
      %v216 = vrot.slane %v198, %v215
      %v217 = vmul.f32 %v196, %v216
      %v218 = vmul.f32 %v197, %v216
      %vm221 = vcmask 1045504
      %v222 = vrot.slane %v217, 2
      %v223 = vrot.slane %v218, 2
      %v224 = vsel %vm221, %v222, %v223
      %v226 = vadd.f32 %v212, %v224
      %v227 = vlaneseq
      %v228 = vshrl.u32 %v227, 7
      %v229 = vsub.s32 3, %v228
      %v230 = vrot.slane %v198, %v229
      %v231 = vmul.f32 %v196, %v230
      %v232 = vmul.f32 %v197, %v230
      %vm235 = vcmask 1044480
      %v236 = vrot.slane %v231, 3
      %v237 = vrot.slane %v232, 3
      %v238 = vsel %vm235, %v236, %v237
      %v240 = vadd.f32 %v226, %v238
      %v241 = vlaneseq
      %v242 = vshrl.u32 %v241, 7
      %v243 = vsub.s32 4, %v242
      %v244 = vrot.slane %v198, %v243
      %v245 = vmul.f32 %v196, %v244
      %v246 = vmul.f32 %v197, %v244
      %vm249 = vcmask 1043456
      %v250 = vrot.slane %v245, 4
      %v251 = vrot.slane %v246, 4
      %v252 = vsel %vm249, %v250, %v251
      %v254 = vadd.f32 %v240, %v252
      %v255 = vlaneseq
      %v256 = vshrl.u32 %v255, 7
      %v257 = vsub.s32 5, %v256
      %v258 = vrot.slane %v198, %v257
      %v259 = vmul.f32 %v196, %v258
      %v260 = vmul.f32 %v197, %v258
      %vm263 = vcmask 1042432
      %v264 = vrot.slane %v259, 5
      %v265 = vrot.slane %v260, 5
      %v266 = vsel %vm263, %v264, %v265
      %v268 = vadd.f32 %v254, %v266
      %v269 = vlaneseq
      %v270 = vshrl.u32 %v269, 7
      %v271 = vsub.s32 6, %v270
      %v272 = vrot.slane %v198, %v271
      %v273 = vmul.f32 %v196, %v272
      %v274 = vmul.f32 %v197, %v272
      %vm277 = vcmask 1041408
      %v278 = vrot.slane %v273, 6
      %v279 = vrot.slane %v274, 6
      %v280 = vsel %vm277, %v278, %v279
      %v282 = vadd.f32 %v268, %v280
      %v283 = vld [vmem:[%s2] sm:$0x1]
      %v285 = vlaneseq
      %v286 = vshrl.u32 %v285, 7
      %v287 = vsub.s32 0, %v286
      %v288 = vrot.slane %v283, %v287
      %v290 = vmul.f32 %v282, %v288
      %v291 = vld [vmem:[%s3] sm:$0x1]
      %v293 = vlaneseq
      %v294 = vshrl.u32 %v293, 7
      %v295 = vsub.s32 0, %v294
      %v296 = vrot.slane %v291, %v295
      %v298 = vadd.f32 %v290, %v296
      %v299 = vxor.u32 %v298, 2147483648
      %v300 = vmul.f32 %v299, 1.442695
      %v301 = vpow.pop %v300
      %v302 = vadd.f32 %v301, 1.0
      %v303 = vrcp.pop %v302
      %v304 = vmul.f32 1.0, %v303
      %v305 = vmul.f32 %v298, %v304
      %vm306 = vcmask 260096
      %307 = vst.msk [vmem:[%s195] sm:$0x7f] %vm306, %v305
      %p308 = scmp.lt.s32.totalorder %s15, 1
      %s309 = scalar_select %p308, %s15, 1
      %s310 = smul.addr %s309, 8
      %s311 = scalar_lea.vmem %s4, %s310
      // Predicated region
      $region37: #{_lambda_.39} parent=35 // pred_check
        %p312 = pneg %p122
      $region38: #{_lambda_.39} parent=35 // pred_check_branch
        %314 = sbr.rel (%p312) target = $region40
      $region39: #{_lambda_.39} parent=35 // pred_region
        _
      $region40: #{_lambda_.39} parent=35 // pred_fallthru
        _
    $region36: #{_lambda_.39} parent=5 // pred_fallthru
      _
    %p315 = scmp.le.s32.totalorder 2, %s10
    // Predicated region
    $region41: #{_lambda_.39} parent=5 // pred_check
      %p316 = pneg %p315
    $region42: #{_lambda_.39} parent=5 // pred_check_branch
      %318 = sbr.rel (%p316) target = $region44
    $region43: #{_lambda_.39} parent=5 // pred_region
      %s319 = ssub.s32 %s10, 2
      // Predicated region
      $region45: #{_lambda_.39} parent=43 // pred_check
        %p320 = pneg %p128
      $region46: #{_lambda_.39} parent=43 // pred_check_branch
        %322 = sbr.rel (%p320) target = $region48
      $region47: #{_lambda_.39} parent=43 // pred_region
        %p323 = scmp.lt.s32.totalorder %s16, 1
        %s324 = scalar_select %p323, %s16, 1
        %s325 = smul.addr %s324, 8
        %s326 = scalar_lea.vmem %s4, %s325
      $region48: #{_lambda_.39} parent=43 // pred_fallthru
        _
    $region44: #{_lambda_.39} parent=5 // pred_fallthru
      _
  $region6: #{_lambda_.39} parent=0 // loop_footer
    %s14 = sadd.s32 1, %s10
  $region7: #{_lambda_.39} parent=0 // loop_footer_branch
    %9 = sbr.rel target = $region3
  $region8: #{_lambda_.39} parent=0 // loop_exit
    _

// kernel: _lambda_.55
$region0: #{_lambda_.55}
  #allocation0 [shape = 'u32[]', space=smem, size = 0x4, offset = 0x4, fixed_abs, tag = 'smem constant byte address 0x4 - core index']
  #allocation1 [shape = 'u32[144,128]{1,0:T(1,128)}', space=vmem, size = 0x12000, scoped, tag = 'internal scratch']
  #allocation2 [shape = 'f32[14,128]{1,0:T(8,128)}', space=vmem, size = 0x2000, scoped, tag = 'scratch operand']
  %s0 = inlined_call_operand.vmem [shape: f32[14,32], index: 0, kind: input, shape index: {}]
  %s1 = inlined_call_operand.vmem [shape: bf16[32,128], index: 1, kind: input, shape index: {}]
  %s2 = inlined_call_operand.vmem [shape: f32[1,128], index: 2, kind: input, shape index: {}]
  %s3 = inlined_call_operand.vmem [shape: f32[14,128], index: 3, kind: output, shape index: {}]
  %s4 = sld [smem:[#allocation0]]
  $region30: #{_lambda_.55} parent=0
    _
  %s6 = ssub.s32 1, %s4
  %s7 = scalar_select 0, %s6, %s4
  // Predicated region
  $region2: #{_lambda_.55} parent=0 // pred_check
    _
  $region3: #{_lambda_.55} parent=0 // pred_check_branch
    %9 = sbr.rel (0) target = $region5
  $region4: #{_lambda_.55} parent=0 // pred_region
    _
  $region5: #{_lambda_.55} parent=0 // pred_fallthru
    _
  // Predicated region
  $region6: #{_lambda_.55} parent=0 // pred_check
    _
  $region7: #{_lambda_.55} parent=0 // pred_check_branch
    %11 = sbr.rel (0) target = $region9
  $region8: #{_lambda_.55} parent=0 // pred_region
    _
  $region9: #{_lambda_.55} parent=0 // pred_fallthru
    _
  // Predicated region
  $region10: #{_lambda_.55} parent=0 // pred_check
    _
  $region11: #{_lambda_.55} parent=0 // pred_check_branch
    %13 = sbr.rel (0) target = $region13
  $region12: #{_lambda_.55} parent=0 // pred_region
    _
  $region13: #{_lambda_.55} parent=0 // pred_fallthru
    _
  %p15 = scmp.eq.s32.totalorder 0, 0
  // Predicated region
  $region14: #{_lambda_.55} parent=0 // pred_check
    %p16 = pneg %p15
  $region15: #{_lambda_.55} parent=0 // pred_check_branch
    %18 = sbr.rel (%p16) target = $region17
  $region16: #{_lambda_.55} parent=0 // pred_region
    %19 = vst [vmem:[#allocation2] sm:$0xff] 0.0
    %20 = vst [vmem:[#allocation2 + $0x8] sm:$0x3f] 0.0
  $region17: #{_lambda_.55} parent=0 // pred_fallthru
    _
  %v21 = vld [vmem:[%s0] sm:$0xff]
  %v22 = vld [vmem:[%s0 + $0x8] sm:$0x3f]
  %v23 = vld [vmem:[#allocation2] sm:$0xff]
  %v24 = vld [vmem:[#allocation2 + $0x8] sm:$0x3f]
  %v25 = vpack.c.bf16 %v22, %v21
  %v26 = vld [vmem:[%s1] sm:$0xf]
  %v27 = vld [vmem:[%s1 + $0x4] sm:$0xf]
  %v28 = vld [vmem:[%s1 + $0x8] sm:$0xf]
  %v29 = vld [vmem:[%s1 + $0xc] sm:$0xf]
  %v34 = vunpack.c.l.b16 %v26
  %v35 = vunpack.c.l.b16 %v27
  %v36 = vunpack.c.l.b16 %v28
  %v37 = vunpack.c.l.b16 %v29
  %v38 = vpack.c.b16 %v35, %v34
  %v39 = vpack.c.b16 %v37, %v36
  %vm42 = vcmask 261120
  %v44 = vsel %vm42, %v25, 0
  %46 = vmatprep.subr.bf16.mxu0 0
  %47 = vmatpush1.bf16.msra.mxu0 0
  %48 = vmatprep.subr.bf16.mxu0 0
  %49 = vmatpush1.bf16.msra.mxu0 0
  %50 = vmatprep.subr.bf16.mxu0 0
  %51 = vmatpush1.bf16.msra.mxu0 0
  %52 = vmatprep.subr.bf16.mxu0 0
  %53 = vmatpush1.bf16.msra.mxu0 0
  %54 = vmatprep.subr.bf16.mxu0 0
  %55 = vmatpush1.bf16.msra.mxu0 0
  %56 = vmatprep.subr.bf16.mxu0 0
  %57 = vmatpush1.bf16.msra.mxu0 0
  %58 = vmatprep.subr.bf16.mxu0 0
  %59 = vmatpush1.bf16.msra.mxu0 %v39
  %60 = vmatprep.subr.bf16.mxu0 0
  %61 = vmatpush1.bf16.msra.mxu0 %v38
  %62 = vmatprep.subr.bf16.mxu0 0
  %63 = vmatpush2.bf16.msra.mxu0 0
  %64 = vmatprep.subr.bf16.mxu0 0
  %65 = vmatpush2.bf16.msra.mxu0 0
  %66 = vmatprep.subr.bf16.mxu0 0
  %67 = vmatpush2.bf16.msra.mxu0 0
  %68 = vmatprep.subr.bf16.mxu0 0
  %69 = vmatpush2.bf16.msra.mxu0 0
  %70 = vmatprep.subr.bf16.mxu0 0
  %71 = vmatpush2.bf16.msra.mxu0 0
  %72 = vmatprep.subr.bf16.mxu0 0
  %73 = vmatpush2.bf16.msra.mxu0 0
  %74 = vmatprep.subr.bf16.mxu0 0
  %75 = vmatpush2.bf16.msra.mxu0 0
  %76 = vmatprep.subr.bf16.mxu0 0
  %77 = vmatpush2.bf16.msra.mxu0 0
  %78 = vmatprep.mubr.bf16.mxu0 0
  %79 = vmatmul.mubr.bf16.gmra.mxu0 %v44
  %v80 = vpop.f32.mrf.mxu0
  %v81 = vadd.f32 0.0, %v80
  %v82 = vpop.f32.mrf.mxu0
  %v83 = vpop.f32.mrf.mxu0
  %v84 = vadd.f32 0.0, %v83
  %v85 = vpop.f32.mrf.mxu0
  %86 = vdwg.mxu0
  %v87 = vadd.f32 %v23, %v81
  %v88 = vadd.f32 %v24, %v84
  %89 = vst [vmem:[#allocation2] sm:$0xff] %v87
  %90 = vst [vmem:[#allocation2 + $0x8] sm:$0x3f] %v88
  // Predicated region
  $region18: #{_lambda_.55} parent=0 // pred_check
    %p91 = pneg %p15
  $region19: #{_lambda_.55} parent=0 // pred_check_branch
    %93 = sbr.rel (%p91) target = $region21
  $region20: #{_lambda_.55} parent=0 // pred_region
    %v94 = vld [vmem:[#allocation2] sm:$0xff]
    %v95 = vld [vmem:[#allocation2 + $0x8] sm:$0x3f]
    %v96 = vld [vmem:[%s2] sm:$0x1]
    %v98 = vlaneseq
    %v99 = vshrl.u32 %v98, 7
    %v100 = vsub.s32 0, %v99
    %v101 = vrot.slane %v96, %v100
    %v103 = vadd.f32 %v94, %v101
    %v104 = vadd.f32 %v95, %v101
    %105 = vst [vmem:[%s3] sm:$0xff] %v103
    %106 = vst [vmem:[%s3 + $0x8] sm:$0x3f] %v104
  $region21: #{_lambda_.55} parent=0 // pred_fallthru
    _
  // Predicated region
  $region22: #{_lambda_.55} parent=0 // pred_check
    _
  $region23: #{_lambda_.55} parent=0 // pred_check_branch
    %108 = sbr.rel (0) target = $region25
  $region24: #{_lambda_.55} parent=0 // pred_region
    _
  $region25: #{_lambda_.55} parent=0 // pred_fallthru
    _
  // Predicated region
  $region26: #{_lambda_.55} parent=0 // pred_check
    _
  $region27: #{_lambda_.55} parent=0 // pred_check_branch
    %110 = sbr.rel (0) target = $region29
  $region28: #{_lambda_.55} parent=0 // pred_region
    _
  $region29: #{_lambda_.55} parent=0 // pred_fallthru
    _

// kernel: _lambda_.42
$region0: #{_lambda_.42}
  #allocation0 [shape = 'u32[]', space=smem, size = 0x4, offset = 0x4, fixed_abs, tag = 'smem constant byte address 0x4 - core index']
  #allocation1 [shape = 'u32[144,128]{1,0:T(1,128)}', space=vmem, size = 0x12000, scoped, tag = 'internal scratch']
  #allocation2 [shape = 'f32[14,32]{1,0:T(8,128)}', space=vmem, size = 0x2000, scoped, tag = 'scratch operand']
  %s0 = inlined_call_operand.vmem [shape: f32[14,128], index: 0, kind: input, shape index: {}]
  %s1 = inlined_call_operand.vmem [shape: bf16[128,32], index: 1, kind: input, shape index: {}]
  %s2 = inlined_call_operand.vmem [shape: f32[1,32], index: 2, kind: input, shape index: {}]
  %s3 = inlined_call_operand.vmem [shape: f32[14,32], index: 3, kind: input, shape index: {}]
  %s4 = inlined_call_operand.vmem [shape: f32[1,32], index: 4, kind: input, shape index: {}]
  %s5 = inlined_call_operand.vmem [shape: f32[1,32], index: 5, kind: input, shape index: {}]
  %s6 = inlined_call_operand.vmem [shape: f32[14,32], index: 6, kind: output, shape index: {}]
  %s7 = sld [smem:[#allocation0]]
  $region42: #{_lambda_.42} parent=0
    _
  %s9 = ssub.s32 1, %s7
  %s10 = scalar_select 0, %s9, %s7
  // Predicated region
  $region2: #{_lambda_.42} parent=0 // pred_check
    _
  $region3: #{_lambda_.42} parent=0 // pred_check_branch
    %12 = sbr.rel (0) target = $region5
  $region4: #{_lambda_.42} parent=0 // pred_region
    _
  $region5: #{_lambda_.42} parent=0 // pred_fallthru
    _
  // Predicated region
  $region6: #{_lambda_.42} parent=0 // pred_check
    _
  $region7: #{_lambda_.42} parent=0 // pred_check_branch
    %14 = sbr.rel (0) target = $region9
  $region8: #{_lambda_.42} parent=0 // pred_region
    _
  $region9: #{_lambda_.42} parent=0 // pred_fallthru
    _
  // Predicated region
  $region10: #{_lambda_.42} parent=0 // pred_check
    _
  $region11: #{_lambda_.42} parent=0 // pred_check_branch
    %16 = sbr.rel (0) target = $region13
  $region12: #{_lambda_.42} parent=0 // pred_region
    _
  $region13: #{_lambda_.42} parent=0 // pred_fallthru
    _
  // Predicated region
  $region14: #{_lambda_.42} parent=0 // pred_check
    _
  $region15: #{_lambda_.42} parent=0 // pred_check_branch
    %18 = sbr.rel (0) target = $region17
  $region16: #{_lambda_.42} parent=0 // pred_region
    _
  $region17: #{_lambda_.42} parent=0 // pred_fallthru
    _
  // Predicated region
  $region18: #{_lambda_.42} parent=0 // pred_check
    _
  $region19: #{_lambda_.42} parent=0 // pred_check_branch
    %20 = sbr.rel (0) target = $region21
  $region20: #{_lambda_.42} parent=0 // pred_region
    _
  $region21: #{_lambda_.42} parent=0 // pred_fallthru
    _
  // Predicated region
  $region22: #{_lambda_.42} parent=0 // pred_check
    _
  $region23: #{_lambda_.42} parent=0 // pred_check_branch
    %22 = sbr.rel (0) target = $region25
  $region24: #{_lambda_.42} parent=0 // pred_region
    _
  $region25: #{_lambda_.42} parent=0 // pred_fallthru
    _
  %p24 = scmp.eq.s32.totalorder 0, 0
  // Predicated region
  $region26: #{_lambda_.42} parent=0 // pred_check
    %p25 = pneg %p24
  $region27: #{_lambda_.42} parent=0 // pred_check_branch
    %27 = sbr.rel (%p25) target = $region29
  $region28: #{_lambda_.42} parent=0 // pred_region
    %vm28 = vcmask 261120
    %29 = vst.msk [vmem:[#allocation2] sm:$0xff] %vm28, 0.0
    %vm30 = vcmask 259072
    %31 = vst.msk [vmem:[#allocation2 + $0x8] sm:$0x3f] %vm30, 0.0
  $region29: #{_lambda_.42} parent=0 // pred_fallthru
    _
  %v32 = vld [vmem:[%s0] sm:$0xff]
  %v33 = vld [vmem:[%s0 + $0x8] sm:$0x3f]
  %v34 = vld [vmem:[#allocation2] sm:$0xff]
  %v35 = vld [vmem:[#allocation2 + $0x8] sm:$0x3f]
  %v36 = vpack.c.bf16 %v33, %v32
  %v37 = vld [vmem:[%s1] sm:$0xf]
  %v38 = vld [vmem:[%s1 + $0x4] sm:$0xf]
  %v39 = vld [vmem:[%s1 + $0x8] sm:$0xf]
  %v40 = vld [vmem:[%s1 + $0xc] sm:$0xf]
  %v41 = vld [vmem:[%s1 + $0x10] sm:$0xf]
  %v42 = vld [vmem:[%s1 + $0x14] sm:$0xf]
  %v43 = vld [vmem:[%s1 + $0x18] sm:$0xf]
  %v44 = vld [vmem:[%s1 + $0x1c] sm:$0xf]
  %v45 = vld [vmem:[%s1 + $0x20] sm:$0xf]
  %v46 = vld [vmem:[%s1 + $0x24] sm:$0xf]
  %v47 = vld [vmem:[%s1 + $0x28] sm:$0xf]
  %v48 = vld [vmem:[%s1 + $0x2c] sm:$0xf]
  %v49 = vld [vmem:[%s1 + $0x30] sm:$0xf]
  %v50 = vld [vmem:[%s1 + $0x34] sm:$0xf]
  %v51 = vld [vmem:[%s1 + $0x38] sm:$0xf]
  %v52 = vld [vmem:[%s1 + $0x3c] sm:$0xf]
  %v69 = vunpack.c.l.b16 %v37
  %v70 = vunpack.c.l.b16 %v38
  %v71 = vunpack.c.l.b16 %v39
  %v72 = vunpack.c.l.b16 %v40
  %v73 = vunpack.c.l.b16 %v41
  %v74 = vunpack.c.l.b16 %v42
  %v75 = vunpack.c.l.b16 %v43
  %v76 = vunpack.c.l.b16 %v44
  %v77 = vunpack.c.l.b16 %v45
  %v78 = vunpack.c.l.b16 %v46
  %v79 = vunpack.c.l.b16 %v47
  %v80 = vunpack.c.l.b16 %v48
  %v81 = vunpack.c.l.b16 %v49
  %v82 = vunpack.c.l.b16 %v50
  %v83 = vunpack.c.l.b16 %v51
  %v84 = vunpack.c.l.b16 %v52
  %v85 = vpack.c.b16 %v70, %v69
  %v86 = vpack.c.b16 %v72, %v71
  %v87 = vpack.c.b16 %v74, %v73
  %v88 = vpack.c.b16 %v76, %v75
  %v89 = vpack.c.b16 %v78, %v77
  %v90 = vpack.c.b16 %v80, %v79
  %v91 = vpack.c.b16 %v82, %v81
  %v92 = vpack.c.b16 %v84, %v83
  %101 = vmatprep.subr.bf16.mxu0 0
  %102 = vmatpush1.bf16.msra.mxu0 %v92
  %103 = vmatprep.subr.bf16.mxu0 0
  %104 = vmatpush1.bf16.msra.mxu0 %v91
  %105 = vmatprep.subr.bf16.mxu0 0
  %106 = vmatpush1.bf16.msra.mxu0 %v90
  %107 = vmatprep.subr.bf16.mxu0 0
  %108 = vmatpush1.bf16.msra.mxu0 %v89
  %109 = vmatprep.subr.bf16.mxu0 0
  %110 = vmatpush1.bf16.msra.mxu0 %v88
  %111 = vmatprep.subr.bf16.mxu0 0
  %112 = vmatpush1.bf16.msra.mxu0 %v87
  %113 = vmatprep.subr.bf16.mxu0 0
  %114 = vmatpush1.bf16.msra.mxu0 %v86
  %115 = vmatprep.subr.bf16.mxu0 0
  %116 = vmatpush1.bf16.msra.mxu0 %v85
  %117 = vmatprep.subr.bf16.mxu0 0
  %118 = vmatpush2.bf16.msra.mxu0 0
  %119 = vmatprep.subr.bf16.mxu0 0
  %120 = vmatpush2.bf16.msra.mxu0 0
  %121 = vmatprep.subr.bf16.mxu0 0
  %122 = vmatpush2.bf16.msra.mxu0 0
  %123 = vmatprep.subr.bf16.mxu0 0
  %124 = vmatpush2.bf16.msra.mxu0 0
  %125 = vmatprep.subr.bf16.mxu0 0
  %126 = vmatpush2.bf16.msra.mxu0 0
  %127 = vmatprep.subr.bf16.mxu0 0
  %128 = vmatpush2.bf16.msra.mxu0 0
  %129 = vmatprep.subr.bf16.mxu0 0
  %130 = vmatpush2.bf16.msra.mxu0 0
  %131 = vmatprep.subr.bf16.mxu0 0
  %132 = vmatpush2.bf16.msra.mxu0 0
  %133 = vmatprep.mubr.bf16.mxu0 0
  %134 = vmatmul.mubr.bf16.gmra.mxu0 %v36
  %v135 = vpop.f32.mrf.mxu0
  %v136 = vadd.f32 0.0, %v135
  %v137 = vpop.f32.mrf.mxu0
  %v138 = vpop.f32.mrf.mxu0
  %v139 = vadd.f32 0.0, %v138
  %v140 = vpop.f32.mrf.mxu0
  %141 = vdwg.mxu0
  %v142 = vadd.f32 %v34, %v136
  %v143 = vadd.f32 %v35, %v139
  %vm144 = vcmask 261120
  %145 = vst.msk [vmem:[#allocation2] sm:$0xff] %vm144, %v142
  %vm146 = vcmask 259072
  %147 = vst.msk [vmem:[#allocation2 + $0x8] sm:$0x3f] %vm146, %v143
  // Predicated region
  $region30: #{_lambda_.42} parent=0 // pred_check
    %p148 = pneg %p24
  $region31: #{_lambda_.42} parent=0 // pred_check_branch
    %150 = sbr.rel (%p148) target = $region33
  $region32: #{_lambda_.42} parent=0 // pred_region
    %v151 = vld [vmem:[#allocation2] sm:$0xff]
    %v152 = vld [vmem:[#allocation2 + $0x8] sm:$0x3f]
    %v153 = vld [vmem:[%s2] sm:$0x1]
    %v155 = vlaneseq
    %v156 = vshrl.u32 %v155, 7
    %v157 = vsub.s32 0, %v156
    %v158 = vrot.slane %v153, %v157
    %v160 = vadd.f32 %v151, %v158
    %v161 = vadd.f32 %v152, %v158
    %v162 = vld [vmem:[%s3] sm:$0xff]
    %v163 = vld [vmem:[%s3 + $0x8] sm:$0x3f]
    %v164 = vmul.f32 %v160, 0.5
    %v165 = vmul.f32 %v161, 0.5
    %v166 = vadd.f32 %v162, %v164
    %v167 = vadd.f32 %v163, %v165
    %v168 = vsel %vm144, %v166, 0.0
    %169 = vadd.xlane.f32.xlu0 %v168
    %v170 = vpop.xlane.xlu0 %169
    %v171 = vsel %vm146, %v167, 0.0
    %172 = vadd.xlane.f32.xlu0 %v171
    %v173 = vpop.xlane.xlu0 %172
    %v174 = vrcp.pop 32.0
    %v175 = vmul.f32 %v170, %v174
    %v176 = vmul.f32 %v173, %v174
    %v177 = vsub.f32 %v166, %v175
    %v178 = vsub.f32 %v167, %v176
    %v179 = vmul.f32 %v177, %v177
    %v180 = vmul.f32 %v178, %v178
    %v181 = vsel %vm144, %v179, 0.0
    %182 = vadd.xlane.f32.xlu0 %v181
    %v183 = vpop.xlane.xlu0 %182
    %v184 = vsel %vm146, %v180, 0.0
    %185 = vadd.xlane.f32.xlu0 %v184
    %v186 = vpop.xlane.xlu0 %185
    %v187 = vmul.f32 %v183, %v174
    %v188 = vmul.f32 %v186, %v174
    %v189 = vadd.f32 %v187, 1e-05
    %v190 = vadd.f32 %v188, 1e-05
    %v191 = vrsqrt.pop %v189
    %v192 = vrsqrt.pop %v190
    %v193 = vmul.f32 %v177, %v191
    %v194 = vmul.f32 %v178, %v192
    %v195 = vld [vmem:[%s4] sm:$0x1]
    %v197 = vlaneseq
    %v198 = vshrl.u32 %v197, 7
    %v199 = vsub.s32 0, %v198
    %v200 = vrot.slane %v195, %v199
    %v202 = vmul.f32 %v193, %v200
    %v203 = vmul.f32 %v194, %v200
    %v204 = vld [vmem:[%s5] sm:$0x1]
    %v206 = vlaneseq
    %v207 = vshrl.u32 %v206, 7
    %v208 = vsub.s32 0, %v207
    %v209 = vrot.slane %v204, %v208
    %v211 = vadd.f32 %v202, %v209
    %v212 = vadd.f32 %v203, %v209
    %213 = vst.msk [vmem:[%s6] sm:$0xff] %vm144, %v211
    %214 = vst.msk [vmem:[%s6 + $0x8] sm:$0x3f] %vm146, %v212
  $region33: #{_lambda_.42} parent=0 // pred_fallthru
    _
  // Predicated region
  $region34: #{_lambda_.42} parent=0 // pred_check
    _
  $region35: #{_lambda_.42} parent=0 // pred_check_branch
    %216 = sbr.rel (0) target = $region37
  $region36: #{_lambda_.42} parent=0 // pred_region
    _
  $region37: #{_lambda_.42} parent=0 // pred_fallthru
    _
  // Predicated region
  $region38: #{_lambda_.42} parent=0 // pred_check
    _
  $region39: #{_lambda_.42} parent=0 // pred_check_branch
    %218 = sbr.rel (0) target = $region41
  $region40: #{_lambda_.42} parent=0 // pred_region
    _
  $region41: #{_lambda_.42} parent=0 // pred_fallthru
    _

</llo_original>
